<compile_context>
chip_gen: v7x
topology: tpu7x:2x2x1
jax: 0.10.0
libtpu: 0.0.40
codegen_flags: <defaults>
</compile_context>

<pallas_src>
import functools

import jax
import jax.numpy as jnp
from jax.experimental import pallas as pl
from jax.experimental.pallas import tpu as pltpu

KERNEL_SIZES = (1, 2, 3, 5, 10)      # feature_kernel = {1:64, 2:64, 3:64, 5:64, 10:64}
N_PER_KERNEL = 64
NUM_EXPERT = 5
DOMAIN_NUM = 9
CTOT = NUM_EXPERT * N_PER_KERNEL             # 320 stacked expert channels / kernel size
OUT_DIM = len(KERNEL_SIZES) * N_PER_KERNEL   # 320 final shared feature width
KMAX = max(KERNEL_SIZES)


# ---------------------------------------------------------------------------
# Fused kernel: MaskAttention + gate MLP + 5 CNN experts + gate mixing
# ---------------------------------------------------------------------------
def fused_mdfend_kernel(x_ref, mask_ref, dom_ref,
                        att_w_ref, att_b_ref,
                        g_w1d_ref, g_w1f_ref, g_b1_ref, g_w2_ref, g_b2_ref,
                        cw1_ref, cw2_ref, cw3_ref, cw5_ref, cw10_ref,
                        cb_ref, out_ref, *, seq_len):
    Bt, Ltot, E = x_ref.shape
    Lp = mask_ref.shape[1]           # common tap-window length (multiple of 8)
    C = N_PER_KERNEL

    xfull = x_ref[...].astype(jnp.float32)               # (Bt, Ltot, E)
    x = xfull[:, :Lp, :]                                  # window 0 (Bt, Lp, E)

    # ---- 1. MaskAttention: lane-dense softmax (time on the 128-lane axis) --
    w_att = att_w_ref[...].astype(jnp.float32)            # (1, E)
    s = jnp.sum(x * w_att[None, :, :], axis=-1)           # (Bt, Lp)
    s = s + att_b_ref[...]                                 # (1,1) broadcast
    s = jnp.where(mask_ref[...] == 0.0, -jnp.inf, s)       # mask pads
    m = jnp.max(s, axis=-1, keepdims=True)                 # (Bt, 1)
    e = jnp.exp(s - m)
    z = jnp.sum(e, axis=-1, keepdims=True)
    attn = e * pl.reciprocal(z, approx=True)               # (Bt, Lp)
    feature = jnp.sum(x * attn[:, :, None], axis=1)        # (Bt, E)

    # ---- 2. gate MLP (concat expressed as split first-layer weights) -------
    dom = dom_ref[...].astype(jnp.float32)                 # (Bt, E)
    h = (jnp.dot(dom, g_w1d_ref[...], preferred_element_type=jnp.float32)
         + jnp.dot(feature, g_w1f_ref[...], preferred_element_type=jnp.float32)
         + g_b1_ref[...])
    h = jnp.maximum(h, 0.0)
    logits = (jnp.dot(h, g_w2_ref[...], preferred_element_type=jnp.float32)
              + g_b2_ref[...])                              # (Bt, NE)
    lm = jnp.max(logits, axis=-1, keepdims=True)
    le = jnp.exp(logits - lm)
    gate = le * pl.reciprocal(jnp.sum(le, axis=-1, keepdims=True),
                              approx=True)                  # (Bt, NE)

    # ---- 3. CNN experts: im2col -> one bf16 MXU matmul per kernel size -----
    def tap(j):
        # time-shifted window j (zero-padded past seq_len in the wrapper);
        # E-wide only, so building taps moves ~E/320 of the old slice traffic.
        return (xfull[:, j:j + Lp, :]
                .reshape(Bt * Lp, E)
                .astype(jnp.bfloat16))

    t_idx = jax.lax.broadcasted_iota(jnp.int32, (1, Lp, 1), 1)
    cw_refs = (cw1_ref, cw2_ref, cw3_ref, cw5_ref, cw10_ref)

    chunks = []
    xk = None
    prev_k = 0
    for kidx, k in enumerate(KERNEL_SIZES):          # ascending -> taps reused
        new_taps = [tap(j) for j in range(prev_k, k)]
        pieces = ([] if xk is None else [xk]) + new_taps
        xk = pieces[0] if len(pieces) == 1 else jnp.concatenate(pieces, axis=-1)
        prev_k = k                                   # xk : (Bt*Lp, k*E) bf16

        # tap accumulation happens inside the MXU along K = k*E
        y = jnp.dot(xk, cw_refs[kidx][...],
                    preferred_element_type=jnp.float32)      # (Bt*Lp, CTOT)
        y3 = y.reshape(Bt, Lp, CTOT)
        T = seq_len - k + 1                                  # valid conv positions
        y3 = jnp.where(t_idx < T, y3, -jnp.inf)              # exclude tail/pads
        # bias added after the max: position-independent, so max(a+b)=max(a)+b
        pooled = jnp.max(y3, axis=1) + cb_ref[kidx]          # (Bt, CTOT)

        # expert mixing: sum_i gate_i * expert_i's 64 channels (no gate_exp)
        mixed = gate[:, 0:1] * pooled[:, 0:C]
        for i in range(1, NUM_EXPERT):
            mixed = mixed + gate[:, i:i + 1] * pooled[:, i * C:(i + 1) * C]
        chunks.append(mixed)                                 # (Bt, 64)

    # single lane-dense store of the whole (Bt, 320) row block
    out_ref[...] = jnp.concatenate(chunks, axis=-1)


# ---------------------------------------------------------------------------
# Wrapper helpers
# ---------------------------------------------------------------------------
def _round_up(x, m):
    return ((x + m - 1) // m) * m


def _vmem_capacity_bytes():
    try:
        return int(pltpu.get_tpu_info().vmem_capacity_bytes)
    except Exception:
        return 64 * 1024 * 1024          # conservative (v7x-sized) fallback


def _pick_batch_tile(B, vmem_cap):
    # bigger tiles on 128-MiB chips (v5e/v6e), smaller on 64-MiB (v7x);
    # always leave room for >= 2 grid steps.
    cands = (32, 16, 8) if vmem_cap >= 96 * 1024 * 1024 else (16, 8)
    for bt in cands:
        if B >= 2 * bt:
            return bt
    return 8


def _replicated_spec(shape):
    zeros = (0,) * len(shape)
    index_map = lambda i, _z=zeros: _z
    try:
        # constant-index blocks: single buffer (no point double-buffering)
        return pl.BlockSpec(shape, index_map, pipeline_mode=pl.Buffered(1))
    except Exception:
        return pl.BlockSpec(shape, index_map)


# ---------------------------------------------------------------------------
# Wrapper: embedding gather, padding, BlockSpecs / grid, pallas_call
# ---------------------------------------------------------------------------
@jax.jit
def multi_domain_fend_forward(content, masks, category, p):
    B, L, E = content.shape
    H = p["w1d"].shape[1]

    vmem_cap = _vmem_capacity_bytes()
    vmem_limit = max(16 * 1024 * 1024, min(48 * 1024 * 1024, vmem_cap // 2))

    # sequence padding: Lp (multiple of 8) is the attention / tap-window
    # length; KMAX-1 extra zero rows (rounded to 8) let every tap window
    # j in [0, KMAX) be read at the same (Bt, Lp, E) shape.
    Lp = _round_up(L, 8)
    Ltot = Lp + _round_up(KMAX - 1, 8)
    content = jnp.pad(content.astype(jnp.float32),
                      ((0, 0), (0, Ltot - L), (0, 0)))
    masks = jnp.pad(masks.astype(jnp.float32), ((0, 0), (0, Lp - L)))

    # batch padding so the grid always has >= 2 steps (megacore + DMA overlap)
    Bt = _pick_batch_tile(B, vmem_cap)
    Bp = max(pl.cdiv(B, Bt), 2) * Bt
    if Bp != B:
        content = jnp.pad(content, ((0, Bp - B), (0, 0), (0, 0)))
        # give padded rows one valid token so their softmax stays finite
        pad_masks = jnp.zeros((Bp - B, Lp), jnp.float32).at[:, 0].set(1.0)
        masks = jnp.concatenate([masks, pad_masks], axis=0)
        category = jnp.concatenate(
            [category, jnp.zeros((Bp - B,), category.dtype)], axis=0)

    domain_emb = p["domain_table"][category]                  # (Bp, E) gather
    att_b2 = p["att_b"].reshape(1, 1)
    # im2col weight packing: (k, E, CTOT) -> (k*E, CTOT), bf16 MXU operand
    conv_w_packed = [w.reshape(k * E, CTOT).astype(jnp.bfloat16)
                     for k, w in zip(KERNEL_SIZES, p["conv_w"])]

    grid = (Bp // Bt,)
    in_specs = [
        pl.BlockSpec((Bt, Ltot, E), lambda i: (i, 0, 0)),     # content
        pl.BlockSpec((Bt, Lp), lambda i: (i, 0)),             # masks (lane-dense)
        pl.BlockSpec((Bt, E), lambda i: (i, 0)),              # domain embedding
        _replicated_spec((1, E)),                             # att_w
        _replicated_spec((1, 1)),                             # att_b
        _replicated_spec((E, H)),                             # gate w1 (domain)
        _replicated_spec((E, H)),                             # gate w1 (feature)
        _replicated_spec((1, H)),                             # gate b1
        _replicated_spec((H, NUM_EXPERT)),                    # gate w2
        _replicated_spec((1, NUM_EXPERT)),                    # gate b2
    ] + [_replicated_spec((k * E, CTOT)) for k in KERNEL_SIZES] \
      + [_replicated_spec((len(KERNEL_SIZES), 1, CTOT))]      # conv bias

    flops = (2 * Bp * Lp * E * CTOT * sum(KERNEL_SIZES)       # conv matmuls
             + 4 * Bp * E * H + 2 * Bp * H * NUM_EXPERT       # gate MLP
             + 4 * Bp * Lp * E)                               # attention
    transcendentals = Bp * Lp + Bp * NUM_EXPERT
    bytes_accessed = (content.size * 4 + masks.size * 4 + domain_emb.size * 4
                      + sum(w.size * 2 for w in conv_w_packed)
                      + (2 * E * H + H * NUM_EXPERT + E + H + NUM_EXPERT) * 4
                      + len(KERNEL_SIZES) * CTOT * 4
                      + Bp * OUT_DIM * 4)

    kernel = functools.partial(fused_mdfend_kernel, seq_len=L)
    out = pl.pallas_call(
        kernel,
        out_shape=jax.ShapeDtypeStruct((Bp, OUT_DIM), jnp.float32),
        grid=grid,
        in_specs=in_specs,
        out_specs=pl.BlockSpec((Bt, OUT_DIM), lambda i: (i, 0)),
        compiler_params=pltpu.CompilerParams(
            dimension_semantics=("parallel",),
            vmem_limit_bytes=vmem_limit),
        cost_estimate=pl.CostEstimate(flops=flops,
                                      transcendentals=transcendentals,
                                      bytes_accessed=bytes_accessed),
    )(content, masks, domain_emb,
      p["att_w"], att_b2,
      p["w1d"], p["w1f"], p["b1"], p["w2"], p["b2"],
      *conv_w_packed, p["conv_b"])
    return out[:B]


# ---------------------------------------------------------------------------
# Deterministic parameter init (shapes from the module's __init__)
# ---------------------------------------------------------------------------
def init_params(key, emb_dim, mlp_dim):
    n_keys = 10 + len(KERNEL_SIZES)
    keys = jax.random.split(key, n_keys)
    s = 0.1
    p = {
        "att_w": s * jax.random.normal(keys[0], (1, emb_dim), jnp.float32),
        "att_b": s * jax.random.normal(keys[1], (1,), jnp.float32),
        "domain_table": jax.random.normal(keys[2], (DOMAIN_NUM, emb_dim), jnp.float32),
        "w1d": s * jax.random.normal(keys[3], (emb_dim, mlp_dim), jnp.float32),
        "w1f": s * jax.random.normal(keys[4], (emb_dim, mlp_dim), jnp.float32),
        "b1": s * jax.random.normal(keys[5], (1, mlp_dim), jnp.float32),
        "w2": s * jax.random.normal(keys[6], (mlp_dim, NUM_EXPERT), jnp.float32),
        "b2": s * jax.random.normal(keys[7], (1, NUM_EXPERT), jnp.float32),
    }
    conv_w = []
    for i, k in enumerate(KERNEL_SIZES):
        conv_w.append(s * jax.random.normal(keys[8 + i], (k, emb_dim, CTOT),
                                            jnp.float32))
    p["conv_w"] = conv_w
    p["conv_b"] = s * jax.random.normal(keys[8 + len(KERNEL_SIZES)],
                                        (len(KERNEL_SIZES), 1, CTOT), jnp.float32)
    return p


# ---------------------------------------------------------------------------
# Pure-JAX reference (mirrors the PyTorch forward semantics, f32 highest prec)
# ---------------------------------------------------------------------------
def reference_forward(content, masks, category, p):
    HI = jax.lax.Precision.HIGHEST
    x = content.astype(jnp.float32)
    B, L, E = x.shape
    scores = jnp.einsum("ble,e->bl", x, p["att_w"][0], precision=HI) + p["att_b"][0]
    scores = jnp.where(masks == 0, -jnp.inf, scores)
    attn = jax.nn.softmax(scores, axis=-1)
    feature = jnp.einsum("bl,ble->be", attn, x, precision=HI)

    dom = p["domain_table"][category]
    gate_in = jnp.concatenate([dom, feature], axis=-1)
    w1 = jnp.concatenate([p["w1d"], p["w1f"]], axis=0)
    h = jax.nn.relu(jnp.dot(gate_in, w1, precision=HI) + p["b1"])
    gate = jax.nn.softmax(jnp.dot(h, p["w2"], precision=HI) + p["b2"], axis=-1)

    chunks = []
    for kidx, k in enumerate(KERNEL_SIZES):
        W = p["conv_w"][kidx]                         # (k, E, NE*64)
        bcv = p["conv_b"][kidx]                       # (1, NE*64)
        T = L - k + 1
        acc = sum(jnp.einsum("bte,ec->btc", x[:, j:j + T, :], W[j], precision=HI)
                  for j in range(k)) + bcv[None, :, :]
        pooled = jnp.max(acc, axis=1)                 # (B, NE*64)
        pooled = pooled.reshape(B, NUM_EXPERT, N_PER_KERNEL)
        mixed = jnp.sum(pooled * gate[:, :, None], axis=1)   # (B, 64)
        chunks.append(mixed)
    return jnp.concatenate(chunks, axis=-1)           # (B, 320)


if __name__ == "__main__":
    B, L, E, H = 2, 16, 32, 32          # batch, seq, emb_dim, mlp_dims[-1]
    key = jax.random.PRNGKey(0)
    k0, k1, k2 = jax.random.split(key, 3)

    content = jax.random.normal(k0, (B, L, E), jnp.float32)
    masks = (jax.random.uniform(k1, (B, L)) > 0.2).astype(jnp.float32)
    masks = masks.at[:, 0].set(1.0)     # ensure at least one valid token per row
    category = jnp.array([1, 7], dtype=jnp.int32)

    params = init_params(k2, E, H)

    out = multi_domain_fend_forward(content, masks, category, params)
    out = jax.block_until_ready(out)

    ref = reference_forward(content, masks, category, params)
    assert out.shape == (B, OUT_DIM)
    # bf16 MXU operands + approx reciprocal -> slightly looser tolerance vs the
    # f32 highest-precision reference.
    max_diff = float(jnp.max(jnp.abs(out - ref)))
    assert jnp.allclose(out, ref, atol=2e-2, rtol=2e-2), (
        f"max abs diff {max_diff}")

    print("KERNEL_OK")
</pallas_src>

<mosaic_0001>
module attributes {stable_mosaic.version = 11 : i64} {
  func.func @fused_mdfend_kernel(%arg0: i32, %arg1: memref<8x32x32xf32, #tpu.memory_space<vmem>>, %arg2: memref<8x16xf32, #tpu.memory_space<vmem>>, %arg3: memref<8x32xf32, #tpu.memory_space<vmem>>, %arg4: memref<1x32xf32, #tpu.memory_space<vmem>>, %arg5: memref<1x1xf32, #tpu.memory_space<vmem>>, %arg6: memref<32x32xf32, #tpu.memory_space<vmem>>, %arg7: memref<32x32xf32, #tpu.memory_space<vmem>>, %arg8: memref<1x32xf32, #tpu.memory_space<vmem>>, %arg9: memref<32x5xf32, #tpu.memory_space<vmem>>, %arg10: memref<1x5xf32, #tpu.memory_space<vmem>>, %arg11: memref<32x320xbf16, #tpu.memory_space<vmem>>, %arg12: memref<64x320xbf16, #tpu.memory_space<vmem>>, %arg13: memref<96x320xbf16, #tpu.memory_space<vmem>>, %arg14: memref<160x320xbf16, #tpu.memory_space<vmem>>, %arg15: memref<320x320xbf16, #tpu.memory_space<vmem>>, %arg16: memref<5x1x320xf32, #tpu.memory_space<vmem>>, %arg17: memref<8x320xf32, #tpu.memory_space<vmem>>) attributes {dimension_semantics = [#tpu.dimension_semantics<parallel>], iteration_bounds = array<i64: 2>, scalar_prefetch = 0 : i64, scratch_operands = 0 : i64, tpu.core_type = #tpu.core_type<tc>, window_params = [{transform_indices = @transform_0, window_bounds = array<i64: 8, 32, 32>}, {transform_indices = @transform_1, window_bounds = array<i64: 8, 16>}, {transform_indices = @transform_2, window_bounds = array<i64: 8, 32>}, {pipeline_mode = #tpu.pipeline_mode<synchronous>, transform_indices = @transform_3, window_bounds = array<i64: 1, 32>}, {pipeline_mode = #tpu.pipeline_mode<synchronous>, transform_indices = @transform_4, window_bounds = array<i64: 1, 1>}, {pipeline_mode = #tpu.pipeline_mode<synchronous>, transform_indices = @transform_5, window_bounds = array<i64: 32, 32>}, {pipeline_mode = #tpu.pipeline_mode<synchronous>, transform_indices = @transform_6, window_bounds = array<i64: 32, 32>}, {pipeline_mode = #tpu.pipeline_mode<synchronous>, transform_indices = @transform_7, window_bounds = array<i64: 1, 32>}, {pipeline_mode = #tpu.pipeline_mode<synchronous>, transform_indices = @transform_8, window_bounds = array<i64: 32, 5>}, {pipeline_mode = #tpu.pipeline_mode<synchronous>, transform_indices = @transform_9, window_bounds = array<i64: 1, 5>}, {pipeline_mode = #tpu.pipeline_mode<synchronous>, transform_indices = @transform_10, window_bounds = array<i64: 32, 320>}, {pipeline_mode = #tpu.pipeline_mode<synchronous>, transform_indices = @transform_11, window_bounds = array<i64: 64, 320>}, {pipeline_mode = #tpu.pipeline_mode<synchronous>, transform_indices = @transform_12, window_bounds = array<i64: 96, 320>}, {pipeline_mode = #tpu.pipeline_mode<synchronous>, transform_indices = @transform_13, window_bounds = array<i64: 160, 320>}, {pipeline_mode = #tpu.pipeline_mode<synchronous>, transform_indices = @transform_14, window_bounds = array<i64: 320, 320>}, {pipeline_mode = #tpu.pipeline_mode<synchronous>, transform_indices = @transform_15, window_bounds = array<i64: 5, 1, 320>}, {transform_indices = @transform_16, window_bounds = array<i64: 8, 320>}]} {
    %c0 = arith.constant 0 : index
    %c0_0 = arith.constant 0 : index
    %c0_1 = arith.constant 0 : index
    %0 = vector.load %arg1[%c0, %c0_0, %c0_1] : memref<8x32x32xf32, #tpu.memory_space<vmem>>, vector<8x32x32xf32>
    %1 = vector.extract_strided_slice %0 {offsets = [0, 0, 0], sizes = [8, 16, 32], strides = [1, 1, 1]} : vector<8x32x32xf32> to vector<8x16x32xf32>
    %c0_2 = arith.constant 0 : index
    %c0_3 = arith.constant 0 : index
    %2 = vector.load %arg4[%c0_2, %c0_3] : memref<1x32xf32, #tpu.memory_space<vmem>>, vector<1x32xf32>
    %3 = vector.shape_cast %2 : vector<1x32xf32> to vector<1x1x32xf32>
    %4 = vector.broadcast %3 : vector<1x1x32xf32> to vector<8x16x32xf32>
    %5 = arith.mulf %1, %4 : vector<8x16x32xf32>
    %cst = arith.constant dense<0.000000e+00> : vector<8x16xf32>
    %6 = vector.multi_reduction <add>, %5, %cst [2] : vector<8x16x32xf32> to vector<8x16xf32>
    %c0_4 = arith.constant 0 : index
    %c0_5 = arith.constant 0 : index
    %7 = vector.load %arg5[%c0_4, %c0_5] : memref<1x1xf32, #tpu.memory_space<vmem>>, vector<1x1xf32>
    %8 = vector.broadcast %7 : vector<1x1xf32> to vector<8x16xf32>
    %9 = arith.addf %6, %8 : vector<8x16xf32>
    %c0_6 = arith.constant 0 : index
    %c0_7 = arith.constant 0 : index
    %10 = vector.load %arg2[%c0_6, %c0_7] : memref<8x16xf32, #tpu.memory_space<vmem>>, vector<8x16xf32>
    %cst_8 = arith.constant 0.000000e+00 : f32
    %11 = vector.broadcast %cst_8 : f32 to vector<8x16xf32>
    %12 = arith.cmpf oeq, %10, %11 : vector<8x16xf32>
    %cst_9 = arith.constant 0xFF800000 : f32
    %13 = vector.broadcast %cst_9 : f32 to vector<8x16xf32>
    %14 = arith.select %12, %13, %9 : vector<8x16xi1>, vector<8x16xf32>
    %cst_10 = arith.constant dense<0xFF800000> : vector<8xf32>
    %15 = vector.multi_reduction <maximumf>, %14, %cst_10 [1] : vector<8x16xf32> to vector<8xf32>
    %16 = vector.shape_cast %15 : vector<8xf32> to vector<8x1xf32>
    %17 = vector.broadcast %16 : vector<8x1xf32> to vector<8x16xf32>
    %18 = arith.subf %14, %17 : vector<8x16xf32>
    %19 = math.exp %18 : vector<8x16xf32>
    %cst_11 = arith.constant dense<0.000000e+00> : vector<8xf32>
    %20 = vector.multi_reduction <add>, %19, %cst_11 [1] : vector<8x16xf32> to vector<8xf32>
    %21 = vector.shape_cast %20 : vector<8xf32> to vector<8x1xf32>
    %22 = tpu.reciprocal %21 {approx = true} : vector<8x1xf32> -> vector<8x1xf32>
    %23 = vector.broadcast %22 : vector<8x1xf32> to vector<8x16xf32>
    %24 = arith.mulf %19, %23 : vector<8x16xf32>
    %25 = vector.shape_cast %24 : vector<8x16xf32> to vector<8x16x1xf32>
    %26 = vector.broadcast %25 : vector<8x16x1xf32> to vector<8x16x32xf32>
    %27 = arith.mulf %1, %26 : vector<8x16x32xf32>
    %cst_12 = arith.constant dense<0.000000e+00> : vector<8x32xf32>
    %28 = vector.multi_reduction <add>, %27, %cst_12 [1] : vector<8x16x32xf32> to vector<8x32xf32>
    %c0_13 = arith.constant 0 : index
    %c0_14 = arith.constant 0 : index
    %29 = vector.load %arg3[%c0_13, %c0_14] : memref<8x32xf32, #tpu.memory_space<vmem>>, vector<8x32xf32>
    %c0_15 = arith.constant 0 : index
    %c0_16 = arith.constant 0 : index
    %30 = vector.load %arg6[%c0_15, %c0_16] : memref<32x32xf32, #tpu.memory_space<vmem>>, vector<32x32xf32>
    %cst_17 = arith.constant dense<0.000000e+00> : vector<8x32xf32>
    %31 = tpu.matmul %29, %30, %cst_17 {dimension_numbers = #tpu.dot_dimension_numbers<[1], [0], [0], [1], [0, 0, 1, 1], [], []>} : vector<8x32xf32>, vector<32x32xf32>, vector<8x32xf32> -> vector<8x32xf32>
    %c0_18 = arith.constant 0 : index
    %c0_19 = arith.constant 0 : index
    %32 = vector.load %arg7[%c0_18, %c0_19] : memref<32x32xf32, #tpu.memory_space<vmem>>, vector<32x32xf32>
    %cst_20 = arith.constant dense<0.000000e+00> : vector<8x32xf32>
    %33 = tpu.matmul %28, %32, %cst_20 {dimension_numbers = #tpu.dot_dimension_numbers<[1], [0], [0], [1], [0, 0, 1, 1], [], []>} : vector<8x32xf32>, vector<32x32xf32>, vector<8x32xf32> -> vector<8x32xf32>
    %34 = arith.addf %31, %33 : vector<8x32xf32>
    %c0_21 = arith.constant 0 : index
    %c0_22 = arith.constant 0 : index
    %35 = vector.load %arg8[%c0_21, %c0_22] : memref<1x32xf32, #tpu.memory_space<vmem>>, vector<1x32xf32>
    %36 = vector.broadcast %35 : vector<1x32xf32> to vector<8x32xf32>
    %37 = arith.addf %34, %36 : vector<8x32xf32>
    %cst_23 = arith.constant 0.000000e+00 : f32
    %38 = vector.broadcast %cst_23 : f32 to vector<8x32xf32>
    %39 = arith.maximumf %37, %38 : vector<8x32xf32>
    %c0_24 = arith.constant 0 : index
    %c0_25 = arith.constant 0 : index
    %40 = vector.load %arg9[%c0_24, %c0_25] : memref<32x5xf32, #tpu.memory_space<vmem>>, vector<32x5xf32>
    %cst_26 = arith.constant dense<0.000000e+00> : vector<8x5xf32>
    %41 = tpu.matmul %39, %40, %cst_26 {dimension_numbers = #tpu.dot_dimension_numbers<[1], [0], [0], [1], [0, 0, 1, 1], [], []>} : vector<8x32xf32>, vector<32x5xf32>, vector<8x5xf32> -> vector<8x5xf32>
    %c0_27 = arith.constant 0 : index
    %c0_28 = arith.constant 0 : index
    %42 = vector.load %arg10[%c0_27, %c0_28] : memref<1x5xf32, #tpu.memory_space<vmem>>, vector<1x5xf32>
    %43 = vector.broadcast %42 : vector<1x5xf32> to vector<8x5xf32>
    %44 = arith.addf %41, %43 : vector<8x5xf32>
    %cst_29 = arith.constant dense<0xFF800000> : vector<8xf32>
    %45 = vector.multi_reduction <maximumf>, %44, %cst_29 [1] : vector<8x5xf32> to vector<8xf32>
    %46 = vector.shape_cast %45 : vector<8xf32> to vector<8x1xf32>
    %47 = vector.broadcast %46 : vector<8x1xf32> to vector<8x5xf32>
    %48 = arith.subf %44, %47 : vector<8x5xf32>
    %49 = math.exp %48 : vector<8x5xf32>
    %cst_30 = arith.constant dense<0.000000e+00> : vector<8xf32>
    %50 = vector.multi_reduction <add>, %49, %cst_30 [1] : vector<8x5xf32> to vector<8xf32>
    %51 = vector.shape_cast %50 : vector<8xf32> to vector<8x1xf32>
    %52 = tpu.reciprocal %51 {approx = true} : vector<8x1xf32> -> vector<8x1xf32>
    %53 = vector.broadcast %52 : vector<8x1xf32> to vector<8x5xf32>
    %54 = arith.mulf %49, %53 : vector<8x5xf32>
    %55 = tpu.iota {dimensions = array<i32: 1>} : vector<1x16x1xi32>
    %56 = vector.extract_strided_slice %0 {offsets = [0, 0, 0], sizes = [8, 16, 32], strides = [1, 1, 1]} : vector<8x32x32xf32> to vector<8x16x32xf32>
    %57 = vector.shape_cast %56 : vector<8x16x32xf32> to vector<128x32xf32>
    %58 = arith.truncf %57 : vector<128x32xf32> to vector<128x32xbf16>
    %c0_31 = arith.constant 0 : index
    %c0_32 = arith.constant 0 : index
    %59 = vector.load %arg11[%c0_31, %c0_32] : memref<32x320xbf16, #tpu.memory_space<vmem>>, vector<32x320xbf16>
    %cst_33 = arith.constant dense<0.000000e+00> : vector<128x320xf32>
    %60 = tpu.matmul %58, %59, %cst_33 {dimension_numbers = #tpu.dot_dimension_numbers<[1], [0], [0], [1], [0, 0, 1, 1], [], []>} : vector<128x32xbf16>, vector<32x320xbf16>, vector<128x320xf32> -> vector<128x320xf32>
    %61 = vector.shape_cast %60 : vector<128x320xf32> to vector<8x16x320xf32>
    %c16_i32 = arith.constant 16 : i32
    %62 = vector.broadcast %c16_i32 : i32 to vector<1x16x1xi32>
    %63 = arith.cmpi slt, %55, %62 : vector<1x16x1xi32>
    %cst_34 = arith.constant 0xFF800000 : f32
    %64 = vector.shape_cast %63 : vector<1x16x1xi1> to vector<1x16x1xi1>
    %65 = vector.broadcast %64 : vector<1x16x1xi1> to vector<8x16x320xi1>
    %66 = vector.broadcast %cst_34 : f32 to vector<8x16x320xf32>
    %67 = arith.select %65, %61, %66 : vector<8x16x320xi1>, vector<8x16x320xf32>
    %cst_35 = arith.constant dense<0xFF800000> : vector<8x320xf32>
    %68 = vector.multi_reduction <maximumf>, %67, %cst_35 [1] : vector<8x16x320xf32> to vector<8x320xf32>
    %c0_36 = arith.constant 0 : index
    %c0_37 = arith.constant 0 : index
    %c0_38 = arith.constant 0 : index
    %69 = vector.load %arg16[%c0_36, %c0_37, %c0_38] : memref<5x1x320xf32, #tpu.memory_space<vmem>>, vector<1x1x320xf32>
    %70 = vector.shape_cast %69 : vector<1x1x320xf32> to vector<1x320xf32>
    %71 = vector.broadcast %70 : vector<1x320xf32> to vector<8x320xf32>
    %72 = arith.addf %68, %71 : vector<8x320xf32>
    %73 = vector.extract_strided_slice %54 {offsets = [0, 0], sizes = [8, 1], strides = [1, 1]} : vector<8x5xf32> to vector<8x1xf32>
    %74 = vector.extract_strided_slice %72 {offsets = [0, 0], sizes = [8, 64], strides = [1, 1]} : vector<8x320xf32> to vector<8x64xf32>
    %75 = vector.broadcast %73 : vector<8x1xf32> to vector<8x64xf32>
    %76 = arith.mulf %75, %74 : vector<8x64xf32>
    %77 = vector.extract_strided_slice %54 {offsets = [0, 1], sizes = [8, 1], strides = [1, 1]} : vector<8x5xf32> to vector<8x1xf32>
    %78 = vector.extract_strided_slice %72 {offsets = [0, 64], sizes = [8, 64], strides = [1, 1]} : vector<8x320xf32> to vector<8x64xf32>
    %79 = vector.broadcast %77 : vector<8x1xf32> to vector<8x64xf32>
    %80 = arith.mulf %79, %78 : vector<8x64xf32>
    %81 = arith.addf %76, %80 : vector<8x64xf32>
    %82 = vector.extract_strided_slice %54 {offsets = [0, 2], sizes = [8, 1], strides = [1, 1]} : vector<8x5xf32> to vector<8x1xf32>
    %83 = vector.extract_strided_slice %72 {offsets = [0, 128], sizes = [8, 64], strides = [1, 1]} : vector<8x320xf32> to vector<8x64xf32>
    %84 = vector.broadcast %82 : vector<8x1xf32> to vector<8x64xf32>
    %85 = arith.mulf %84, %83 : vector<8x64xf32>
    %86 = arith.addf %81, %85 : vector<8x64xf32>
    %87 = vector.extract_strided_slice %54 {offsets = [0, 3], sizes = [8, 1], strides = [1, 1]} : vector<8x5xf32> to vector<8x1xf32>
    %88 = vector.extract_strided_slice %72 {offsets = [0, 192], sizes = [8, 64], strides = [1, 1]} : vector<8x320xf32> to vector<8x64xf32>
    %89 = vector.broadcast %87 : vector<8x1xf32> to vector<8x64xf32>
    %90 = arith.mulf %89, %88 : vector<8x64xf32>
    %91 = arith.addf %86, %90 : vector<8x64xf32>
    %92 = vector.extract_strided_slice %54 {offsets = [0, 4], sizes = [8, 1], strides = [1, 1]} : vector<8x5xf32> to vector<8x1xf32>
    %93 = vector.extract_strided_slice %72 {offsets = [0, 256], sizes = [8, 64], strides = [1, 1]} : vector<8x320xf32> to vector<8x64xf32>
    %94 = vector.broadcast %92 : vector<8x1xf32> to vector<8x64xf32>
    %95 = arith.mulf %94, %93 : vector<8x64xf32>
    %96 = arith.addf %91, %95 : vector<8x64xf32>
    %97 = vector.extract_strided_slice %0 {offsets = [0, 1, 0], sizes = [8, 16, 32], strides = [1, 1, 1]} : vector<8x32x32xf32> to vector<8x16x32xf32>
    %98 = vector.shape_cast %97 : vector<8x16x32xf32> to vector<128x32xf32>
    %99 = arith.truncf %98 : vector<128x32xf32> to vector<128x32xbf16>
    %100 = tpu.concatenate %58, %99 in 1 : vector<128x32xbf16>, vector<128x32xbf16> -> vector<128x64xbf16>
    %c0_39 = arith.constant 0 : index
    %c0_40 = arith.constant 0 : index
    %101 = vector.load %arg12[%c0_39, %c0_40] : memref<64x320xbf16, #tpu.memory_space<vmem>>, vector<64x320xbf16>
    %cst_41 = arith.constant dense<0.000000e+00> : vector<128x320xf32>
    %102 = tpu.matmul %100, %101, %cst_41 {dimension_numbers = #tpu.dot_dimension_numbers<[1], [0], [0], [1], [0, 0, 1, 1], [], []>} : vector<128x64xbf16>, vector<64x320xbf16>, vector<128x320xf32> -> vector<128x320xf32>
    %103 = vector.shape_cast %102 : vector<128x320xf32> to vector<8x16x320xf32>
    %c15_i32 = arith.constant 15 : i32
    %104 = vector.broadcast %c15_i32 : i32 to vector<1x16x1xi32>
    %105 = arith.cmpi slt, %55, %104 : vector<1x16x1xi32>
    %cst_42 = arith.constant 0xFF800000 : f32
    %106 = vector.shape_cast %105 : vector<1x16x1xi1> to vector<1x16x1xi1>
    %107 = vector.broadcast %106 : vector<1x16x1xi1> to vector<8x16x320xi1>
    %108 = vector.broadcast %cst_42 : f32 to vector<8x16x320xf32>
    %109 = arith.select %107, %103, %108 : vector<8x16x320xi1>, vector<8x16x320xf32>
    %cst_43 = arith.constant dense<0xFF800000> : vector<8x320xf32>
    %110 = vector.multi_reduction <maximumf>, %109, %cst_43 [1] : vector<8x16x320xf32> to vector<8x320xf32>
    %c1 = arith.constant 1 : index
    %c0_44 = arith.constant 0 : index
    %c0_45 = arith.constant 0 : index
    %111 = vector.load %arg16[%c1, %c0_44, %c0_45] : memref<5x1x320xf32, #tpu.memory_space<vmem>>, vector<1x1x320xf32>
    %112 = vector.shape_cast %111 : vector<1x1x320xf32> to vector<1x320xf32>
    %113 = vector.broadcast %112 : vector<1x320xf32> to vector<8x320xf32>
    %114 = arith.addf %110, %113 : vector<8x320xf32>
    %115 = vector.extract_strided_slice %54 {offsets = [0, 0], sizes = [8, 1], strides = [1, 1]} : vector<8x5xf32> to vector<8x1xf32>
    %116 = vector.extract_strided_slice %114 {offsets = [0, 0], sizes = [8, 64], strides = [1, 1]} : vector<8x320xf32> to vector<8x64xf32>
    %117 = vector.broadcast %115 : vector<8x1xf32> to vector<8x64xf32>
    %118 = arith.mulf %117, %116 : vector<8x64xf32>
    %119 = vector.extract_strided_slice %54 {offsets = [0, 1], sizes = [8, 1], strides = [1, 1]} : vector<8x5xf32> to vector<8x1xf32>
    %120 = vector.extract_strided_slice %114 {offsets = [0, 64], sizes = [8, 64], strides = [1, 1]} : vector<8x320xf32> to vector<8x64xf32>
    %121 = vector.broadcast %119 : vector<8x1xf32> to vector<8x64xf32>
    %122 = arith.mulf %121, %120 : vector<8x64xf32>
    %123 = arith.addf %118, %122 : vector<8x64xf32>
    %124 = vector.extract_strided_slice %54 {offsets = [0, 2], sizes = [8, 1], strides = [1, 1]} : vector<8x5xf32> to vector<8x1xf32>
    %125 = vector.extract_strided_slice %114 {offsets = [0, 128], sizes = [8, 64], strides = [1, 1]} : vector<8x320xf32> to vector<8x64xf32>
    %126 = vector.broadcast %124 : vector<8x1xf32> to vector<8x64xf32>
    %127 = arith.mulf %126, %125 : vector<8x64xf32>
    %128 = arith.addf %123, %127 : vector<8x64xf32>
    %129 = vector.extract_strided_slice %54 {offsets = [0, 3], sizes = [8, 1], strides = [1, 1]} : vector<8x5xf32> to vector<8x1xf32>
    %130 = vector.extract_strided_slice %114 {offsets = [0, 192], sizes = [8, 64], strides = [1, 1]} : vector<8x320xf32> to vector<8x64xf32>
    %131 = vector.broadcast %129 : vector<8x1xf32> to vector<8x64xf32>
    %132 = arith.mulf %131, %130 : vector<8x64xf32>
    %133 = arith.addf %128, %132 : vector<8x64xf32>
    %134 = vector.extract_strided_slice %54 {offsets = [0, 4], sizes = [8, 1], strides = [1, 1]} : vector<8x5xf32> to vector<8x1xf32>
    %135 = vector.extract_strided_slice %114 {offsets = [0, 256], sizes = [8, 64], strides = [1, 1]} : vector<8x320xf32> to vector<8x64xf32>
    %136 = vector.broadcast %134 : vector<8x1xf32> to vector<8x64xf32>
    %137 = arith.mulf %136, %135 : vector<8x64xf32>
    %138 = arith.addf %133, %137 : vector<8x64xf32>
    %139 = vector.extract_strided_slice %0 {offsets = [0, 2, 0], sizes = [8, 16, 32], strides = [1, 1, 1]} : vector<8x32x32xf32> to vector<8x16x32xf32>
    %140 = vector.shape_cast %139 : vector<8x16x32xf32> to vector<128x32xf32>
    %141 = arith.truncf %140 : vector<128x32xf32> to vector<128x32xbf16>
    %142 = tpu.concatenate %100, %141 in 1 : vector<128x64xbf16>, vector<128x32xbf16> -> vector<128x96xbf16>
    %c0_46 = arith.constant 0 : index
    %c0_47 = arith.constant 0 : index
    %143 = vector.load %arg13[%c0_46, %c0_47] : memref<96x320xbf16, #tpu.memory_space<vmem>>, vector<96x320xbf16>
    %cst_48 = arith.constant dense<0.000000e+00> : vector<128x320xf32>
    %144 = tpu.matmul %142, %143, %cst_48 {dimension_numbers = #tpu.dot_dimension_numbers<[1], [0], [0], [1], [0, 0, 1, 1], [], []>} : vector<128x96xbf16>, vector<96x320xbf16>, vector<128x320xf32> -> vector<128x320xf32>
    %145 = vector.shape_cast %144 : vector<128x320xf32> to vector<8x16x320xf32>
    %c14_i32 = arith.constant 14 : i32
    %146 = vector.broadcast %c14_i32 : i32 to vector<1x16x1xi32>
    %147 = arith.cmpi slt, %55, %146 : vector<1x16x1xi32>
    %cst_49 = arith.constant 0xFF800000 : f32
    %148 = vector.shape_cast %147 : vector<1x16x1xi1> to vector<1x16x1xi1>
    %149 = vector.broadcast %148 : vector<1x16x1xi1> to vector<8x16x320xi1>
    %150 = vector.broadcast %cst_49 : f32 to vector<8x16x320xf32>
    %151 = arith.select %149, %145, %150 : vector<8x16x320xi1>, vector<8x16x320xf32>
    %cst_50 = arith.constant dense<0xFF800000> : vector<8x320xf32>
    %152 = vector.multi_reduction <maximumf>, %151, %cst_50 [1] : vector<8x16x320xf32> to vector<8x320xf32>
    %c2 = arith.constant 2 : index
    %c0_51 = arith.constant 0 : index
    %c0_52 = arith.constant 0 : index
    %153 = vector.load %arg16[%c2, %c0_51, %c0_52] : memref<5x1x320xf32, #tpu.memory_space<vmem>>, vector<1x1x320xf32>
    %154 = vector.shape_cast %153 : vector<1x1x320xf32> to vector<1x320xf32>
    %155 = vector.broadcast %154 : vector<1x320xf32> to vector<8x320xf32>
    %156 = arith.addf %152, %155 : vector<8x320xf32>
    %157 = vector.extract_strided_slice %54 {offsets = [0, 0], sizes = [8, 1], strides = [1, 1]} : vector<8x5xf32> to vector<8x1xf32>
    %158 = vector.extract_strided_slice %156 {offsets = [0, 0], sizes = [8, 64], strides = [1, 1]} : vector<8x320xf32> to vector<8x64xf32>
    %159 = vector.broadcast %157 : vector<8x1xf32> to vector<8x64xf32>
    %160 = arith.mulf %159, %158 : vector<8x64xf32>
    %161 = vector.extract_strided_slice %54 {offsets = [0, 1], sizes = [8, 1], strides = [1, 1]} : vector<8x5xf32> to vector<8x1xf32>
    %162 = vector.extract_strided_slice %156 {offsets = [0, 64], sizes = [8, 64], strides = [1, 1]} : vector<8x320xf32> to vector<8x64xf32>
    %163 = vector.broadcast %161 : vector<8x1xf32> to vector<8x64xf32>
    %164 = arith.mulf %163, %162 : vector<8x64xf32>
    %165 = arith.addf %160, %164 : vector<8x64xf32>
    %166 = vector.extract_strided_slice %54 {offsets = [0, 2], sizes = [8, 1], strides = [1, 1]} : vector<8x5xf32> to vector<8x1xf32>
    %167 = vector.extract_strided_slice %156 {offsets = [0, 128], sizes = [8, 64], strides = [1, 1]} : vector<8x320xf32> to vector<8x64xf32>
    %168 = vector.broadcast %166 : vector<8x1xf32> to vector<8x64xf32>
    %169 = arith.mulf %168, %167 : vector<8x64xf32>
    %170 = arith.addf %165, %169 : vector<8x64xf32>
    %171 = vector.extract_strided_slice %54 {offsets = [0, 3], sizes = [8, 1], strides = [1, 1]} : vector<8x5xf32> to vector<8x1xf32>
    %172 = vector.extract_strided_slice %156 {offsets = [0, 192], sizes = [8, 64], strides = [1, 1]} : vector<8x320xf32> to vector<8x64xf32>
    %173 = vector.broadcast %171 : vector<8x1xf32> to vector<8x64xf32>
    %174 = arith.mulf %173, %172 : vector<8x64xf32>
    %175 = arith.addf %170, %174 : vector<8x64xf32>
    %176 = vector.extract_strided_slice %54 {offsets = [0, 4], sizes = [8, 1], strides = [1, 1]} : vector<8x5xf32> to vector<8x1xf32>
    %177 = vector.extract_strided_slice %156 {offsets = [0, 256], sizes = [8, 64], strides = [1, 1]} : vector<8x320xf32> to vector<8x64xf32>
    %178 = vector.broadcast %176 : vector<8x1xf32> to vector<8x64xf32>
    %179 = arith.mulf %178, %177 : vector<8x64xf32>
    %180 = arith.addf %175, %179 : vector<8x64xf32>
    %181 = vector.extract_strided_slice %0 {offsets = [0, 3, 0], sizes = [8, 16, 32], strides = [1, 1, 1]} : vector<8x32x32xf32> to vector<8x16x32xf32>
    %182 = vector.shape_cast %181 : vector<8x16x32xf32> to vector<128x32xf32>
    %183 = arith.truncf %182 : vector<128x32xf32> to vector<128x32xbf16>
    %184 = vector.extract_strided_slice %0 {offsets = [0, 4, 0], sizes = [8, 16, 32], strides = [1, 1, 1]} : vector<8x32x32xf32> to vector<8x16x32xf32>
    %185 = vector.shape_cast %184 : vector<8x16x32xf32> to vector<128x32xf32>
    %186 = arith.truncf %185 : vector<128x32xf32> to vector<128x32xbf16>
    %187 = tpu.concatenate %142, %183, %186 in 1 : vector<128x96xbf16>, vector<128x32xbf16>, vector<128x32xbf16> -> vector<128x160xbf16>
    %c0_53 = arith.constant 0 : index
    %c0_54 = arith.constant 0 : index
    %188 = vector.load %arg14[%c0_53, %c0_54] : memref<160x320xbf16, #tpu.memory_space<vmem>>, vector<160x320xbf16>
    %cst_55 = arith.constant dense<0.000000e+00> : vector<128x320xf32>
    %189 = tpu.matmul %187, %188, %cst_55 {dimension_numbers = #tpu.dot_dimension_numbers<[1], [0], [0], [1], [0, 0, 1, 1], [], []>} : vector<128x160xbf16>, vector<160x320xbf16>, vector<128x320xf32> -> vector<128x320xf32>
    %190 = vector.shape_cast %189 : vector<128x320xf32> to vector<8x16x320xf32>
    %c12_i32 = arith.constant 12 : i32
    %191 = vector.broadcast %c12_i32 : i32 to vector<1x16x1xi32>
    %192 = arith.cmpi slt, %55, %191 : vector<1x16x1xi32>
    %cst_56 = arith.constant 0xFF800000 : f32
    %193 = vector.shape_cast %192 : vector<1x16x1xi1> to vector<1x16x1xi1>
    %194 = vector.broadcast %193 : vector<1x16x1xi1> to vector<8x16x320xi1>
    %195 = vector.broadcast %cst_56 : f32 to vector<8x16x320xf32>
    %196 = arith.select %194, %190, %195 : vector<8x16x320xi1>, vector<8x16x320xf32>
    %cst_57 = arith.constant dense<0xFF800000> : vector<8x320xf32>
    %197 = vector.multi_reduction <maximumf>, %196, %cst_57 [1] : vector<8x16x320xf32> to vector<8x320xf32>
    %c3 = arith.constant 3 : index
    %c0_58 = arith.constant 0 : index
    %c0_59 = arith.constant 0 : index
    %198 = vector.load %arg16[%c3, %c0_58, %c0_59] : memref<5x1x320xf32, #tpu.memory_space<vmem>>, vector<1x1x320xf32>
    %199 = vector.shape_cast %198 : vector<1x1x320xf32> to vector<1x320xf32>
    %200 = vector.broadcast %199 : vector<1x320xf32> to vector<8x320xf32>
    %201 = arith.addf %197, %200 : vector<8x320xf32>
    %202 = vector.extract_strided_slice %54 {offsets = [0, 0], sizes = [8, 1], strides = [1, 1]} : vector<8x5xf32> to vector<8x1xf32>
    %203 = vector.extract_strided_slice %201 {offsets = [0, 0], sizes = [8, 64], strides = [1, 1]} : vector<8x320xf32> to vector<8x64xf32>
    %204 = vector.broadcast %202 : vector<8x1xf32> to vector<8x64xf32>
    %205 = arith.mulf %204, %203 : vector<8x64xf32>
    %206 = vector.extract_strided_slice %54 {offsets = [0, 1], sizes = [8, 1], strides = [1, 1]} : vector<8x5xf32> to vector<8x1xf32>
    %207 = vector.extract_strided_slice %201 {offsets = [0, 64], sizes = [8, 64], strides = [1, 1]} : vector<8x320xf32> to vector<8x64xf32>
    %208 = vector.broadcast %206 : vector<8x1xf32> to vector<8x64xf32>
    %209 = arith.mulf %208, %207 : vector<8x64xf32>
    %210 = arith.addf %205, %209 : vector<8x64xf32>
    %211 = vector.extract_strided_slice %54 {offsets = [0, 2], sizes = [8, 1], strides = [1, 1]} : vector<8x5xf32> to vector<8x1xf32>
    %212 = vector.extract_strided_slice %201 {offsets = [0, 128], sizes = [8, 64], strides = [1, 1]} : vector<8x320xf32> to vector<8x64xf32>
    %213 = vector.broadcast %211 : vector<8x1xf32> to vector<8x64xf32>
    %214 = arith.mulf %213, %212 : vector<8x64xf32>
    %215 = arith.addf %210, %214 : vector<8x64xf32>
    %216 = vector.extract_strided_slice %54 {offsets = [0, 3], sizes = [8, 1], strides = [1, 1]} : vector<8x5xf32> to vector<8x1xf32>
    %217 = vector.extract_strided_slice %201 {offsets = [0, 192], sizes = [8, 64], strides = [1, 1]} : vector<8x320xf32> to vector<8x64xf32>
    %218 = vector.broadcast %216 : vector<8x1xf32> to vector<8x64xf32>
    %219 = arith.mulf %218, %217 : vector<8x64xf32>
    %220 = arith.addf %215, %219 : vector<8x64xf32>
    %221 = vector.extract_strided_slice %54 {offsets = [0, 4], sizes = [8, 1], strides = [1, 1]} : vector<8x5xf32> to vector<8x1xf32>
    %222 = vector.extract_strided_slice %201 {offsets = [0, 256], sizes = [8, 64], strides = [1, 1]} : vector<8x320xf32> to vector<8x64xf32>
    %223 = vector.broadcast %221 : vector<8x1xf32> to vector<8x64xf32>
    %224 = arith.mulf %223, %222 : vector<8x64xf32>
    %225 = arith.addf %220, %224 : vector<8x64xf32>
    %226 = vector.extract_strided_slice %0 {offsets = [0, 5, 0], sizes = [8, 16, 32], strides = [1, 1, 1]} : vector<8x32x32xf32> to vector<8x16x32xf32>
    %227 = vector.shape_cast %226 : vector<8x16x32xf32> to vector<128x32xf32>
    %228 = arith.truncf %227 : vector<128x32xf32> to vector<128x32xbf16>
    %229 = vector.extract_strided_slice %0 {offsets = [0, 6, 0], sizes = [8, 16, 32], strides = [1, 1, 1]} : vector<8x32x32xf32> to vector<8x16x32xf32>
    %230 = vector.shape_cast %229 : vector<8x16x32xf32> to vector<128x32xf32>
    %231 = arith.truncf %230 : vector<128x32xf32> to vector<128x32xbf16>
    %232 = vector.extract_strided_slice %0 {offsets = [0, 7, 0], sizes = [8, 16, 32], strides = [1, 1, 1]} : vector<8x32x32xf32> to vector<8x16x32xf32>
    %233 = vector.shape_cast %232 : vector<8x16x32xf32> to vector<128x32xf32>
    %234 = arith.truncf %233 : vector<128x32xf32> to vector<128x32xbf16>
    %235 = vector.extract_strided_slice %0 {offsets = [0, 8, 0], sizes = [8, 16, 32], strides = [1, 1, 1]} : vector<8x32x32xf32> to vector<8x16x32xf32>
    %236 = vector.shape_cast %235 : vector<8x16x32xf32> to vector<128x32xf32>
    %237 = arith.truncf %236 : vector<128x32xf32> to vector<128x32xbf16>
    %238 = vector.extract_strided_slice %0 {offsets = [0, 9, 0], sizes = [8, 16, 32], strides = [1, 1, 1]} : vector<8x32x32xf32> to vector<8x16x32xf32>
    %239 = vector.shape_cast %238 : vector<8x16x32xf32> to vector<128x32xf32>
    %240 = arith.truncf %239 : vector<128x32xf32> to vector<128x32xbf16>
    %241 = tpu.concatenate %187, %228, %231, %234, %237, %240 in 1 : vector<128x160xbf16>, vector<128x32xbf16>, vector<128x32xbf16>, vector<128x32xbf16>, vector<128x32xbf16>, vector<128x32xbf16> -> vector<128x320xbf16>
    %c0_60 = arith.constant 0 : index
    %c0_61 = arith.constant 0 : index
    %242 = vector.load %arg15[%c0_60, %c0_61] : memref<320x320xbf16, #tpu.memory_space<vmem>>, vector<320x320xbf16>
    %cst_62 = arith.constant dense<0.000000e+00> : vector<128x320xf32>
    %243 = tpu.matmul %241, %242, %cst_62 {dimension_numbers = #tpu.dot_dimension_numbers<[1], [0], [0], [1], [0, 0, 1, 1], [], []>} : vector<128x320xbf16>, vector<320x320xbf16>, vector<128x320xf32> -> vector<128x320xf32>
    %244 = vector.shape_cast %243 : vector<128x320xf32> to vector<8x16x320xf32>
    %c7_i32 = arith.constant 7 : i32
    %245 = vector.broadcast %c7_i32 : i32 to vector<1x16x1xi32>
    %246 = arith.cmpi slt, %55, %245 : vector<1x16x1xi32>
    %cst_63 = arith.constant 0xFF800000 : f32
    %247 = vector.shape_cast %246 : vector<1x16x1xi1> to vector<1x16x1xi1>
    %248 = vector.broadcast %247 : vector<1x16x1xi1> to vector<8x16x320xi1>
    %249 = vector.broadcast %cst_63 : f32 to vector<8x16x320xf32>
    %250 = arith.select %248, %244, %249 : vector<8x16x320xi1>, vector<8x16x320xf32>
    %cst_64 = arith.constant dense<0xFF800000> : vector<8x320xf32>
    %251 = vector.multi_reduction <maximumf>, %250, %cst_64 [1] : vector<8x16x320xf32> to vector<8x320xf32>
    %c4 = arith.constant 4 : index
    %c0_65 = arith.constant 0 : index
    %c0_66 = arith.constant 0 : index
    %252 = vector.load %arg16[%c4, %c0_65, %c0_66] : memref<5x1x320xf32, #tpu.memory_space<vmem>>, vector<1x1x320xf32>
    %253 = vector.shape_cast %252 : vector<1x1x320xf32> to vector<1x320xf32>
    %254 = vector.broadcast %253 : vector<1x320xf32> to vector<8x320xf32>
    %255 = arith.addf %251, %254 : vector<8x320xf32>
    %256 = vector.extract_strided_slice %54 {offsets = [0, 0], sizes = [8, 1], strides = [1, 1]} : vector<8x5xf32> to vector<8x1xf32>
    %257 = vector.extract_strided_slice %255 {offsets = [0, 0], sizes = [8, 64], strides = [1, 1]} : vector<8x320xf32> to vector<8x64xf32>
    %258 = vector.broadcast %256 : vector<8x1xf32> to vector<8x64xf32>
    %259 = arith.mulf %258, %257 : vector<8x64xf32>
    %260 = vector.extract_strided_slice %54 {offsets = [0, 1], sizes = [8, 1], strides = [1, 1]} : vector<8x5xf32> to vector<8x1xf32>
    %261 = vector.extract_strided_slice %255 {offsets = [0, 64], sizes = [8, 64], strides = [1, 1]} : vector<8x320xf32> to vector<8x64xf32>
    %262 = vector.broadcast %260 : vector<8x1xf32> to vector<8x64xf32>
    %263 = arith.mulf %262, %261 : vector<8x64xf32>
    %264 = arith.addf %259, %263 : vector<8x64xf32>
    %265 = vector.extract_strided_slice %54 {offsets = [0, 2], sizes = [8, 1], strides = [1, 1]} : vector<8x5xf32> to vector<8x1xf32>
    %266 = vector.extract_strided_slice %255 {offsets = [0, 128], sizes = [8, 64], strides = [1, 1]} : vector<8x320xf32> to vector<8x64xf32>
    %267 = vector.broadcast %265 : vector<8x1xf32> to vector<8x64xf32>
    %268 = arith.mulf %267, %266 : vector<8x64xf32>
    %269 = arith.addf %264, %268 : vector<8x64xf32>
    %270 = vector.extract_strided_slice %54 {offsets = [0, 3], sizes = [8, 1], strides = [1, 1]} : vector<8x5xf32> to vector<8x1xf32>
    %271 = vector.extract_strided_slice %255 {offsets = [0, 192], sizes = [8, 64], strides = [1, 1]} : vector<8x320xf32> to vector<8x64xf32>
    %272 = vector.broadcast %270 : vector<8x1xf32> to vector<8x64xf32>
    %273 = arith.mulf %272, %271 : vector<8x64xf32>
    %274 = arith.addf %269, %273 : vector<8x64xf32>
    %275 = vector.extract_strided_slice %54 {offsets = [0, 4], sizes = [8, 1], strides = [1, 1]} : vector<8x5xf32> to vector<8x1xf32>
    %276 = vector.extract_strided_slice %255 {offsets = [0, 256], sizes = [8, 64], strides = [1, 1]} : vector<8x320xf32> to vector<8x64xf32>
    %277 = vector.broadcast %275 : vector<8x1xf32> to vector<8x64xf32>
    %278 = arith.mulf %277, %276 : vector<8x64xf32>
    %279 = arith.addf %274, %278 : vector<8x64xf32>
    %280 = tpu.concatenate %96, %138, %180, %225, %279 in 1 : vector<8x64xf32>, vector<8x64xf32>, vector<8x64xf32>, vector<8x64xf32>, vector<8x64xf32> -> vector<8x320xf32>
    %c0_67 = arith.constant 0 : index
    %c0_68 = arith.constant 0 : index
    %281 = vector.load %arg17[%c0_67, %c0_68] : memref<8x320xf32, #tpu.memory_space<vmem>>, vector<8x320xf32>
    tpu.vector_store %arg17[%c0_67, %c0_68], %280 {strides = array<i32>} : memref<8x320xf32, #tpu.memory_space<vmem>>, vector<8x320xf32>,
    return
  }
  func.func @transform_0(%arg0: i32) -> (i32, i32, i32) {
    %c0_i32 = arith.constant 0 : i32
    %c0_i32_0 = arith.constant 0 : i32
    %c0_i32_1 = arith.constant 0 : i32
    return %arg0, %c0_i32, %c0_i32_0 : i32, i32, i32
  }
  func.func @transform_1(%arg0: i32) -> (i32, i32) {
    %c0_i32 = arith.constant 0 : i32
    %c0_i32_0 = arith.constant 0 : i32
    return %arg0, %c0_i32 : i32, i32
  }
  func.func @transform_2(%arg0: i32) -> (i32, i32) {
    %c0_i32 = arith.constant 0 : i32
    %c0_i32_0 = arith.constant 0 : i32
    return %arg0, %c0_i32 : i32, i32
  }
  func.func @transform_3(%arg0: i32) -> (i32, i32) {
    %c0_i32 = arith.constant 0 : i32
    %c0_i32_0 = arith.constant 0 : i32
    %c0_i32_1 = arith.constant 0 : i32
    return %c0_i32, %c0_i32_0 : i32, i32
  }
  func.func @transform_4(%arg0: i32) -> (i32, i32) {
    %c0_i32 = arith.constant 0 : i32
    %c0_i32_0 = arith.constant 0 : i32
    %c0_i32_1 = arith.constant 0 : i32
    return %c0_i32, %c0_i32_0 : i32, i32
  }
  func.func @transform_5(%arg0: i32) -> (i32, i32) {
    %c0_i32 = arith.constant 0 : i32
    %c0_i32_0 = arith.constant 0 : i32
    %c0_i32_1 = arith.constant 0 : i32
    return %c0_i32, %c0_i32_0 : i32, i32
  }
  func.func @transform_6(%arg0: i32) -> (i32, i32) {
    %c0_i32 = arith.constant 0 : i32
    %c0_i32_0 = arith.constant 0 : i32
    %c0_i32_1 = arith.constant 0 : i32
    return %c0_i32, %c0_i32_0 : i32, i32
  }
  func.func @transform_7(%arg0: i32) -> (i32, i32) {
    %c0_i32 = arith.constant 0 : i32
    %c0_i32_0 = arith.constant 0 : i32
    %c0_i32_1 = arith.constant 0 : i32
    return %c0_i32, %c0_i32_0 : i32, i32
  }
  func.func @transform_8(%arg0: i32) -> (i32, i32) {
    %c0_i32 = arith.constant 0 : i32
    %c0_i32_0 = arith.constant 0 : i32
    %c0_i32_1 = arith.constant 0 : i32
    return %c0_i32, %c0_i32_0 : i32, i32
  }
  func.func @transform_9(%arg0: i32) -> (i32, i32) {
    %c0_i32 = arith.constant 0 : i32
    %c0_i32_0 = arith.constant 0 : i32
    %c0_i32_1 = arith.constant 0 : i32
    return %c0_i32, %c0_i32_0 : i32, i32
  }
  func.func @transform_10(%arg0: i32) -> (i32, i32) {
    %c0_i32 = arith.constant 0 : i32
    %c0_i32_0 = arith.constant 0 : i32
    %c0_i32_1 = arith.constant 0 : i32
    return %c0_i32, %c0_i32_0 : i32, i32
  }
  func.func @transform_11(%arg0: i32) -> (i32, i32) {
    %c0_i32 = arith.constant 0 : i32
    %c0_i32_0 = arith.constant 0 : i32
    %c0_i32_1 = arith.constant 0 : i32
    return %c0_i32, %c0_i32_0 : i32, i32
  }
  func.func @transform_12(%arg0: i32) -> (i32, i32) {
    %c0_i32 = arith.constant 0 : i32
    %c0_i32_0 = arith.constant 0 : i32
    %c0_i32_1 = arith.constant 0 : i32
    return %c0_i32, %c0_i32_0 : i32, i32
  }
  func.func @transform_13(%arg0: i32) -> (i32, i32) {
    %c0_i32 = arith.constant 0 : i32
    %c0_i32_0 = arith.constant 0 : i32
    %c0_i32_1 = arith.constant 0 : i32
    return %c0_i32, %c0_i32_0 : i32, i32
  }
  func.func @transform_14(%arg0: i32) -> (i32, i32) {
    %c0_i32 = arith.constant 0 : i32
    %c0_i32_0 = arith.constant 0 : i32
    %c0_i32_1 = arith.constant 0 : i32
    return %c0_i32, %c0_i32_0 : i32, i32
  }
  func.func @transform_15(%arg0: i32) -> (i32, i32, i32) {
    %c0_i32 = arith.constant 0 : i32
    %c0_i32_0 = arith.constant 0 : i32
    %c0_i32_1 = arith.constant 0 : i32
    %c0_i32_2 = arith.constant 0 : i32
    return %c0_i32, %c0_i32_0, %c0_i32_1 : i32, i32, i32
  }
  func.func @transform_16(%arg0: i32) -> (i32, i32) {
    %c0_i32 = arith.constant 0 : i32
    %c0_i32_0 = arith.constant 0 : i32
    return %arg0, %c0_i32 : i32, i32
  }
}

</mosaic_0001>

<llo_original>
// kernel: multi_domain_fend_forward.1
$region0: #{multi_domain_fend_forward.1}
  #allocation0 [shape = 'u32[]', space=smem, size = 0x4, offset = 0x4, fixed_abs, tag = 'smem constant byte address 0x4 - core index']
  #allocation1 [shape = 'u32[144,128]{1,0:T(1,128)}', space=vmem, size = 0x12000, scoped, tag = 'internal scratch']
  #allocation2 [shape = 'f32[1,1]{1,0:T(1,128)S(1)}', space=vmem, size = 0x200, scoped, tag = 'scoped memory for multi_domain_fend_forward.1']
  %s0 = inlined_call_operand.vmem [shape: f32[16,32,32], index: 0, kind: input, shape index: {}]
  %s1 = inlined_call_operand.vmem [shape: f32[16,16], index: 1, kind: input, shape index: {}]
  %s2 = inlined_call_operand.vmem [shape: f32[16,32], index: 2, kind: input, shape index: {}]
  %s3 = inlined_call_operand.vmem [shape: f32[1,32], index: 3, kind: input, shape index: {}]
  %s4 = inlined_call_operand.<no memory space> [shape: f32[1,1], index: 4, kind: input, shape index: {}]
  %s5 = inlined_call_operand.vmem [shape: f32[32,32], index: 5, kind: input, shape index: {}]
  %s6 = inlined_call_operand.vmem [shape: f32[32,32], index: 6, kind: input, shape index: {}]
  %s7 = inlined_call_operand.vmem [shape: f32[1,32], index: 7, kind: input, shape index: {}]
  %s8 = inlined_call_operand.vmem [shape: f32[32,5], index: 8, kind: input, shape index: {}]
  %s9 = inlined_call_operand.vmem [shape: f32[1,5], index: 9, kind: input, shape index: {}]
  %s10 = inlined_call_operand.vmem [shape: bf16[32,320], index: 10, kind: input, shape index: {}]
  %s11 = inlined_call_operand.vmem [shape: bf16[64,320], index: 11, kind: input, shape index: {}]
  %s12 = inlined_call_operand.vmem [shape: bf16[96,320], index: 12, kind: input, shape index: {}]
  %s13 = inlined_call_operand.vmem [shape: bf16[160,320], index: 13, kind: input, shape index: {}]
  %s14 = inlined_call_operand.vmem [shape: bf16[320,320], index: 14, kind: input, shape index: {}]
  %s15 = inlined_call_operand.vmem [shape: f32[5,1,320], index: 15, kind: input, shape index: {}]
  %s16 = inlined_call_operand.vmem [shape: f32[16,320], index: 16, kind: output, shape index: {}]
  %s17 = sld [smem:[#allocation0]]
  $region97: #{multi_domain_fend_forward.1} parent=0
    _
  %s19 = ssub.s32 1, %s17
  %s20 = scalar_select 0, %s19, %s17
  %v21 = vstv %s4
  %22 = vst [vmem:[#allocation2] sm:$0x1] %v21
  loop: start=0, step=1, limit=4
  $region2: #{multi_domain_fend_forward.1} parent=0 // loop_pre_header
    _
  $region3: #{multi_domain_fend_forward.1} parent=0 // loop_header
    %s24 = sphi 0, %s28
    %p25 = scmp.ge.s32.totalorder %s24, 4
    %s34 = sphi 0, %s36
    %s37 = sphi 0, %s34
    %s38 = sphi 0, %s37
    %s54 = sphi 0, %s38
    %s60 = sphi 0, %s62
    %s63 = sphi 0, %s60
    %s64 = sphi 0, %s63
    %s80 = sphi 0, %s64
    %s86 = sphi 0, %s88
    %s89 = sphi 0, %s86
    %s90 = sphi 0, %s89
    %s106 = sphi 0, %s90
    %s110 = sphi 0, %s110
    %s112 = sphi 0, %s110
    %s113 = sphi 0, %s112
    %s127 = sphi 0, %s113
    %s131 = sphi 0, %s131
    %s133 = sphi 0, %s131
    %s134 = sphi 0, %s133
    %s148 = sphi 0, %s134
    %s152 = sphi 0, %s152
    %s154 = sphi 0, %s152
    %s155 = sphi 0, %s154
    %s169 = sphi 0, %s155
    %s173 = sphi 0, %s173
    %s175 = sphi 0, %s173
    %s176 = sphi 0, %s175
    %s190 = sphi 0, %s176
    %s194 = sphi 0, %s194
    %s196 = sphi 0, %s194
    %s197 = sphi 0, %s196
    %s211 = sphi 0, %s197
    %s215 = sphi 0, %s215
    %s217 = sphi 0, %s215
    %s218 = sphi 0, %s217
    %s232 = sphi 0, %s218
    %s236 = sphi 0, %s236
    %s238 = sphi 0, %s236
    %s239 = sphi 0, %s238
    %s253 = sphi 0, %s239
    %s257 = sphi 0, %s257
    %s259 = sphi 0, %s257
    %s260 = sphi 0, %s259
    %s274 = sphi 0, %s260
    %s278 = sphi 0, %s278
    %s280 = sphi 0, %s278
    %s281 = sphi 0, %s280
    %s295 = sphi 0, %s281
    %s299 = sphi 0, %s299
    %s301 = sphi 0, %s299
    %s302 = sphi 0, %s301
    %s316 = sphi 0, %s302
    %s320 = sphi 0, %s320
    %s322 = sphi 0, %s320
    %s323 = sphi 0, %s322
    %s337 = sphi 0, %s323
    %s341 = sphi 0, %s341
    %s343 = sphi 0, %s341
    %s344 = sphi 0, %s343
    %s358 = sphi 0, %s344
    %s362 = sphi 0, %s362
    %s364 = sphi 0, %s362
    %s365 = sphi 0, %s364
    %s379 = sphi 0, %s365
    %s385 = sphi 0, %s387
    %s388 = sphi 0, %s385
    %s389 = sphi 0, %s388
    %s405 = sphi 0, %s389
  $region4: #{multi_domain_fend_forward.1} parent=0 // loop_header_branch
    %27 = sbr.rel (%p25) target = $region8
  $region5: #{multi_domain_fend_forward.1} parent=0 // loop_body
    %s29 = ssub.s32 %s24, 1
    %s30 = ssub.s32 %s24, 2
    %s31 = sadd.s32 %s24, 1
    %s32 = ssub.s32 %s24, %s31
    %p33 = scmp.eq.s32.totalorder %s32, 0
    %s35 = sadd.s32 %s34, 1
    %s36 = scalar_select %p33, %s34, %s35
    %p39 = pneg %p33
    %p40 = scmp.eq.s32.totalorder %s24, 1
    %p41 = por %p39, %p40
    %p42 = scmp.ne.s32.totalorder %s34, %s37
    %p43 = scmp.eq.s32.totalorder %s24, 0
    %p44 = por %p42, %p43
    %p45 = scmp.ne.s32.totalorder %s34, %s37
    %p46 = scmp.eq.s32.totalorder %s29, 1
    %p47 = por %p45, %p46
    %p48 = scmp.ne.s32.totalorder %s37, %s38
    %p49 = scmp.eq.s32.totalorder %s29, 0
    %p50 = por %p48, %p49
    %p51 = scmp.ne.s32.totalorder %s37, %s38
    %p52 = scmp.eq.s32.totalorder %s30, 1
    %p53 = por %p51, %p52
    %p55 = scmp.ne.s32.totalorder %s38, %s54
    %p56 = scmp.eq.s32.totalorder %s30, 0
    %p57 = por %p55, %p56
    %s58 = ssub.s32 %s24, %s31
    %p59 = scmp.eq.s32.totalorder %s58, 0
    %s61 = sadd.s32 %s60, 1
    %s62 = scalar_select %p59, %s60, %s61
    %p65 = pneg %p59
    %p66 = scmp.eq.s32.totalorder %s24, 1
    %p67 = por %p65, %p66
    %p68 = scmp.ne.s32.totalorder %s60, %s63
    %p69 = scmp.eq.s32.totalorder %s24, 0
    %p70 = por %p68, %p69
    %p71 = scmp.ne.s32.totalorder %s60, %s63
    %p72 = scmp.eq.s32.totalorder %s29, 1
    %p73 = por %p71, %p72
    %p74 = scmp.ne.s32.totalorder %s63, %s64
    %p75 = scmp.eq.s32.totalorder %s29, 0
    %p76 = por %p74, %p75
    %p77 = scmp.ne.s32.totalorder %s63, %s64
    %p78 = scmp.eq.s32.totalorder %s30, 1
    %p79 = por %p77, %p78
    %p81 = scmp.ne.s32.totalorder %s64, %s80
    %p82 = scmp.eq.s32.totalorder %s30, 0
    %p83 = por %p81, %p82
    %s84 = ssub.s32 %s24, %s31
    %p85 = scmp.eq.s32.totalorder %s84, 0
    %s87 = sadd.s32 %s86, 1
    %s88 = scalar_select %p85, %s86, %s87
    %p91 = pneg %p85
    %p92 = scmp.eq.s32.totalorder %s24, 1
    %p93 = por %p91, %p92
    %p94 = scmp.ne.s32.totalorder %s86, %s89
    %p95 = scmp.eq.s32.totalorder %s24, 0
    %p96 = por %p94, %p95
    %p97 = scmp.ne.s32.totalorder %s86, %s89
    %p98 = scmp.eq.s32.totalorder %s29, 1
    %p99 = por %p97, %p98
    %p100 = scmp.ne.s32.totalorder %s89, %s90
    %p101 = scmp.eq.s32.totalorder %s29, 0
    %p102 = por %p100, %p101
    %p103 = scmp.ne.s32.totalorder %s89, %s90
    %p104 = scmp.eq.s32.totalorder %s30, 1
    %p105 = por %p103, %p104
    %p107 = scmp.ne.s32.totalorder %s90, %s106
    %p108 = scmp.eq.s32.totalorder %s30, 0
    %p109 = por %p107, %p108
    %s111 = sadd.s32 %s110, 1
    %p114 = scmp.eq.s32.totalorder %s24, 1
    %p115 = scmp.ne.s32.totalorder %s110, %s112
    %p116 = scmp.eq.s32.totalorder %s24, 0
    %p117 = por %p115, %p116
    %p118 = scmp.ne.s32.totalorder %s110, %s112
    %p119 = scmp.eq.s32.totalorder %s29, 1
    %p120 = por %p118, %p119
    %p121 = scmp.ne.s32.totalorder %s112, %s113
    %p122 = scmp.eq.s32.totalorder %s29, 0
    %p123 = por %p121, %p122
    %p124 = scmp.ne.s32.totalorder %s112, %s113
    %p125 = scmp.eq.s32.totalorder %s30, 1
    %p126 = por %p124, %p125
    %p128 = scmp.ne.s32.totalorder %s113, %s127
    %p129 = scmp.eq.s32.totalorder %s30, 0
    %p130 = por %p128, %p129
    %s132 = sadd.s32 %s131, 1
    %p135 = scmp.eq.s32.totalorder %s24, 1
    %p136 = scmp.ne.s32.totalorder %s131, %s133
    %p137 = scmp.eq.s32.totalorder %s24, 0
    %p138 = por %p136, %p137
    %p139 = scmp.ne.s32.totalorder %s131, %s133
    %p140 = scmp.eq.s32.totalorder %s29, 1
    %p141 = por %p139, %p140
    %p142 = scmp.ne.s32.totalorder %s133, %s134
    %p143 = scmp.eq.s32.totalorder %s29, 0
    %p144 = por %p142, %p143
    %p145 = scmp.ne.s32.totalorder %s133, %s134
    %p146 = scmp.eq.s32.totalorder %s30, 1
    %p147 = por %p145, %p146
    %p149 = scmp.ne.s32.totalorder %s134, %s148
    %p150 = scmp.eq.s32.totalorder %s30, 0
    %p151 = por %p149, %p150
    %s153 = sadd.s32 %s152, 1
    %p156 = scmp.eq.s32.totalorder %s24, 1
    %p157 = scmp.ne.s32.totalorder %s152, %s154
    %p158 = scmp.eq.s32.totalorder %s24, 0
    %p159 = por %p157, %p158
    %p160 = scmp.ne.s32.totalorder %s152, %s154
    %p161 = scmp.eq.s32.totalorder %s29, 1
    %p162 = por %p160, %p161
    %p163 = scmp.ne.s32.totalorder %s154, %s155
    %p164 = scmp.eq.s32.totalorder %s29, 0
    %p165 = por %p163, %p164
    %p166 = scmp.ne.s32.totalorder %s154, %s155
    %p167 = scmp.eq.s32.totalorder %s30, 1
    %p168 = por %p166, %p167
    %p170 = scmp.ne.s32.totalorder %s155, %s169
    %p171 = scmp.eq.s32.totalorder %s30, 0
    %p172 = por %p170, %p171
    %s174 = sadd.s32 %s173, 1
    %p177 = scmp.eq.s32.totalorder %s24, 1
    %p178 = scmp.ne.s32.totalorder %s173, %s175
    %p179 = scmp.eq.s32.totalorder %s24, 0
    %p180 = por %p178, %p179
    %p181 = scmp.ne.s32.totalorder %s173, %s175
    %p182 = scmp.eq.s32.totalorder %s29, 1
    %p183 = por %p181, %p182
    %p184 = scmp.ne.s32.totalorder %s175, %s176
    %p185 = scmp.eq.s32.totalorder %s29, 0
    %p186 = por %p184, %p185
    %p187 = scmp.ne.s32.totalorder %s175, %s176
    %p188 = scmp.eq.s32.totalorder %s30, 1
    %p189 = por %p187, %p188
    %p191 = scmp.ne.s32.totalorder %s176, %s190
    %p192 = scmp.eq.s32.totalorder %s30, 0
    %p193 = por %p191, %p192
    %s195 = sadd.s32 %s194, 1
    %p198 = scmp.eq.s32.totalorder %s24, 1
    %p199 = scmp.ne.s32.totalorder %s194, %s196
    %p200 = scmp.eq.s32.totalorder %s24, 0
    %p201 = por %p199, %p200
    %p202 = scmp.ne.s32.totalorder %s194, %s196
    %p203 = scmp.eq.s32.totalorder %s29, 1
    %p204 = por %p202, %p203
    %p205 = scmp.ne.s32.totalorder %s196, %s197
    %p206 = scmp.eq.s32.totalorder %s29, 0
    %p207 = por %p205, %p206
    %p208 = scmp.ne.s32.totalorder %s196, %s197
    %p209 = scmp.eq.s32.totalorder %s30, 1
    %p210 = por %p208, %p209
    %p212 = scmp.ne.s32.totalorder %s197, %s211
    %p213 = scmp.eq.s32.totalorder %s30, 0
    %p214 = por %p212, %p213
    %s216 = sadd.s32 %s215, 1
    %p219 = scmp.eq.s32.totalorder %s24, 1
    %p220 = scmp.ne.s32.totalorder %s215, %s217
    %p221 = scmp.eq.s32.totalorder %s24, 0
    %p222 = por %p220, %p221
    %p223 = scmp.ne.s32.totalorder %s215, %s217
    %p224 = scmp.eq.s32.totalorder %s29, 1
    %p225 = por %p223, %p224
    %p226 = scmp.ne.s32.totalorder %s217, %s218
    %p227 = scmp.eq.s32.totalorder %s29, 0
    %p228 = por %p226, %p227
    %p229 = scmp.ne.s32.totalorder %s217, %s218
    %p230 = scmp.eq.s32.totalorder %s30, 1
    %p231 = por %p229, %p230
    %p233 = scmp.ne.s32.totalorder %s218, %s232
    %p234 = scmp.eq.s32.totalorder %s30, 0
    %p235 = por %p233, %p234
    %s237 = sadd.s32 %s236, 1
    %p240 = scmp.eq.s32.totalorder %s24, 1
    %p241 = scmp.ne.s32.totalorder %s236, %s238
    %p242 = scmp.eq.s32.totalorder %s24, 0
    %p243 = por %p241, %p242
    %p244 = scmp.ne.s32.totalorder %s236, %s238
    %p245 = scmp.eq.s32.totalorder %s29, 1
    %p246 = por %p244, %p245
    %p247 = scmp.ne.s32.totalorder %s238, %s239
    %p248 = scmp.eq.s32.totalorder %s29, 0
    %p249 = por %p247, %p248
    %p250 = scmp.ne.s32.totalorder %s238, %s239
    %p251 = scmp.eq.s32.totalorder %s30, 1
    %p252 = por %p250, %p251
    %p254 = scmp.ne.s32.totalorder %s239, %s253
    %p255 = scmp.eq.s32.totalorder %s30, 0
    %p256 = por %p254, %p255
    %s258 = sadd.s32 %s257, 1
    %p261 = scmp.eq.s32.totalorder %s24, 1
    %p262 = scmp.ne.s32.totalorder %s257, %s259
    %p263 = scmp.eq.s32.totalorder %s24, 0
    %p264 = por %p262, %p263
    %p265 = scmp.ne.s32.totalorder %s257, %s259
    %p266 = scmp.eq.s32.totalorder %s29, 1
    %p267 = por %p265, %p266
    %p268 = scmp.ne.s32.totalorder %s259, %s260
    %p269 = scmp.eq.s32.totalorder %s29, 0
    %p270 = por %p268, %p269
    %p271 = scmp.ne.s32.totalorder %s259, %s260
    %p272 = scmp.eq.s32.totalorder %s30, 1
    %p273 = por %p271, %p272
    %p275 = scmp.ne.s32.totalorder %s260, %s274
    %p276 = scmp.eq.s32.totalorder %s30, 0
    %p277 = por %p275, %p276
    %s279 = sadd.s32 %s278, 1
    %p282 = scmp.eq.s32.totalorder %s24, 1
    %p283 = scmp.ne.s32.totalorder %s278, %s280
    %p284 = scmp.eq.s32.totalorder %s24, 0
    %p285 = por %p283, %p284
    %p286 = scmp.ne.s32.totalorder %s278, %s280
    %p287 = scmp.eq.s32.totalorder %s29, 1
    %p288 = por %p286, %p287
    %p289 = scmp.ne.s32.totalorder %s280, %s281
    %p290 = scmp.eq.s32.totalorder %s29, 0
    %p291 = por %p289, %p290
    %p292 = scmp.ne.s32.totalorder %s280, %s281
    %p293 = scmp.eq.s32.totalorder %s30, 1
    %p294 = por %p292, %p293
    %p296 = scmp.ne.s32.totalorder %s281, %s295
    %p297 = scmp.eq.s32.totalorder %s30, 0
    %p298 = por %p296, %p297
    %s300 = sadd.s32 %s299, 1
    %p303 = scmp.eq.s32.totalorder %s24, 1
    %p304 = scmp.ne.s32.totalorder %s299, %s301
    %p305 = scmp.eq.s32.totalorder %s24, 0
    %p306 = por %p304, %p305
    %p307 = scmp.ne.s32.totalorder %s299, %s301
    %p308 = scmp.eq.s32.totalorder %s29, 1
    %p309 = por %p307, %p308
    %p310 = scmp.ne.s32.totalorder %s301, %s302
    %p311 = scmp.eq.s32.totalorder %s29, 0
    %p312 = por %p310, %p311
    %p313 = scmp.ne.s32.totalorder %s301, %s302
    %p314 = scmp.eq.s32.totalorder %s30, 1
    %p315 = por %p313, %p314
    %p317 = scmp.ne.s32.totalorder %s302, %s316
    %p318 = scmp.eq.s32.totalorder %s30, 0
    %p319 = por %p317, %p318
    %s321 = sadd.s32 %s320, 1
    %p324 = scmp.eq.s32.totalorder %s24, 1
    %p325 = scmp.ne.s32.totalorder %s320, %s322
    %p326 = scmp.eq.s32.totalorder %s24, 0
    %p327 = por %p325, %p326
    %p328 = scmp.ne.s32.totalorder %s320, %s322
    %p329 = scmp.eq.s32.totalorder %s29, 1
    %p330 = por %p328, %p329
    %p331 = scmp.ne.s32.totalorder %s322, %s323
    %p332 = scmp.eq.s32.totalorder %s29, 0
    %p333 = por %p331, %p332
    %p334 = scmp.ne.s32.totalorder %s322, %s323
    %p335 = scmp.eq.s32.totalorder %s30, 1
    %p336 = por %p334, %p335
    %p338 = scmp.ne.s32.totalorder %s323, %s337
    %p339 = scmp.eq.s32.totalorder %s30, 0
    %p340 = por %p338, %p339
    %s342 = sadd.s32 %s341, 1
    %p345 = scmp.eq.s32.totalorder %s24, 1
    %p346 = scmp.ne.s32.totalorder %s341, %s343
    %p347 = scmp.eq.s32.totalorder %s24, 0
    %p348 = por %p346, %p347
    %p349 = scmp.ne.s32.totalorder %s341, %s343
    %p350 = scmp.eq.s32.totalorder %s29, 1
    %p351 = por %p349, %p350
    %p352 = scmp.ne.s32.totalorder %s343, %s344
    %p353 = scmp.eq.s32.totalorder %s29, 0
    %p354 = por %p352, %p353
    %p355 = scmp.ne.s32.totalorder %s343, %s344
    %p356 = scmp.eq.s32.totalorder %s30, 1
    %p357 = por %p355, %p356
    %p359 = scmp.ne.s32.totalorder %s344, %s358
    %p360 = scmp.eq.s32.totalorder %s30, 0
    %p361 = por %p359, %p360
    %s363 = sadd.s32 %s362, 1
    %p366 = scmp.eq.s32.totalorder %s24, 1
    %p367 = scmp.ne.s32.totalorder %s362, %s364
    %p368 = scmp.eq.s32.totalorder %s24, 0
    %p369 = por %p367, %p368
    %p370 = scmp.ne.s32.totalorder %s362, %s364
    %p371 = scmp.eq.s32.totalorder %s29, 1
    %p372 = por %p370, %p371
    %p373 = scmp.ne.s32.totalorder %s364, %s365
    %p374 = scmp.eq.s32.totalorder %s29, 0
    %p375 = por %p373, %p374
    %p376 = scmp.ne.s32.totalorder %s364, %s365
    %p377 = scmp.eq.s32.totalorder %s30, 1
    %p378 = por %p376, %p377
    %p380 = scmp.ne.s32.totalorder %s365, %s379
    %p381 = scmp.eq.s32.totalorder %s30, 0
    %p382 = por %p380, %p381
    %s383 = ssub.s32 %s24, %s31
    %p384 = scmp.eq.s32.totalorder %s383, 0
    %s386 = sadd.s32 %s385, 1
    %s387 = scalar_select %p384, %s385, %s386
    %p390 = pneg %p384
    %p391 = scmp.eq.s32.totalorder %s24, 1
    %p392 = por %p390, %p391
    %p393 = scmp.ne.s32.totalorder %s385, %s388
    %p394 = scmp.eq.s32.totalorder %s24, 0
    %p395 = por %p393, %p394
    %p396 = scmp.ne.s32.totalorder %s385, %s388
    %p397 = scmp.eq.s32.totalorder %s29, 1
    %p398 = por %p396, %p397
    %p399 = scmp.ne.s32.totalorder %s388, %s389
    %p400 = scmp.eq.s32.totalorder %s29, 0
    %p401 = por %p399, %p400
    %p402 = scmp.ne.s32.totalorder %s388, %s389
    %p403 = scmp.eq.s32.totalorder %s30, 1
    %p404 = por %p402, %p403
    %p406 = scmp.ne.s32.totalorder %s389, %s405
    %p407 = scmp.eq.s32.totalorder %s30, 0
    %p408 = por %p406, %p407
    %p409 = scmp.le.s32.totalorder 1, %s24
    %p410 = scmp.lt.s32.totalorder %s24, 3
    %p411 = pnand %p409, %p410
    %p412 = pneg %p411
    // Predicated region
    $region9: #{multi_domain_fend_forward.1} parent=5 // pred_check
      _
    $region10: #{multi_domain_fend_forward.1} parent=5 // pred_check_branch
      %414 = sbr.rel (%p411) target = $region12
    $region11: #{multi_domain_fend_forward.1} parent=5 // pred_region
      %s415 = ssub.s32 %s24, 1
      // Predicated region
      $region13: #{multi_domain_fend_forward.1} parent=11 // pred_check
        %p416 = pneg %p123
      $region14: #{multi_domain_fend_forward.1} parent=11 // pred_check_branch
        %418 = sbr.rel (%p416) target = $region16
      $region15: #{multi_domain_fend_forward.1} parent=11 // pred_region
        _
      $region16: #{multi_domain_fend_forward.1} parent=11 // pred_fallthru
        _
      // Predicated region
      $region17: #{multi_domain_fend_forward.1} parent=11 // pred_check
        %p419 = pneg %p144
      $region18: #{multi_domain_fend_forward.1} parent=11 // pred_check_branch
        %421 = sbr.rel (%p419) target = $region20
      $region19: #{multi_domain_fend_forward.1} parent=11 // pred_region
        _
      $region20: #{multi_domain_fend_forward.1} parent=11 // pred_fallthru
        _
      // Predicated region
      $region21: #{multi_domain_fend_forward.1} parent=11 // pred_check
        %p422 = pneg %p165
      $region22: #{multi_domain_fend_forward.1} parent=11 // pred_check_branch
        %424 = sbr.rel (%p422) target = $region24
      $region23: #{multi_domain_fend_forward.1} parent=11 // pred_region
        _
      $region24: #{multi_domain_fend_forward.1} parent=11 // pred_fallthru
        _
      // Predicated region
      $region25: #{multi_domain_fend_forward.1} parent=11 // pred_check
        %p425 = pneg %p186
      $region26: #{multi_domain_fend_forward.1} parent=11 // pred_check_branch
        %427 = sbr.rel (%p425) target = $region28
      $region27: #{multi_domain_fend_forward.1} parent=11 // pred_region
        _
      $region28: #{multi_domain_fend_forward.1} parent=11 // pred_fallthru
        _
      // Predicated region
      $region29: #{multi_domain_fend_forward.1} parent=11 // pred_check
        %p428 = pneg %p207
      $region30: #{multi_domain_fend_forward.1} parent=11 // pred_check_branch
        %430 = sbr.rel (%p428) target = $region32
      $region31: #{multi_domain_fend_forward.1} parent=11 // pred_region
        _
      $region32: #{multi_domain_fend_forward.1} parent=11 // pred_fallthru
        _
      // Predicated region
      $region33: #{multi_domain_fend_forward.1} parent=11 // pred_check
        %p431 = pneg %p228
      $region34: #{multi_domain_fend_forward.1} parent=11 // pred_check_branch
        %433 = sbr.rel (%p431) target = $region36
      $region35: #{multi_domain_fend_forward.1} parent=11 // pred_region
        _
      $region36: #{multi_domain_fend_forward.1} parent=11 // pred_fallthru
        _
      // Predicated region
      $region37: #{multi_domain_fend_forward.1} parent=11 // pred_check
        %p434 = pneg %p249
      $region38: #{multi_domain_fend_forward.1} parent=11 // pred_check_branch
        %436 = sbr.rel (%p434) target = $region40
      $region39: #{multi_domain_fend_forward.1} parent=11 // pred_region
        _
      $region40: #{multi_domain_fend_forward.1} parent=11 // pred_fallthru
        _
      // Predicated region
      $region41: #{multi_domain_fend_forward.1} parent=11 // pred_check
        %p437 = pneg %p270
      $region42: #{multi_domain_fend_forward.1} parent=11 // pred_check_branch
        %439 = sbr.rel (%p437) target = $region44
      $region43: #{multi_domain_fend_forward.1} parent=11 // pred_region
        _
      $region44: #{multi_domain_fend_forward.1} parent=11 // pred_fallthru
        _
      // Predicated region
      $region45: #{multi_domain_fend_forward.1} parent=11 // pred_check
        %p440 = pneg %p291
      $region46: #{multi_domain_fend_forward.1} parent=11 // pred_check_branch
        %442 = sbr.rel (%p440) target = $region48
      $region47: #{multi_domain_fend_forward.1} parent=11 // pred_region
        _
      $region48: #{multi_domain_fend_forward.1} parent=11 // pred_fallthru
        _
      // Predicated region
      $region49: #{multi_domain_fend_forward.1} parent=11 // pred_check
        %p443 = pneg %p312
      $region50: #{multi_domain_fend_forward.1} parent=11 // pred_check_branch
        %445 = sbr.rel (%p443) target = $region52
      $region51: #{multi_domain_fend_forward.1} parent=11 // pred_region
        _
      $region52: #{multi_domain_fend_forward.1} parent=11 // pred_fallthru
        _
      // Predicated region
      $region53: #{multi_domain_fend_forward.1} parent=11 // pred_check
        %p446 = pneg %p333
      $region54: #{multi_domain_fend_forward.1} parent=11 // pred_check_branch
        %448 = sbr.rel (%p446) target = $region56
      $region55: #{multi_domain_fend_forward.1} parent=11 // pred_region
        _
      $region56: #{multi_domain_fend_forward.1} parent=11 // pred_fallthru
        _
      // Predicated region
      $region57: #{multi_domain_fend_forward.1} parent=11 // pred_check
        %p449 = pneg %p354
      $region58: #{multi_domain_fend_forward.1} parent=11 // pred_check_branch
        %451 = sbr.rel (%p449) target = $region60
      $region59: #{multi_domain_fend_forward.1} parent=11 // pred_region
        _
      $region60: #{multi_domain_fend_forward.1} parent=11 // pred_fallthru
        _
      // Predicated region
      $region61: #{multi_domain_fend_forward.1} parent=11 // pred_check
        %p452 = pneg %p375
      $region62: #{multi_domain_fend_forward.1} parent=11 // pred_check_branch
        %454 = sbr.rel (%p452) target = $region64
      $region63: #{multi_domain_fend_forward.1} parent=11 // pred_region
        _
      $region64: #{multi_domain_fend_forward.1} parent=11 // pred_fallthru
        _
    $region12: #{multi_domain_fend_forward.1} parent=5 // pred_fallthru
      _
    %p455 = scmp.lt.s32.totalorder %s24, 2
    // Predicated region
    $region65: #{multi_domain_fend_forward.1} parent=5 // pred_check
      %p456 = pneg %p455
    $region66: #{multi_domain_fend_forward.1} parent=5 // pred_check_branch
      %458 = sbr.rel (%p456) target = $region68
    $region67: #{multi_domain_fend_forward.1} parent=5 // pred_region
      // Predicated region
      $region69: #{multi_domain_fend_forward.1} parent=67 // pred_check
        %p459 = pneg %p44
      $region70: #{multi_domain_fend_forward.1} parent=67 // pred_check_branch
        %461 = sbr.rel (%p459) target = $region72
      $region71: #{multi_domain_fend_forward.1} parent=67 // pred_region
        %s462 = smul.u32 8, %s24
        %p463 = scmp.lt.s32.totalorder %s462, 15
        %s464 = scalar_select %p463, %s462, 15
        %s465 = smul.addr %s464, 4
        %s466 = smul.addr %s465, 8
        %s467 = scalar_lea.vmem %s0, %s466
        %s468 = smul.u32 8, %s24
      $region72: #{multi_domain_fend_forward.1} parent=67 // pred_fallthru
        _
      // Predicated region
      $region73: #{multi_domain_fend_forward.1} parent=67 // pred_check
        %p469 = pneg %p70
      $region74: #{multi_domain_fend_forward.1} parent=67 // pred_check_branch
        %471 = sbr.rel (%p469) target = $region76
      $region75: #{multi_domain_fend_forward.1} parent=67 // pred_region
        %p472 = scmp.lt.s32.totalorder %s24, 1
        %s473 = scalar_select %p472, %s24, 1
        %s474 = smul.addr %s473, 8
        %s475 = scalar_lea.vmem %s1, %s474
      $region76: #{multi_domain_fend_forward.1} parent=67 // pred_fallthru
        _
      // Predicated region
      $region77: #{multi_domain_fend_forward.1} parent=67 // pred_check
        %p476 = pneg %p96
      $region78: #{multi_domain_fend_forward.1} parent=67 // pred_check_branch
        %478 = sbr.rel (%p476) target = $region80
      $region79: #{multi_domain_fend_forward.1} parent=67 // pred_region
        %p479 = scmp.lt.s32.totalorder %s24, 1
        %s480 = scalar_select %p479, %s24, 1
        %s481 = smul.addr %s480, 8
        %s482 = scalar_lea.vmem %s2, %s481
      $region80: #{multi_domain_fend_forward.1} parent=67 // pred_fallthru
        _
    $region68: #{multi_domain_fend_forward.1} parent=5 // pred_fallthru
      _
    %p483 = scmp.le.s32.totalorder 1, %s24
    %p484 = scmp.lt.s32.totalorder %s24, 3
    %p485 = pnand %p483, %p484
    %p486 = pneg %p485
    // Predicated region
    $region81: #{multi_domain_fend_forward.1} parent=5 // pred_check
      _
    $region82: #{multi_domain_fend_forward.1} parent=5 // pred_check_branch
      %488 = sbr.rel (%p485) target = $region84
    $region83: #{multi_domain_fend_forward.1} parent=5 // pred_region
      %s489 = ssub.s32 %s24, 1
      %s490 = smul.u32 8, %s29
      %p491 = scmp.lt.s32.totalorder %s490, 15
      %s492 = scalar_select %p491, %s490, 15
      %s493 = smul.addr %s492, 4
      %s494 = smul.addr %s493, 8
      %s495 = scalar_lea.vmem %s0, %s494
      %p496 = pneg %p50
      %p497 = pneg %p47
      %p498 = scmp.lt.s32.totalorder %s29, 1
      %s499 = scalar_select %p498, %s29, 1
      %s500 = smul.addr %s499, 8
      %s501 = scalar_lea.vmem %s1, %s500
      %p502 = pneg %p76
      %p503 = pneg %p73
      %p504 = scmp.lt.s32.totalorder %s29, 1
      %s505 = scalar_select %p504, %s29, 1
      %s506 = smul.addr %s505, 8
      %s507 = scalar_lea.vmem %s2, %s506
      %p508 = pneg %p102
      %p509 = pneg %p99
      %p510 = pneg %p123
      %p511 = pneg %p120
      %p512 = pneg %p144
      %p513 = pneg %p141
      %p514 = pneg %p165
      %p515 = pneg %p162
      %p516 = pneg %p186
      %p517 = pneg %p183
      %p518 = pneg %p207
      %p519 = pneg %p204
      %p520 = pneg %p228
      %p521 = pneg %p225
      %p522 = pneg %p249
      %p523 = pneg %p246
      %p524 = pneg %p270
      %p525 = pneg %p267
      %p526 = pneg %p291
      %p527 = pneg %p288
      %p528 = pneg %p312
      %p529 = pneg %p309
      %p530 = pneg %p333
      %p531 = pneg %p330
      %p532 = pneg %p354
      %p533 = pneg %p351
      %p534 = pneg %p375
      %p535 = pneg %p372
      %p536 = pneg %p401
      %p537 = pneg %p398
      %p538 = scmp.lt.s32.totalorder %s29, 1
      %s539 = scalar_select %p538, %s29, 1
      %s540 = smul.addr %s539, 3
      %s541 = smul.addr %s540, 8
      %s542 = scalar_lea.vmem %s16, %s541
      %s543 = smul.u32 8, %s29
      %p544 = scmp.lt.s32.totalorder %s543, 15
      %s545 = scalar_select %p544, %s543, 15
      %s546 = smul.addr %s545, 4
      %s547 = smul.addr %s546, 8
      %s548 = scalar_lea.vmem %s0, %s547
      %s549 = smul.u32 8, %s29
      %p550 = scmp.lt.s32.totalorder %s29, 1
      %s551 = scalar_select %p550, %s29, 1
      %s552 = smul.addr %s551, 8
      %s553 = scalar_lea.vmem %s1, %s552
      %p554 = scmp.lt.s32.totalorder %s29, 1
      %s555 = scalar_select %p554, %s29, 1
      %s556 = smul.addr %s555, 8
      %s557 = scalar_lea.vmem %s2, %s556
      %p558 = scmp.lt.s32.totalorder %s29, 1
      %s559 = scalar_select %p558, %s29, 1
      %s560 = smul.addr %s559, 3
      %s561 = smul.addr %s560, 8
      %s562 = scalar_lea.vmem %s16, %s561
      %v564 = vld [vmem:[%s548] sm:$0xff]
      %v565 = vld [vmem:[%s548 + $0x8] sm:$0xff]
      %v566 = vld [vmem:[%s548 + $0x10] sm:$0xff]
      %v567 = vld [vmem:[%s548 + $0x18] sm:$0xff]
      %v568 = vld [vmem:[%s548 + $0x20] sm:$0xff]
      %v569 = vld [vmem:[%s548 + $0x28] sm:$0xff]
      %v570 = vld [vmem:[%s548 + $0x30] sm:$0xff]
      %v571 = vld [vmem:[%s548 + $0x38] sm:$0xff]
      %v572 = vld [vmem:[%s548 + $0x40] sm:$0xff]
      %v573 = vld [vmem:[%s548 + $0x48] sm:$0xff]
      %v574 = vld [vmem:[%s548 + $0x50] sm:$0xff]
      %v575 = vld [vmem:[%s548 + $0x58] sm:$0xff]
      %v576 = vld [vmem:[%s548 + $0x60] sm:$0xff]
      %v577 = vld [vmem:[%s548 + $0x68] sm:$0xff]
      %v578 = vld [vmem:[%s548 + $0x70] sm:$0xff]
      %v579 = vld [vmem:[%s548 + $0x78] sm:$0xff]
      %v580 = vld [vmem:[%s548 + $0x80] sm:$0xff]
      %v581 = vld [vmem:[%s548 + $0x88] sm:$0xff]
      %v582 = vld [vmem:[%s548 + $0x90] sm:$0xff]
      %v583 = vld [vmem:[%s548 + $0x98] sm:$0xff]
      %v584 = vld [vmem:[%s548 + $0xa0] sm:$0xff]
      %v585 = vld [vmem:[%s548 + $0xa8] sm:$0xff]
      %v586 = vld [vmem:[%s548 + $0xb0] sm:$0xff]
      %v587 = vld [vmem:[%s548 + $0xb8] sm:$0xff]
      %v588 = vld [vmem:[%s548 + $0xc0] sm:$0xff]
      %v589 = vld [vmem:[%s548 + $0xc8] sm:$0xff]
      %v590 = vld [vmem:[%s548 + $0xd0] sm:$0xff]
      %v591 = vld [vmem:[%s548 + $0xd8] sm:$0xff]
      %v592 = vld [vmem:[%s548 + $0xe0] sm:$0xff]
      %v593 = vld [vmem:[%s548 + $0xe8] sm:$0xff]
      %v594 = vld [vmem:[%s548 + $0xf0] sm:$0xff]
      %v595 = vld [vmem:[%s548 + $0xf8] sm:$0xff]
      %v596 = vld [vmem:[%s3] sm:$0x1]
      %v598 = vlaneseq
      %v599 = vshrl.u32 %v598, 7
      %v600 = vsub.s32 0, %v599
      %v601 = vrot.slane %v596, %v600
      %v603 = vmul.f32 %v564, %v601
      %v604 = vmul.f32 %v565, %v601
      %v605 = vmul.f32 %v568, %v601
      %v606 = vmul.f32 %v569, %v601
      %v607 = vmul.f32 %v572, %v601
      %v608 = vmul.f32 %v573, %v601
      %v609 = vmul.f32 %v576, %v601
      %v610 = vmul.f32 %v577, %v601
      %v611 = vmul.f32 %v580, %v601
      %v612 = vmul.f32 %v581, %v601
      %v613 = vmul.f32 %v584, %v601
      %v614 = vmul.f32 %v585, %v601
      %v615 = vmul.f32 %v588, %v601
      %v616 = vmul.f32 %v589, %v601
      %v617 = vmul.f32 %v592, %v601
      %v618 = vmul.f32 %v593, %v601
      %vm619 = vcmask 261120
      %v620 = vsel %vm619, %v603, 0.0
      %621 = vadd.xlane.f32.xlu0 %v620
      %v622 = vpop.xlane.xlu0 %621
      %v623 = vsel %vm619, %v604, 0.0
      %624 = vadd.xlane.f32.xlu0 %v623
      %v625 = vpop.xlane.xlu0 %624
      %v626 = vsel %vm619, %v605, 0.0
      %627 = vadd.xlane.f32.xlu0 %v626
      %v628 = vpop.xlane.xlu0 %627
      %v629 = vsel %vm619, %v606, 0.0
      %630 = vadd.xlane.f32.xlu0 %v629
      %v631 = vpop.xlane.xlu0 %630
      %v632 = vsel %vm619, %v607, 0.0
      %633 = vadd.xlane.f32.xlu0 %v632
      %v634 = vpop.xlane.xlu0 %633
      %v635 = vsel %vm619, %v608, 0.0
      %636 = vadd.xlane.f32.xlu0 %v635
      %v637 = vpop.xlane.xlu0 %636
      %v638 = vsel %vm619, %v609, 0.0
      %639 = vadd.xlane.f32.xlu0 %v638
      %v640 = vpop.xlane.xlu0 %639
      %v641 = vsel %vm619, %v610, 0.0
      %642 = vadd.xlane.f32.xlu0 %v641
      %v643 = vpop.xlane.xlu0 %642
      %v644 = vsel %vm619, %v611, 0.0
      %645 = vadd.xlane.f32.xlu0 %v644
      %v646 = vpop.xlane.xlu0 %645
      %v647 = vsel %vm619, %v612, 0.0
      %648 = vadd.xlane.f32.xlu0 %v647
      %v649 = vpop.xlane.xlu0 %648
      %v650 = vsel %vm619, %v613, 0.0
      %651 = vadd.xlane.f32.xlu0 %v650
      %v652 = vpop.xlane.xlu0 %651
      %v653 = vsel %vm619, %v614, 0.0
      %654 = vadd.xlane.f32.xlu0 %v653
      %v655 = vpop.xlane.xlu0 %654
      %v656 = vsel %vm619, %v615, 0.0
      %657 = vadd.xlane.f32.xlu0 %v656
      %v658 = vpop.xlane.xlu0 %657
      %v659 = vsel %vm619, %v616, 0.0
      %660 = vadd.xlane.f32.xlu0 %v659
      %v661 = vpop.xlane.xlu0 %660
      %v662 = vsel %vm619, %v617, 0.0
      %663 = vadd.xlane.f32.xlu0 %v662
      %v664 = vpop.xlane.xlu0 %663
      %v665 = vsel %vm619, %v618, 0.0
      %666 = vadd.xlane.f32.xlu0 %v665
      %v667 = vpop.xlane.xlu0 %666
      %v668 = vld [vmem:[#allocation2] sm:$0x1]
      %v670 = vlaneseq
      %v671 = vshrl.u32 %v670, 7
      %v672 = vsub.s32 0, %v671
      %v673 = vrot.slane %v668, %v672
      %674 = vset.pattern.permute.xlu0 0
      %675 = vperm.xlu0 %674, %v673
      %v676 = vpop.permute.xlu0 %675
      %v678 = vadd.f32 %v622, %v676
      %v679 = vadd.f32 %v625, %v676
      %v680 = vadd.f32 %v628, %v676
      %v681 = vadd.f32 %v631, %v676
      %v682 = vadd.f32 %v634, %v676
      %v683 = vadd.f32 %v637, %v676
      %v684 = vadd.f32 %v640, %v676
      %v685 = vadd.f32 %v643, %v676
      %v686 = vadd.f32 %v646, %v676
      %v687 = vadd.f32 %v649, %v676
      %v688 = vadd.f32 %v652, %v676
      %v689 = vadd.f32 %v655, %v676
      %v690 = vadd.f32 %v658, %v676
      %v691 = vadd.f32 %v661, %v676
      %v692 = vadd.f32 %v664, %v676
      %v693 = vadd.f32 %v667, %v676
      %v694 = vld [vmem:[%s553] sm:$0xff]
      %vm695 = vcmp.eq.f32.partialorder %v694, 0.0
      %v712 = vlaneseq
      %v713 = vand.u32 %v712, 127
      %v714 = vlaneseq
      %v715 = vshrl.u32 %v714, 7
      %v716 = vsub.s32 %v713, %v715
      %v717 = vrot.slane %v678, %v716
      %v718 = vadd.s32 %v713, 4294967288
      %v719 = vlaneseq
      %v720 = vshrl.u32 %v719, 7
      %v721 = vsub.s32 %v718, %v720
      %v722 = vrot.slane %v679, %v721
      %vm723 = vcmask 130112
      %v724 = vsel %vm723, %v722, %v717
      %v725 = vlaneseq
      %v726 = vshrl.u32 %v725, 7
      %v727 = vsub.s32 %v713, %v726
      %v728 = vrot.slane %v680, %v727
      %v729 = vlaneseq
      %v730 = vshrl.u32 %v729, 7
      %v731 = vsub.s32 %v718, %v730
      %v732 = vrot.slane %v681, %v731
      %v733 = vsel %vm723, %v732, %v728
      %v734 = vlaneseq
      %v735 = vshrl.u32 %v734, 7
      %v736 = vsub.s32 %v713, %v735
      %v737 = vrot.slane %v682, %v736
      %v738 = vlaneseq
      %v739 = vshrl.u32 %v738, 7
      %v740 = vsub.s32 %v718, %v739
      %v741 = vrot.slane %v683, %v740
      %v742 = vsel %vm723, %v741, %v737
      %v743 = vlaneseq
      %v744 = vshrl.u32 %v743, 7
      %v745 = vsub.s32 %v713, %v744
      %v746 = vrot.slane %v684, %v745
      %v747 = vlaneseq
      %v748 = vshrl.u32 %v747, 7
      %v749 = vsub.s32 %v718, %v748
      %v750 = vrot.slane %v685, %v749
      %v751 = vsel %vm723, %v750, %v746
      %v752 = vlaneseq
      %v753 = vshrl.u32 %v752, 7
      %v754 = vsub.s32 %v713, %v753
      %v755 = vrot.slane %v686, %v754
      %v756 = vlaneseq
      %v757 = vshrl.u32 %v756, 7
      %v758 = vsub.s32 %v718, %v757
      %v759 = vrot.slane %v687, %v758
      %v760 = vsel %vm723, %v759, %v755
      %v761 = vlaneseq
      %v762 = vshrl.u32 %v761, 7
      %v763 = vsub.s32 %v713, %v762
      %v764 = vrot.slane %v688, %v763
      %v765 = vlaneseq
      %v766 = vshrl.u32 %v765, 7
      %v767 = vsub.s32 %v718, %v766
      %v768 = vrot.slane %v689, %v767
      %v769 = vsel %vm723, %v768, %v764
      %v770 = vlaneseq
      %v771 = vshrl.u32 %v770, 7
      %v772 = vsub.s32 %v713, %v771
      %v773 = vrot.slane %v690, %v772
      %v774 = vlaneseq
      %v775 = vshrl.u32 %v774, 7
      %v776 = vsub.s32 %v718, %v775
      %v777 = vrot.slane %v691, %v776
      %v778 = vsel %vm723, %v777, %v773
      %v779 = vlaneseq
      %v780 = vshrl.u32 %v779, 7
      %v781 = vsub.s32 %v713, %v780
      %v782 = vrot.slane %v692, %v781
      %v783 = vlaneseq
      %v784 = vshrl.u32 %v783, 7
      %v785 = vsub.s32 %v718, %v784
      %v786 = vrot.slane %v693, %v785
      %v787 = vsel %vm723, %v786, %v782
      %vm788 = vcmask 1041409
      %v789 = vsel %vm788, %v733, %v724
      %vm790 = vcmask 1042434
      %v791 = vsel %vm790, %v742, %v789
      %vm792 = vcmask 1043459
      %v793 = vsel %vm792, %v751, %v791
      %vm794 = vcmask 1044484
      %v795 = vsel %vm794, %v760, %v793
      %vm796 = vcmask 1045509
      %v797 = vsel %vm796, %v769, %v795
      %vm798 = vcmask 1046534
      %v799 = vsel %vm798, %v778, %v797
      %vm800 = vcmask 1047559
      %v801 = vsel %vm800, %v787, %v799
      %v803 = vsel %vm695, -inf, %v801
      %vm804 = vcmask 130048
      %v805 = vsel %vm804, %v803, -inf
      %806 = vmax.xlane.f32.xlu0 %v805
      %v807 = vpop.xlane.xlu0 %806
      %v808 = vsub.f32 %v803, %v807
      %v809 = vmul.f32 %v808, 1.442695
      %v810 = vpow.pop %v809
      %v811 = vsel %vm804, %v810, 0.0
      %812 = vadd.xlane.f32.xlu0 %v811
      %v813 = vpop.xlane.xlu0 %812
      %v814 = vrcp.pop %v813
      %v815 = vmul.f32 %v810, %v814
      %v816 = vlaneseq
      %v817 = vshrl.u32 %v816, 7
      %v818 = vsub.s32 0, %v817
      %v819 = vrot.slane %v815, %v818
      %821 = vbcast.lane.b32.xlu0 %v819, 256
      %v822 = vpop.permute.xlu0 %821
      %s824 = sor.u32 256, 8
      %825 = vbcast.lane.b32.xlu0 %v819, %s824
      %v826 = vpop.permute.xlu0 %825
      %v827 = vlaneseq
      %v828 = vshrl.u32 %v827, 7
      %v829 = vsub.s32 1, %v828
      %v830 = vrot.slane %v815, %v829
      %832 = vbcast.lane.b32.xlu0 %v830, 256
      %v833 = vpop.permute.xlu0 %832
      %s835 = sor.u32 256, 8
      %836 = vbcast.lane.b32.xlu0 %v830, %s835
      %v837 = vpop.permute.xlu0 %836
      %v838 = vlaneseq
      %v839 = vshrl.u32 %v838, 7
      %v840 = vsub.s32 2, %v839
      %v841 = vrot.slane %v815, %v840
      %843 = vbcast.lane.b32.xlu0 %v841, 256
      %v844 = vpop.permute.xlu0 %843
      %s846 = sor.u32 256, 8
      %847 = vbcast.lane.b32.xlu0 %v841, %s846
      %v848 = vpop.permute.xlu0 %847
      %v849 = vlaneseq
      %v850 = vshrl.u32 %v849, 7
      %v851 = vsub.s32 3, %v850
      %v852 = vrot.slane %v815, %v851
      %854 = vbcast.lane.b32.xlu0 %v852, 256
      %v855 = vpop.permute.xlu0 %854
      %s857 = sor.u32 256, 8
      %858 = vbcast.lane.b32.xlu0 %v852, %s857
      %v859 = vpop.permute.xlu0 %858
      %v860 = vlaneseq
      %v861 = vshrl.u32 %v860, 7
      %v862 = vsub.s32 4, %v861
      %v863 = vrot.slane %v815, %v862
      %865 = vbcast.lane.b32.xlu0 %v863, 256
      %v866 = vpop.permute.xlu0 %865
      %s868 = sor.u32 256, 8
      %869 = vbcast.lane.b32.xlu0 %v863, %s868
      %v870 = vpop.permute.xlu0 %869
      %v871 = vlaneseq
      %v872 = vshrl.u32 %v871, 7
      %v873 = vsub.s32 5, %v872
      %v874 = vrot.slane %v815, %v873
      %876 = vbcast.lane.b32.xlu0 %v874, 256
      %v877 = vpop.permute.xlu0 %876
      %s879 = sor.u32 256, 8
      %880 = vbcast.lane.b32.xlu0 %v874, %s879
      %v881 = vpop.permute.xlu0 %880
      %v882 = vlaneseq
      %v883 = vshrl.u32 %v882, 7
      %v884 = vsub.s32 6, %v883
      %v885 = vrot.slane %v815, %v884
      %887 = vbcast.lane.b32.xlu0 %v885, 256
      %v888 = vpop.permute.xlu0 %887
      %s890 = sor.u32 256, 8
      %891 = vbcast.lane.b32.xlu0 %v885, %s890
      %v892 = vpop.permute.xlu0 %891
      %v893 = vlaneseq
      %v894 = vshrl.u32 %v893, 7
      %v895 = vsub.s32 7, %v894
      %v896 = vrot.slane %v815, %v895
      %898 = vbcast.lane.b32.xlu0 %v896, 256
      %v899 = vpop.permute.xlu0 %898
      %s901 = sor.u32 256, 8
      %902 = vbcast.lane.b32.xlu0 %v896, %s901
      %v903 = vpop.permute.xlu0 %902
      %v904 = vmul.f32 %v564, %v822
      %v905 = vmul.f32 %v565, %v826
      %v906 = vmul.f32 %v568, %v833
      %v907 = vmul.f32 %v569, %v837
      %v908 = vmul.f32 %v572, %v844
      %v909 = vmul.f32 %v573, %v848
      %v910 = vmul.f32 %v576, %v855
      %v911 = vmul.f32 %v577, %v859
      %v912 = vmul.f32 %v580, %v866
      %v913 = vmul.f32 %v581, %v870
      %v914 = vmul.f32 %v584, %v877
      %v915 = vmul.f32 %v585, %v881
      %v916 = vmul.f32 %v588, %v888
      %v917 = vmul.f32 %v589, %v892
      %v918 = vmul.f32 %v592, %v899
      %v919 = vmul.f32 %v593, %v903
      %v920 = vsel %vm619, %v904, 0.0
      %v921 = vsel %vm619, %v905, 0.0
      %v922 = vadd.f32 %v920, %v921
      %v923 = vrot.slane %v922, 4
      %v924 = vadd.f32 %v922, %v923
      %v925 = vrot.slane %v924, 2
      %v926 = vadd.f32 %v924, %v925
      %v927 = vrot.slane %v926, 1
      %v928 = vadd.f32 %v926, %v927
      %v929 = vsel %vm619, %v906, 0.0
      %v930 = vsel %vm619, %v907, 0.0
      %v931 = vadd.f32 %v929, %v930
      %v932 = vrot.slane %v931, 4
      %v933 = vadd.f32 %v931, %v932
      %v934 = vrot.slane %v933, 2
      %v935 = vadd.f32 %v933, %v934
      %v936 = vrot.slane %v935, 1
      %v937 = vadd.f32 %v935, %v936
      %v938 = vsel %vm619, %v908, 0.0
      %v939 = vsel %vm619, %v909, 0.0
      %v940 = vadd.f32 %v938, %v939
      %v941 = vrot.slane %v940, 4
      %v942 = vadd.f32 %v940, %v941
      %v943 = vrot.slane %v942, 2
      %v944 = vadd.f32 %v942, %v943
      %v945 = vrot.slane %v944, 1
      %v946 = vadd.f32 %v944, %v945
      %v947 = vsel %vm619, %v910, 0.0
      %v948 = vsel %vm619, %v911, 0.0
      %v949 = vadd.f32 %v947, %v948
      %v950 = vrot.slane %v949, 4
      %v951 = vadd.f32 %v949, %v950
      %v952 = vrot.slane %v951, 2
      %v953 = vadd.f32 %v951, %v952
      %v954 = vrot.slane %v953, 1
      %v955 = vadd.f32 %v953, %v954
      %v956 = vsel %vm619, %v912, 0.0
      %v957 = vsel %vm619, %v913, 0.0
      %v958 = vadd.f32 %v956, %v957
      %v959 = vrot.slane %v958, 4
      %v960 = vadd.f32 %v958, %v959
      %v961 = vrot.slane %v960, 2
      %v962 = vadd.f32 %v960, %v961
      %v963 = vrot.slane %v962, 1
      %v964 = vadd.f32 %v962, %v963
      %v965 = vsel %vm619, %v914, 0.0
      %v966 = vsel %vm619, %v915, 0.0
      %v967 = vadd.f32 %v965, %v966
      %v968 = vrot.slane %v967, 4
      %v969 = vadd.f32 %v967, %v968
      %v970 = vrot.slane %v969, 2
      %v971 = vadd.f32 %v969, %v970
      %v972 = vrot.slane %v971, 1
      %v973 = vadd.f32 %v971, %v972
      %v974 = vsel %vm619, %v916, 0.0
      %v975 = vsel %vm619, %v917, 0.0
      %v976 = vadd.f32 %v974, %v975
      %v977 = vrot.slane %v976, 4
      %v978 = vadd.f32 %v976, %v977
      %v979 = vrot.slane %v978, 2
      %v980 = vadd.f32 %v978, %v979
      %v981 = vrot.slane %v980, 1
      %v982 = vadd.f32 %v980, %v981
      %v983 = vsel %vm619, %v918, 0.0
      %v984 = vsel %vm619, %v919, 0.0
      %v985 = vadd.f32 %v983, %v984
      %v986 = vrot.slane %v985, 4
      %v987 = vadd.f32 %v985, %v986
      %v988 = vrot.slane %v987, 2
      %v989 = vadd.f32 %v987, %v988
      %v990 = vrot.slane %v989, 1
      %v991 = vadd.f32 %v989, %v990
      %v992 = vld [vmem:[%s557] sm:$0xff]
      %v993 = vld [vmem:[%s5] sm:$0xff]
      %v994 = vld [vmem:[%s5 + $0x8] sm:$0xff]
      %v995 = vld [vmem:[%s5 + $0x10] sm:$0xff]
      %v996 = vld [vmem:[%s5 + $0x18] sm:$0xff]
      %v997 = vld [vmem:[%s6] sm:$0xff]
      %v998 = vld [vmem:[%s6 + $0x8] sm:$0xff]
      %v999 = vld [vmem:[%s6 + $0x10] sm:$0xff]
      %v1000 = vld [vmem:[%s6 + $0x18] sm:$0xff]
      %v1009 = vsel %vm788, %v937, %v928
      %v1010 = vsel %vm790, %v946, %v1009
      %v1011 = vsel %vm792, %v955, %v1010
      %v1012 = vsel %vm794, %v964, %v1011
      %v1013 = vsel %vm796, %v973, %v1012
      %v1014 = vsel %vm798, %v982, %v1013
      %v1015 = vsel %vm800, %v991, %v1014
      %v1016 = vsel %vm619, %v1015, 0
      %1018 = vmatprep.subr.mxu0 0.0
      %1019 = vmatpush1.msra.mxu0 %v997
      %1020 = vmatprep.subr.mxu0 0.0
      %1021 = vmatpush1.msra.mxu0 %v998
      %1022 = vmatprep.subr.mxu0 0.0
      %1023 = vmatpush1.msra.mxu0 %v999
      %1024 = vmatprep.subr.mxu0 0.0
      %1025 = vmatpush1.msra.mxu0 %v1000
      %1026 = vmatprep.subr.mxu0 0.0
      %1027 = vmatpush1.msra.mxu0 0.0
      %1028 = vmatprep.subr.mxu0 0.0
      %1029 = vmatpush1.msra.mxu0 0.0
      %1030 = vmatprep.subr.mxu0 0.0
      %1031 = vmatpush1.msra.mxu0 0.0
      %1032 = vmatprep.subr.mxu0 0.0
      %1033 = vmatpush1.msra.mxu0 0.0
      %1034 = vmatprep.subr.mxu0 0.0
      %1035 = vmatpush1.msra.mxu0 0.0
      %1036 = vmatprep.subr.mxu0 0.0
      %1037 = vmatpush1.msra.mxu0 0.0
      %1038 = vmatprep.subr.mxu0 0.0
      %1039 = vmatpush1.msra.mxu0 0.0
      %1040 = vmatprep.subr.mxu0 0.0
      %1041 = vmatpush1.msra.mxu0 0.0
      %1042 = vmatprep.subr.mxu0 0.0
      %1043 = vmatpush1.msra.mxu0 0.0
      %1044 = vmatprep.subr.mxu0 0.0
      %1045 = vmatpush1.msra.mxu0 0.0
      %1046 = vmatprep.subr.mxu0 0.0
      %1047 = vmatpush1.msra.mxu0 0.0
      %1048 = vmatprep.subr.mxu0 0.0
      %1049 = vmatpush1.msra.mxu0 0.0
      %1050 = vmatprep.subr.mxu0 0.0
      %1051 = vmatpush1.msra.mxu0 0.0
      %1052 = vmatprep.subr.mxu0 0.0
      %1053 = vmatpush1.msra.mxu0 0.0
      %1054 = vmatprep.subr.mxu0 0.0
      %1055 = vmatpush1.msra.mxu0 0.0
      %1056 = vmatprep.subr.mxu0 0.0
      %1057 = vmatpush1.msra.mxu0 0.0
      %1058 = vmatprep.subr.mxu0 0.0
      %1059 = vmatpush1.msra.mxu0 0.0
      %1060 = vmatprep.subr.mxu0 0.0
      %1061 = vmatpush1.msra.mxu0 0.0
      %1062 = vmatprep.subr.mxu0 0.0
      %1063 = vmatpush1.msra.mxu0 0.0
      %1064 = vmatprep.subr.mxu0 0.0
      %1065 = vmatpush1.msra.mxu0 0.0
      %1066 = vmatprep.subr.mxu0 0.0
      %1067 = vmatpush1.msra.mxu0 0.0
      %1068 = vmatprep.subr.mxu0 0.0
      %1069 = vmatpush1.msra.mxu0 0.0
      %1070 = vmatprep.subr.mxu0 0.0
      %1071 = vmatpush1.msra.mxu0 0.0
      %1072 = vmatprep.subr.mxu0 0.0
      %1073 = vmatpush1.msra.mxu0 0.0
      %1074 = vmatprep.subr.mxu0 0.0
      %1075 = vmatpush1.msra.mxu0 0.0
      %1076 = vmatprep.subr.mxu0 0.0
      %1077 = vmatpush1.msra.mxu0 0.0
      %1078 = vmatprep.subr.mxu0 0.0
      %1079 = vmatpush1.msra.mxu0 0.0
      %1080 = vmatprep.subr.mxu0 0.0
      %1081 = vmatpush1.msra.mxu0 0.0
      %1082 = vmatprep.mubr.f32.mxu0 0.0
      %1083 = vmatmul.mubr.f32.gmra.mrb[0].mxu0 %v1016
      %v1084 = vpop.f32.mrb[0].mxu0
      %v1085 = vadd.f32 0.0, %v1084
      %v1086 = vpop.f32.mrb[0].mxu0
      %1087 = vdwg.mxu0
      %v1089 = vsel %vm619, %v992, 0
      %1091 = vmatprep.subr.mxu0 0.0
      %1092 = vmatpush1.msra.mxu0 %v993
      %1093 = vmatprep.subr.mxu0 0.0
      %1094 = vmatpush1.msra.mxu0 %v994
      %1095 = vmatprep.subr.mxu0 0.0
      %1096 = vmatpush1.msra.mxu0 %v995
      %1097 = vmatprep.subr.mxu0 0.0
      %1098 = vmatpush1.msra.mxu0 %v996
      %1099 = vmatprep.subr.mxu0 0.0
      %1100 = vmatpush1.msra.mxu0 0.0
      %1101 = vmatprep.subr.mxu0 0.0
      %1102 = vmatpush1.msra.mxu0 0.0
      %1103 = vmatprep.subr.mxu0 0.0
      %1104 = vmatpush1.msra.mxu0 0.0
      %1105 = vmatprep.subr.mxu0 0.0
      %1106 = vmatpush1.msra.mxu0 0.0
      %1107 = vmatprep.subr.mxu0 0.0
      %1108 = vmatpush1.msra.mxu0 0.0
      %1109 = vmatprep.subr.mxu0 0.0
      %1110 = vmatpush1.msra.mxu0 0.0
      %1111 = vmatprep.subr.mxu0 0.0
      %1112 = vmatpush1.msra.mxu0 0.0
      %1113 = vmatprep.subr.mxu0 0.0
      %1114 = vmatpush1.msra.mxu0 0.0
      %1115 = vmatprep.subr.mxu0 0.0
      %1116 = vmatpush1.msra.mxu0 0.0
      %1117 = vmatprep.subr.mxu0 0.0
      %1118 = vmatpush1.msra.mxu0 0.0
      %1119 = vmatprep.subr.mxu0 0.0
      %1120 = vmatpush1.msra.mxu0 0.0
      %1121 = vmatprep.subr.mxu0 0.0
      %1122 = vmatpush1.msra.mxu0 0.0
      %1123 = vmatprep.subr.mxu0 0.0
      %1124 = vmatpush1.msra.mxu0 0.0
      %1125 = vmatprep.subr.mxu0 0.0
      %1126 = vmatpush1.msra.mxu0 0.0
      %1127 = vmatprep.subr.mxu0 0.0
      %1128 = vmatpush1.msra.mxu0 0.0
      %1129 = vmatprep.subr.mxu0 0.0
      %1130 = vmatpush1.msra.mxu0 0.0
      %1131 = vmatprep.subr.mxu0 0.0
      %1132 = vmatpush1.msra.mxu0 0.0
      %1133 = vmatprep.subr.mxu0 0.0
      %1134 = vmatpush1.msra.mxu0 0.0
      %1135 = vmatprep.subr.mxu0 0.0
      %1136 = vmatpush1.msra.mxu0 0.0
      %1137 = vmatprep.subr.mxu0 0.0
      %1138 = vmatpush1.msra.mxu0 0.0
      %1139 = vmatprep.subr.mxu0 0.0
      %1140 = vmatpush1.msra.mxu0 0.0
      %1141 = vmatprep.subr.mxu0 0.0
      %1142 = vmatpush1.msra.mxu0 0.0
      %1143 = vmatprep.subr.mxu0 0.0
      %1144 = vmatpush1.msra.mxu0 0.0
      %1145 = vmatprep.subr.mxu0 0.0
      %1146 = vmatpush1.msra.mxu0 0.0
      %1147 = vmatprep.subr.mxu0 0.0
      %1148 = vmatpush1.msra.mxu0 0.0
      %1149 = vmatprep.subr.mxu0 0.0
      %1150 = vmatpush1.msra.mxu0 0.0
      %1151 = vmatprep.subr.mxu0 0.0
      %1152 = vmatpush1.msra.mxu0 0.0
      %1153 = vmatprep.subr.mxu0 0.0
      %1154 = vmatpush1.msra.mxu0 0.0
      %1155 = vmatprep.mubr.f32.mxu0 0.0
      %1156 = vmatmul.mubr.f32.gmra.mrb[0].mxu0 %v1089
      %v1157 = vpop.f32.mrb[0].mxu0
      %v1158 = vadd.f32 %v1085, %v1157
      %v1159 = vpop.f32.mrb[0].mxu0
      %1160 = vdwg.mxu0
      %v1161 = vld [vmem:[%s7] sm:$0x1]
      %v1163 = vlaneseq
      %v1164 = vshrl.u32 %v1163, 7
      %v1165 = vsub.s32 0, %v1164
      %v1166 = vrot.slane %v1161, %v1165
      %v1168 = vadd.f32 %v1158, %v1166
      %v1169 = vmax.f32 %v1168, 0.0
      %v1170 = vld [vmem:[%s8] sm:$0xff]
      %v1171 = vld [vmem:[%s8 + $0x8] sm:$0xff]
      %v1172 = vld [vmem:[%s8 + $0x10] sm:$0xff]
      %v1173 = vld [vmem:[%s8 + $0x18] sm:$0xff]
      %v1174 = vld [vmem:[%s9] sm:$0x1]
      %v1176 = vlaneseq
      %v1177 = vshrl.u32 %v1176, 7
      %v1178 = vsub.s32 0, %v1177
      %v1179 = vrot.slane %v1174, %v1178
      %v1182 = vsel %vm619, %v1169, 0
      %1184 = vmatprep.subr.mxu0 0.0
      %1185 = vmatpush1.msra.mxu0 %v1170
      %1186 = vmatprep.subr.mxu0 0.0
      %1187 = vmatpush1.msra.mxu0 %v1171
      %1188 = vmatprep.subr.mxu0 0.0
      %1189 = vmatpush1.msra.mxu0 %v1172
      %1190 = vmatprep.subr.mxu0 0.0
      %1191 = vmatpush1.msra.mxu0 %v1173
      %1192 = vmatprep.subr.mxu0 0.0
      %1193 = vmatpush1.msra.mxu0 0.0
      %1194 = vmatprep.subr.mxu0 0.0
      %1195 = vmatpush1.msra.mxu0 0.0
      %1196 = vmatprep.subr.mxu0 0.0
      %1197 = vmatpush1.msra.mxu0 0.0
      %1198 = vmatprep.subr.mxu0 0.0
      %1199 = vmatpush1.msra.mxu0 0.0
      %1200 = vmatprep.subr.mxu0 0.0
      %1201 = vmatpush1.msra.mxu0 0.0
      %1202 = vmatprep.subr.mxu0 0.0
      %1203 = vmatpush1.msra.mxu0 0.0
      %1204 = vmatprep.subr.mxu0 0.0
      %1205 = vmatpush1.msra.mxu0 0.0
      %1206 = vmatprep.subr.mxu0 0.0
      %1207 = vmatpush1.msra.mxu0 0.0
      %1208 = vmatprep.subr.mxu0 0.0
      %1209 = vmatpush1.msra.mxu0 0.0
      %1210 = vmatprep.subr.mxu0 0.0
      %1211 = vmatpush1.msra.mxu0 0.0
      %1212 = vmatprep.subr.mxu0 0.0
      %1213 = vmatpush1.msra.mxu0 0.0
      %1214 = vmatprep.subr.mxu0 0.0
      %1215 = vmatpush1.msra.mxu0 0.0
      %1216 = vmatprep.subr.mxu0 0.0
      %1217 = vmatpush1.msra.mxu0 0.0
      %1218 = vmatprep.subr.mxu0 0.0
      %1219 = vmatpush1.msra.mxu0 0.0
      %1220 = vmatprep.subr.mxu0 0.0
      %1221 = vmatpush1.msra.mxu0 0.0
      %1222 = vmatprep.subr.mxu0 0.0
      %1223 = vmatpush1.msra.mxu0 0.0
      %1224 = vmatprep.subr.mxu0 0.0
      %1225 = vmatpush1.msra.mxu0 0.0
      %1226 = vmatprep.subr.mxu0 0.0
      %1227 = vmatpush1.msra.mxu0 0.0
      %1228 = vmatprep.subr.mxu0 0.0
      %1229 = vmatpush1.msra.mxu0 0.0
      %1230 = vmatprep.subr.mxu0 0.0
      %1231 = vmatpush1.msra.mxu0 0.0
      %1232 = vmatprep.subr.mxu0 0.0
      %1233 = vmatpush1.msra.mxu0 0.0
      %1234 = vmatprep.subr.mxu0 0.0
      %1235 = vmatpush1.msra.mxu0 0.0
      %1236 = vmatprep.subr.mxu0 0.0
      %1237 = vmatpush1.msra.mxu0 0.0
      %1238 = vmatprep.subr.mxu0 0.0
      %1239 = vmatpush1.msra.mxu0 0.0
      %1240 = vmatprep.subr.mxu0 0.0
      %1241 = vmatpush1.msra.mxu0 0.0
      %1242 = vmatprep.subr.mxu0 0.0
      %1243 = vmatpush1.msra.mxu0 0.0
      %1244 = vmatprep.subr.mxu0 0.0
      %1245 = vmatpush1.msra.mxu0 0.0
      %1246 = vmatprep.subr.mxu0 0.0
      %1247 = vmatpush1.msra.mxu0 0.0
      %1248 = vmatprep.mubr.f32.mxu0 0.0
      %1249 = vmatmul.mubr.f32.gmra.mrb[0].mxu0 %v1182
      %v1250 = vpop.f32.mrb[0].mxu0
      %v1251 = vadd.f32 %v1179, %v1250
      %v1252 = vpop.f32.mrb[0].mxu0
      %1253 = vdwg.mxu0
      %vm1254 = vcmask 39936
      %v1255 = vsel %vm1254, %v1251, -inf
      %1256 = vmax.xlane.f32.xlu0 %v1255
      %v1257 = vpop.xlane.xlu0 %1256
      %v1258 = vsub.f32 %v1251, %v1257
      %v1259 = vmul.f32 %v1258, 1.442695
      %v1260 = vpow.pop %v1259
      %v1261 = vsel %vm1254, %v1260, 0.0
      %1262 = vadd.xlane.f32.xlu0 %v1261
      %v1263 = vpop.xlane.xlu0 %1262
      %v1264 = vrcp.pop %v1263
      %v1265 = vmul.f32 %v1260, %v1264
      %v1266 = vlaneseq
      %v1267 = vshrl.u32 %v1266, 7
      %v1268 = vadd.s32 %v1267, 8
      %v1269 = vpack.c.bf16 %v565, %v564
      %v1270 = vpack.c.bf16 %v569, %v568
      %v1271 = vpack.c.bf16 %v573, %v572
      %v1272 = vpack.c.bf16 %v577, %v576
      %v1273 = vpack.c.bf16 %v581, %v580
      %v1274 = vpack.c.bf16 %v585, %v584
      %v1275 = vpack.c.bf16 %v589, %v588
      %v1276 = vpack.c.bf16 %v593, %v592
      %v1277 = vld [vmem:[%s10] sm:$0xff]
      %v1278 = vld [vmem:[%s10 + $0x8] sm:$0xf]
      %v1279 = vld [vmem:[%s10 + $0xc] sm:$0xff]
      %v1280 = vld [vmem:[%s10 + $0x14] sm:$0xf]
      %v1281 = vld [vmem:[%s10 + $0x18] sm:$0xff]
      %v1282 = vld [vmem:[%s10 + $0x20] sm:$0xf]
      %v1283 = vld [vmem:[%s10 + $0x24] sm:$0xff]
      %v1284 = vld [vmem:[%s10 + $0x2c] sm:$0xf]
      %v1293 = vunpack.c.l.b16 %v1277
      %v1294 = vunpack.c.h.b16 %v1277
      %v1295 = vunpack.c.l.b16 %v1278
      %v1296 = vunpack.c.l.b16 %v1279
      %v1297 = vunpack.c.h.b16 %v1279
      %v1298 = vunpack.c.l.b16 %v1280
      %v1299 = vunpack.c.l.b16 %v1281
      %v1300 = vunpack.c.h.b16 %v1281
      %v1301 = vunpack.c.l.b16 %v1282
      %v1302 = vunpack.c.l.b16 %v1283
      %v1303 = vunpack.c.h.b16 %v1283
      %v1304 = vunpack.c.l.b16 %v1284
      %v1305 = vpack.c.b16 %v1296, %v1293
      %v1306 = vpack.c.b16 %v1297, %v1294
      %v1307 = vpack.c.b16 %v1298, %v1295
      %v1308 = vpack.c.b16 %v1302, %v1299
      %v1309 = vpack.c.b16 %v1303, %v1300
      %v1310 = vpack.c.b16 %v1304, %v1301
      %v1318 = vsel %vm619, %v1269, 0
      %v1321 = vsel %vm619, %v1270, 0
      %v1324 = vsel %vm619, %v1271, 0
      %v1327 = vsel %vm619, %v1272, 0
      %v1330 = vsel %vm619, %v1273, 0
      %v1333 = vsel %vm619, %v1274, 0
      %v1336 = vsel %vm619, %v1275, 0
      %v1339 = vsel %vm619, %v1276, 0
      %1341 = vmatprep.subr.bf16.mxu0 %v1306
      %1342 = vmatpush1.bf16.msra.mxu0 %v1305
      %1343 = vmatprep.subr.bf16.mxu0 %v1309
      %1344 = vmatpush1.bf16.msra.mxu0 %v1308
      %1345 = vmatprep.subr.bf16.mxu0 0
      %1346 = vmatpush1.bf16.msra.mxu0 0
      %1347 = vmatprep.subr.bf16.mxu0 0
      %1348 = vmatpush1.bf16.msra.mxu0 0
      %1349 = vmatprep.subr.bf16.mxu0 0
      %1350 = vmatpush1.bf16.msra.mxu0 0
      %1351 = vmatprep.subr.bf16.mxu0 0
      %1352 = vmatpush1.bf16.msra.mxu0 0
      %1353 = vmatprep.subr.bf16.mxu0 0
      %1354 = vmatpush1.bf16.msra.mxu0 0
      %1355 = vmatprep.subr.bf16.mxu0 0
      %1356 = vmatpush1.bf16.msra.mxu0 0
      %1357 = vmatprep.subr.bf16.mxu0 0
      %1358 = vmatpush1.bf16.msra.mxu0 0
      %1359 = vmatprep.subr.bf16.mxu0 0
      %1360 = vmatpush1.bf16.msra.mxu0 0
      %1361 = vmatprep.subr.bf16.mxu0 0
      %1362 = vmatpush1.bf16.msra.mxu0 0
      %1363 = vmatprep.subr.bf16.mxu0 0
      %1364 = vmatpush1.bf16.msra.mxu0 0
      %1365 = vmatprep.subr.bf16.mxu0 0
      %1366 = vmatpush1.bf16.msra.mxu0 0
      %1367 = vmatprep.subr.bf16.mxu0 0
      %1368 = vmatpush1.bf16.msra.mxu0 0
      %1369 = vmatprep.subr.bf16.mxu0 0
      %1370 = vmatpush1.bf16.msra.mxu0 0
      %1371 = vmatprep.subr.bf16.mxu0 0
      %1372 = vmatpush1.bf16.msra.mxu0 0
      %1373 = vmatprep.mubr.bf16.mxu0 0
      %1374 = vmatmul.mubr.bf16.gmra.mrb[0].mxu0 %v1318
      %v1375 = vpop.f32.mrb[0].mxu0
      %v1376 = vadd.f32 0.0, %v1375
      %v1377 = vpop.f32.mrb[0].mxu0
      %v1378 = vadd.f32 0.0, %v1377
      %v1379 = vpop.f32.mrb[0].mxu0
      %v1380 = vadd.f32 0.0, %v1379
      %v1381 = vpop.f32.mrb[0].mxu0
      %v1382 = vadd.f32 0.0, %v1381
      %1383 = vmatprep.mubr.bf16.mxu0 0
      %1384 = vmatmul.mubr.bf16.gmra.mrb[0].mxu0 %v1321
      %v1385 = vpop.f32.mrb[0].mxu0
      %v1386 = vadd.f32 0.0, %v1385
      %v1387 = vpop.f32.mrb[0].mxu0
      %v1388 = vadd.f32 0.0, %v1387
      %v1389 = vpop.f32.mrb[0].mxu0
      %v1390 = vadd.f32 0.0, %v1389
      %v1391 = vpop.f32.mrb[0].mxu0
      %v1392 = vadd.f32 0.0, %v1391
      %1393 = vmatprep.mubr.bf16.mxu0 0
      %1394 = vmatmul.mubr.bf16.gmra.mrb[0].mxu0 %v1324
      %v1395 = vpop.f32.mrb[0].mxu0
      %v1396 = vadd.f32 0.0, %v1395
      %v1397 = vpop.f32.mrb[0].mxu0
      %v1398 = vadd.f32 0.0, %v1397
      %v1399 = vpop.f32.mrb[0].mxu0
      %v1400 = vadd.f32 0.0, %v1399
      %v1401 = vpop.f32.mrb[0].mxu0
      %v1402 = vadd.f32 0.0, %v1401
      %1403 = vmatprep.mubr.bf16.mxu0 0
      %1404 = vmatmul.mubr.bf16.gmra.mrb[0].mxu0 %v1327
      %v1405 = vpop.f32.mrb[0].mxu0
      %v1406 = vadd.f32 0.0, %v1405
      %v1407 = vpop.f32.mrb[0].mxu0
      %v1408 = vadd.f32 0.0, %v1407
      %v1409 = vpop.f32.mrb[0].mxu0
      %v1410 = vadd.f32 0.0, %v1409
      %v1411 = vpop.f32.mrb[0].mxu0
      %v1412 = vadd.f32 0.0, %v1411
      %1413 = vmatprep.mubr.bf16.mxu0 0
      %1414 = vmatmul.mubr.bf16.gmra.mrb[0].mxu0 %v1330
      %v1415 = vpop.f32.mrb[0].mxu0
      %v1416 = vadd.f32 0.0, %v1415
      %v1417 = vpop.f32.mrb[0].mxu0
      %v1418 = vadd.f32 0.0, %v1417
      %v1419 = vpop.f32.mrb[0].mxu0
      %v1420 = vadd.f32 0.0, %v1419
      %v1421 = vpop.f32.mrb[0].mxu0
      %v1422 = vadd.f32 0.0, %v1421
      %1423 = vmatprep.mubr.bf16.mxu0 0
      %1424 = vmatmul.mubr.bf16.gmra.mrb[0].mxu0 %v1333
      %v1425 = vpop.f32.mrb[0].mxu0
      %v1426 = vadd.f32 0.0, %v1425
      %v1427 = vpop.f32.mrb[0].mxu0
      %v1428 = vadd.f32 0.0, %v1427
      %v1429 = vpop.f32.mrb[0].mxu0
      %v1430 = vadd.f32 0.0, %v1429
      %v1431 = vpop.f32.mrb[0].mxu0
      %v1432 = vadd.f32 0.0, %v1431
      %1433 = vmatprep.mubr.bf16.mxu0 0
      %1434 = vmatmul.mubr.bf16.gmra.mrb[0].mxu0 %v1336
      %v1435 = vpop.f32.mrb[0].mxu0
      %v1436 = vadd.f32 0.0, %v1435
      %v1437 = vpop.f32.mrb[0].mxu0
      %v1438 = vadd.f32 0.0, %v1437
      %v1439 = vpop.f32.mrb[0].mxu0
      %v1440 = vadd.f32 0.0, %v1439
      %v1441 = vpop.f32.mrb[0].mxu0
      %v1442 = vadd.f32 0.0, %v1441
      %1443 = vmatprep.mubr.bf16.mxu0 0
      %1444 = vmatmul.mubr.bf16.gmra.mrb[0].mxu0 %v1339
      %v1445 = vpop.f32.mrb[0].mxu0
      %v1446 = vadd.f32 0.0, %v1445
      %v1447 = vpop.f32.mrb[0].mxu0
      %v1448 = vadd.f32 0.0, %v1447
      %v1449 = vpop.f32.mrb[0].mxu0
      %v1450 = vadd.f32 0.0, %v1449
      %v1451 = vpop.f32.mrb[0].mxu0
      %v1452 = vadd.f32 0.0, %v1451
      %1453 = vdwg.mxu0
      %1454 = vmatprep.subr.bf16.mxu0 0
      %1455 = vmatpush1.bf16.msra.mxu0 %v1307
      %1456 = vmatprep.subr.bf16.mxu0 0
      %1457 = vmatpush1.bf16.msra.mxu0 %v1310
      %1458 = vmatprep.subr.bf16.mxu0 0
      %1459 = vmatpush1.bf16.msra.mxu0 0
      %1460 = vmatprep.subr.bf16.mxu0 0
      %1461 = vmatpush1.bf16.msra.mxu0 0
      %1462 = vmatprep.subr.bf16.mxu0 0
      %1463 = vmatpush1.bf16.msra.mxu0 0
      %1464 = vmatprep.subr.bf16.mxu0 0
      %1465 = vmatpush1.bf16.msra.mxu0 0
      %1466 = vmatprep.subr.bf16.mxu0 0
      %1467 = vmatpush1.bf16.msra.mxu0 0
      %1468 = vmatprep.subr.bf16.mxu0 0
      %1469 = vmatpush1.bf16.msra.mxu0 0
      %1470 = vmatprep.subr.bf16.mxu0 0
      %1471 = vmatpush1.bf16.msra.mxu0 0
      %1472 = vmatprep.subr.bf16.mxu0 0
      %1473 = vmatpush1.bf16.msra.mxu0 0
      %1474 = vmatprep.subr.bf16.mxu0 0
      %1475 = vmatpush1.bf16.msra.mxu0 0
      %1476 = vmatprep.subr.bf16.mxu0 0
      %1477 = vmatpush1.bf16.msra.mxu0 0
      %1478 = vmatprep.subr.bf16.mxu0 0
      %1479 = vmatpush1.bf16.msra.mxu0 0
      %1480 = vmatprep.subr.bf16.mxu0 0
      %1481 = vmatpush1.bf16.msra.mxu0 0
      %1482 = vmatprep.subr.bf16.mxu0 0
      %1483 = vmatpush1.bf16.msra.mxu0 0
      %1484 = vmatprep.subr.bf16.mxu0 0
      %1485 = vmatpush1.bf16.msra.mxu0 0
      %1486 = vmatprep.mubr.bf16.mxu0 0
      %1487 = vmatmul.mubr.bf16.gmra.mrb[0].mxu0 %v1318
      %v1488 = vpop.f32.mrb[0].mxu0
      %v1489 = vadd.f32 0.0, %v1488
      %v1490 = vpop.f32.mrb[0].mxu0
      %v1491 = vpop.f32.mrb[0].mxu0
      %v1492 = vadd.f32 0.0, %v1491
      %v1493 = vpop.f32.mrb[0].mxu0
      %1494 = vmatprep.mubr.bf16.mxu0 0
      %1495 = vmatmul.mubr.bf16.gmra.mrb[0].mxu0 %v1321
      %v1496 = vpop.f32.mrb[0].mxu0
      %v1497 = vadd.f32 0.0, %v1496
      %v1498 = vpop.f32.mrb[0].mxu0
      %v1499 = vpop.f32.mrb[0].mxu0
      %v1500 = vadd.f32 0.0, %v1499
      %v1501 = vpop.f32.mrb[0].mxu0
      %1502 = vmatprep.mubr.bf16.mxu0 0
      %1503 = vmatmul.mubr.bf16.gmra.mrb[0].mxu0 %v1324
      %v1504 = vpop.f32.mrb[0].mxu0
      %v1505 = vadd.f32 0.0, %v1504
      %v1506 = vpop.f32.mrb[0].mxu0
      %v1507 = vpop.f32.mrb[0].mxu0
      %v1508 = vadd.f32 0.0, %v1507
      %v1509 = vpop.f32.mrb[0].mxu0
      %1510 = vmatprep.mubr.bf16.mxu0 0
      %1511 = vmatmul.mubr.bf16.gmra.mrb[0].mxu0 %v1327
      %v1512 = vpop.f32.mrb[0].mxu0
      %v1513 = vadd.f32 0.0, %v1512
      %v1514 = vpop.f32.mrb[0].mxu0
      %v1515 = vpop.f32.mrb[0].mxu0
      %v1516 = vadd.f32 0.0, %v1515
      %v1517 = vpop.f32.mrb[0].mxu0
      %1518 = vmatprep.mubr.bf16.mxu0 0
      %1519 = vmatmul.mubr.bf16.gmra.mrb[0].mxu0 %v1330
      %v1520 = vpop.f32.mrb[0].mxu0
      %v1521 = vadd.f32 0.0, %v1520
      %v1522 = vpop.f32.mrb[0].mxu0
      %v1523 = vpop.f32.mrb[0].mxu0
      %v1524 = vadd.f32 0.0, %v1523
      %v1525 = vpop.f32.mrb[0].mxu0
      %1526 = vmatprep.mubr.bf16.mxu0 0
      %1527 = vmatmul.mubr.bf16.gmra.mrb[0].mxu0 %v1333
      %v1528 = vpop.f32.mrb[0].mxu0
      %v1529 = vadd.f32 0.0, %v1528
      %v1530 = vpop.f32.mrb[0].mxu0
      %v1531 = vpop.f32.mrb[0].mxu0
      %v1532 = vadd.f32 0.0, %v1531
      %v1533 = vpop.f32.mrb[0].mxu0
      %1534 = vmatprep.mubr.bf16.mxu0 0
      %1535 = vmatmul.mubr.bf16.gmra.mrb[0].mxu0 %v1336
      %v1536 = vpop.f32.mrb[0].mxu0
      %v1537 = vadd.f32 0.0, %v1536
      %v1538 = vpop.f32.mrb[0].mxu0
      %v1539 = vpop.f32.mrb[0].mxu0
      %v1540 = vadd.f32 0.0, %v1539
      %v1541 = vpop.f32.mrb[0].mxu0
      %1542 = vmatprep.mubr.bf16.mxu0 0
      %1543 = vmatmul.mubr.bf16.gmra.mrb[0].mxu0 %v1339
      %v1544 = vpop.f32.mrb[0].mxu0
      %v1545 = vadd.f32 0.0, %v1544
      %v1546 = vpop.f32.mrb[0].mxu0
      %v1547 = vpop.f32.mrb[0].mxu0
      %v1548 = vadd.f32 0.0, %v1547
      %v1549 = vpop.f32.mrb[0].mxu0
      %1550 = vdwg.mxu0
      %vm1551 = vcmp.lt.s32.totalorder %v1267, 16
      %vm1552 = vcmp.lt.s32.totalorder %v1268, 16
      %v1553 = vsel %vm1551, 1, 0
      %v1554 = vsel %vm1552, 1, 0
      %vm1555 = vcmp.eq.s32.totalorder %v1553, 1
      %vm1556 = vcmp.eq.s32.totalorder %v1554, 1
      %v1557 = vsel %vm1555, %v1376, -inf
      %v1558 = vsel %vm1555, %v1378, -inf
      %v1559 = vsel %vm1555, %v1489, -inf
      %v1560 = vsel %vm1556, %v1380, -inf
      %v1561 = vsel %vm1556, %v1382, -inf
      %v1562 = vsel %vm1556, %v1492, -inf
      %v1563 = vsel %vm1555, %v1386, -inf
      %v1564 = vsel %vm1555, %v1388, -inf
      %v1565 = vsel %vm1555, %v1497, -inf
      %v1566 = vsel %vm1556, %v1390, -inf
      %v1567 = vsel %vm1556, %v1392, -inf
      %v1568 = vsel %vm1556, %v1500, -inf
      %v1569 = vsel %vm1555, %v1396, -inf
      %v1570 = vsel %vm1555, %v1398, -inf
      %v1571 = vsel %vm1555, %v1505, -inf
      %v1572 = vsel %vm1556, %v1400, -inf
      %v1573 = vsel %vm1556, %v1402, -inf
      %v1574 = vsel %vm1556, %v1508, -inf
      %v1575 = vsel %vm1555, %v1406, -inf
      %v1576 = vsel %vm1555, %v1408, -inf
      %v1577 = vsel %vm1555, %v1513, -inf
      %v1578 = vsel %vm1556, %v1410, -inf
      %v1579 = vsel %vm1556, %v1412, -inf
      %v1580 = vsel %vm1556, %v1516, -inf
      %v1581 = vsel %vm1555, %v1416, -inf
      %v1582 = vsel %vm1555, %v1418, -inf
      %v1583 = vsel %vm1555, %v1521, -inf
      %v1584 = vsel %vm1556, %v1420, -inf
      %v1585 = vsel %vm1556, %v1422, -inf
      %v1586 = vsel %vm1556, %v1524, -inf
      %v1587 = vsel %vm1555, %v1426, -inf
      %v1588 = vsel %vm1555, %v1428, -inf
      %v1589 = vsel %vm1555, %v1529, -inf
      %v1590 = vsel %vm1556, %v1430, -inf
      %v1591 = vsel %vm1556, %v1432, -inf
      %v1592 = vsel %vm1556, %v1532, -inf
      %v1593 = vsel %vm1555, %v1436, -inf
      %v1594 = vsel %vm1555, %v1438, -inf
      %v1595 = vsel %vm1555, %v1537, -inf
      %v1596 = vsel %vm1556, %v1440, -inf
      %v1597 = vsel %vm1556, %v1442, -inf
      %v1598 = vsel %vm1556, %v1540, -inf
      %v1599 = vsel %vm1555, %v1446, -inf
      %v1600 = vsel %vm1555, %v1448, -inf
      %v1601 = vsel %vm1555, %v1545, -inf
      %v1602 = vsel %vm1556, %v1450, -inf
      %v1603 = vsel %vm1556, %v1452, -inf
      %v1604 = vsel %vm1556, %v1548, -inf
      %v1605 = vmax.f32 %v1557, %v1560
      %v1606 = vrot.slane %v1605, 4
      %v1607 = vmax.f32 %v1605, %v1606
      %v1608 = vrot.slane %v1607, 2
      %v1609 = vmax.f32 %v1607, %v1608
      %v1610 = vrot.slane %v1609, 1
      %v1611 = vmax.f32 %v1609, %v1610
      %v1612 = vmax.f32 %v1558, %v1561
      %v1613 = vrot.slane %v1612, 4
      %v1614 = vmax.f32 %v1612, %v1613
      %v1615 = vrot.slane %v1614, 2
      %v1616 = vmax.f32 %v1614, %v1615
      %v1617 = vrot.slane %v1616, 1
      %v1618 = vmax.f32 %v1616, %v1617
      %vm1619 = vcmask 523264
      %v1620 = vsel %vm1619, %v1559, -inf
      %v1621 = vsel %vm1619, %v1562, -inf
      %v1622 = vmax.f32 %v1620, %v1621
      %v1623 = vrot.slane %v1622, 4
      %v1624 = vmax.f32 %v1622, %v1623
      %v1625 = vrot.slane %v1624, 2
      %v1626 = vmax.f32 %v1624, %v1625
      %v1627 = vrot.slane %v1626, 1
      %v1628 = vmax.f32 %v1626, %v1627
      %v1629 = vmax.f32 %v1563, %v1566
      %v1630 = vrot.slane %v1629, 4
      %v1631 = vmax.f32 %v1629, %v1630
      %v1632 = vrot.slane %v1631, 2
      %v1633 = vmax.f32 %v1631, %v1632
      %v1634 = vrot.slane %v1633, 1
      %v1635 = vmax.f32 %v1633, %v1634
      %v1636 = vmax.f32 %v1564, %v1567
      %v1637 = vrot.slane %v1636, 4
      %v1638 = vmax.f32 %v1636, %v1637
      %v1639 = vrot.slane %v1638, 2
      %v1640 = vmax.f32 %v1638, %v1639
      %v1641 = vrot.slane %v1640, 1
      %v1642 = vmax.f32 %v1640, %v1641
      %v1643 = vsel %vm1619, %v1565, -inf
      %v1644 = vsel %vm1619, %v1568, -inf
      %v1645 = vmax.f32 %v1643, %v1644
      %v1646 = vrot.slane %v1645, 4
      %v1647 = vmax.f32 %v1645, %v1646
      %v1648 = vrot.slane %v1647, 2
      %v1649 = vmax.f32 %v1647, %v1648
      %v1650 = vrot.slane %v1649, 1
      %v1651 = vmax.f32 %v1649, %v1650
      %v1652 = vmax.f32 %v1569, %v1572
      %v1653 = vrot.slane %v1652, 4
      %v1654 = vmax.f32 %v1652, %v1653
      %v1655 = vrot.slane %v1654, 2
      %v1656 = vmax.f32 %v1654, %v1655
      %v1657 = vrot.slane %v1656, 1
      %v1658 = vmax.f32 %v1656, %v1657
      %v1659 = vmax.f32 %v1570, %v1573
      %v1660 = vrot.slane %v1659, 4
      %v1661 = vmax.f32 %v1659, %v1660
      %v1662 = vrot.slane %v1661, 2
      %v1663 = vmax.f32 %v1661, %v1662
      %v1664 = vrot.slane %v1663, 1
      %v1665 = vmax.f32 %v1663, %v1664
      %v1666 = vsel %vm1619, %v1571, -inf
      %v1667 = vsel %vm1619, %v1574, -inf
      %v1668 = vmax.f32 %v1666, %v1667
      %v1669 = vrot.slane %v1668, 4
      %v1670 = vmax.f32 %v1668, %v1669
      %v1671 = vrot.slane %v1670, 2
      %v1672 = vmax.f32 %v1670, %v1671
      %v1673 = vrot.slane %v1672, 1
      %v1674 = vmax.f32 %v1672, %v1673
      %v1675 = vmax.f32 %v1575, %v1578
      %v1676 = vrot.slane %v1675, 4
      %v1677 = vmax.f32 %v1675, %v1676
      %v1678 = vrot.slane %v1677, 2
      %v1679 = vmax.f32 %v1677, %v1678
      %v1680 = vrot.slane %v1679, 1
      %v1681 = vmax.f32 %v1679, %v1680
      %v1682 = vmax.f32 %v1576, %v1579
      %v1683 = vrot.slane %v1682, 4
      %v1684 = vmax.f32 %v1682, %v1683
      %v1685 = vrot.slane %v1684, 2
      %v1686 = vmax.f32 %v1684, %v1685
      %v1687 = vrot.slane %v1686, 1
      %v1688 = vmax.f32 %v1686, %v1687
      %v1689 = vsel %vm1619, %v1577, -inf
      %v1690 = vsel %vm1619, %v1580, -inf
      %v1691 = vmax.f32 %v1689, %v1690
      %v1692 = vrot.slane %v1691, 4
      %v1693 = vmax.f32 %v1691, %v1692
      %v1694 = vrot.slane %v1693, 2
      %v1695 = vmax.f32 %v1693, %v1694
      %v1696 = vrot.slane %v1695, 1
      %v1697 = vmax.f32 %v1695, %v1696
      %v1698 = vmax.f32 %v1581, %v1584
      %v1699 = vrot.slane %v1698, 4
      %v1700 = vmax.f32 %v1698, %v1699
      %v1701 = vrot.slane %v1700, 2
      %v1702 = vmax.f32 %v1700, %v1701
      %v1703 = vrot.slane %v1702, 1
      %v1704 = vmax.f32 %v1702, %v1703
      %v1705 = vmax.f32 %v1582, %v1585
      %v1706 = vrot.slane %v1705, 4
      %v1707 = vmax.f32 %v1705, %v1706
      %v1708 = vrot.slane %v1707, 2
      %v1709 = vmax.f32 %v1707, %v1708
      %v1710 = vrot.slane %v1709, 1
      %v1711 = vmax.f32 %v1709, %v1710
      %v1712 = vsel %vm1619, %v1583, -inf
      %v1713 = vsel %vm1619, %v1586, -inf
      %v1714 = vmax.f32 %v1712, %v1713
      %v1715 = vrot.slane %v1714, 4
      %v1716 = vmax.f32 %v1714, %v1715
      %v1717 = vrot.slane %v1716, 2
      %v1718 = vmax.f32 %v1716, %v1717
      %v1719 = vrot.slane %v1718, 1
      %v1720 = vmax.f32 %v1718, %v1719
      %v1721 = vmax.f32 %v1587, %v1590
      %v1722 = vrot.slane %v1721, 4
      %v1723 = vmax.f32 %v1721, %v1722
      %v1724 = vrot.slane %v1723, 2
      %v1725 = vmax.f32 %v1723, %v1724
      %v1726 = vrot.slane %v1725, 1
      %v1727 = vmax.f32 %v1725, %v1726
      %v1728 = vmax.f32 %v1588, %v1591
      %v1729 = vrot.slane %v1728, 4
      %v1730 = vmax.f32 %v1728, %v1729
      %v1731 = vrot.slane %v1730, 2
      %v1732 = vmax.f32 %v1730, %v1731
      %v1733 = vrot.slane %v1732, 1
      %v1734 = vmax.f32 %v1732, %v1733
      %v1735 = vsel %vm1619, %v1589, -inf
      %v1736 = vsel %vm1619, %v1592, -inf
      %v1737 = vmax.f32 %v1735, %v1736
      %v1738 = vrot.slane %v1737, 4
      %v1739 = vmax.f32 %v1737, %v1738
      %v1740 = vrot.slane %v1739, 2
      %v1741 = vmax.f32 %v1739, %v1740
      %v1742 = vrot.slane %v1741, 1
      %v1743 = vmax.f32 %v1741, %v1742
      %v1744 = vmax.f32 %v1593, %v1596
      %v1745 = vrot.slane %v1744, 4
      %v1746 = vmax.f32 %v1744, %v1745
      %v1747 = vrot.slane %v1746, 2
      %v1748 = vmax.f32 %v1746, %v1747
      %v1749 = vrot.slane %v1748, 1
      %v1750 = vmax.f32 %v1748, %v1749
      %v1751 = vmax.f32 %v1594, %v1597
      %v1752 = vrot.slane %v1751, 4
      %v1753 = vmax.f32 %v1751, %v1752
      %v1754 = vrot.slane %v1753, 2
      %v1755 = vmax.f32 %v1753, %v1754
      %v1756 = vrot.slane %v1755, 1
      %v1757 = vmax.f32 %v1755, %v1756
      %v1758 = vsel %vm1619, %v1595, -inf
      %v1759 = vsel %vm1619, %v1598, -inf
      %v1760 = vmax.f32 %v1758, %v1759
      %v1761 = vrot.slane %v1760, 4
      %v1762 = vmax.f32 %v1760, %v1761
      %v1763 = vrot.slane %v1762, 2
      %v1764 = vmax.f32 %v1762, %v1763
      %v1765 = vrot.slane %v1764, 1
      %v1766 = vmax.f32 %v1764, %v1765
      %v1767 = vmax.f32 %v1599, %v1602
      %v1768 = vrot.slane %v1767, 4
      %v1769 = vmax.f32 %v1767, %v1768
      %v1770 = vrot.slane %v1769, 2
      %v1771 = vmax.f32 %v1769, %v1770
      %v1772 = vrot.slane %v1771, 1
      %v1773 = vmax.f32 %v1771, %v1772
      %v1774 = vmax.f32 %v1600, %v1603
      %v1775 = vrot.slane %v1774, 4
      %v1776 = vmax.f32 %v1774, %v1775
      %v1777 = vrot.slane %v1776, 2
      %v1778 = vmax.f32 %v1776, %v1777
      %v1779 = vrot.slane %v1778, 1
      %v1780 = vmax.f32 %v1778, %v1779
      %v1781 = vsel %vm1619, %v1601, -inf
      %v1782 = vsel %vm1619, %v1604, -inf
      %v1783 = vmax.f32 %v1781, %v1782
      %v1784 = vrot.slane %v1783, 4
      %v1785 = vmax.f32 %v1783, %v1784
      %v1786 = vrot.slane %v1785, 2
      %v1787 = vmax.f32 %v1785, %v1786
      %v1788 = vrot.slane %v1787, 1
      %v1789 = vmax.f32 %v1787, %v1788
      %v1790 = vld [vmem:[%s15] sm:$0x7]
      %v1792 = vlaneseq
      %v1793 = vshrl.u32 %v1792, 7
      %v1794 = vsub.s32 0, %v1793
      %v1795 = vrot.slane %v1790, %v1794
      %v1796 = vlaneseq
      %v1797 = vshrl.u32 %v1796, 7
      %v1798 = vsub.s32 1, %v1797
      %v1799 = vrot.slane %v1790, %v1798
      %v1800 = vlaneseq
      %v1801 = vshrl.u32 %v1800, 7
      %v1802 = vsub.s32 2, %v1801
      %v1803 = vrot.slane %v1790, %v1802
      %v1807 = vadd.f32 %v1611, %v1795
      %v1808 = vadd.f32 %v1618, %v1799
      %v1809 = vadd.f32 %v1628, %v1803
      %v1810 = vadd.f32 %v1635, %v1795
      %v1811 = vadd.f32 %v1642, %v1799
      %v1812 = vadd.f32 %v1651, %v1803
      %v1813 = vadd.f32 %v1658, %v1795
      %v1814 = vadd.f32 %v1665, %v1799
      %v1815 = vadd.f32 %v1674, %v1803
      %v1816 = vadd.f32 %v1681, %v1795
      %v1817 = vadd.f32 %v1688, %v1799
      %v1818 = vadd.f32 %v1697, %v1803
      %v1819 = vadd.f32 %v1704, %v1795
      %v1820 = vadd.f32 %v1711, %v1799
      %v1821 = vadd.f32 %v1720, %v1803
      %v1822 = vadd.f32 %v1727, %v1795
      %v1823 = vadd.f32 %v1734, %v1799
      %v1824 = vadd.f32 %v1743, %v1803
      %v1825 = vadd.f32 %v1750, %v1795
      %v1826 = vadd.f32 %v1757, %v1799
      %v1827 = vadd.f32 %v1766, %v1803
      %v1828 = vadd.f32 %v1773, %v1795
      %v1829 = vadd.f32 %v1780, %v1799
      %v1830 = vadd.f32 %v1789, %v1803
      %1832 = vset.pattern.permute.xlu0 0
      %1833 = vperm.xlu0 %1832, %v1265
      %v1834 = vpop.permute.xlu0 %1833
      %v1844 = vrot.slane %v1810, 7
      %v1845 = vsel %vm788, %v1844, %v1807
      %v1846 = vrot.slane %v1813, 6
      %v1847 = vsel %vm790, %v1846, %v1845
      %v1848 = vrot.slane %v1816, 5
      %v1849 = vsel %vm792, %v1848, %v1847
      %v1850 = vrot.slane %v1819, 4
      %v1851 = vsel %vm794, %v1850, %v1849
      %v1852 = vrot.slane %v1822, 3
      %v1853 = vsel %vm796, %v1852, %v1851
      %v1854 = vrot.slane %v1825, 2
      %v1855 = vsel %vm798, %v1854, %v1853
      %v1856 = vrot.slane %v1828, 1
      %v1857 = vsel %vm800, %v1856, %v1855
      %v1859 = vmul.f32 %v1834, %v1857
      %1860 = vset.pattern.permute.xlu0 1
      %1861 = vperm.xlu0 %1860, %v1265
      %v1862 = vpop.permute.xlu0 %1861
      %1864 = vrot.lane.b32.xlu0 %v1857, 64
      %v1865 = vpop.permute.xlu0 %1864
      %v1867 = vmul.f32 %v1862, %v1865
      %v1868 = vadd.f32 %v1859, %v1867
      %1869 = vset.pattern.permute.xlu0 2
      %1870 = vperm.xlu0 %1869, %v1265
      %v1871 = vpop.permute.xlu0 %1870
      %v1881 = vrot.slane %v1811, 7
      %v1882 = vsel %vm788, %v1881, %v1808
      %v1883 = vrot.slane %v1814, 6
      %v1884 = vsel %vm790, %v1883, %v1882
      %v1885 = vrot.slane %v1817, 5
      %v1886 = vsel %vm792, %v1885, %v1884
      %v1887 = vrot.slane %v1820, 4
      %v1888 = vsel %vm794, %v1887, %v1886
      %v1889 = vrot.slane %v1823, 3
      %v1890 = vsel %vm796, %v1889, %v1888
      %v1891 = vrot.slane %v1826, 2
      %v1892 = vsel %vm798, %v1891, %v1890
      %v1893 = vrot.slane %v1829, 1
      %v1894 = vsel %vm800, %v1893, %v1892
      %v1896 = vmul.f32 %v1871, %v1894
      %v1897 = vadd.f32 %v1868, %v1896
      %1898 = vset.pattern.permute.xlu0 3
      %1899 = vperm.xlu0 %1898, %v1265
      %v1900 = vpop.permute.xlu0 %1899
      %1902 = vrot.lane.b32.xlu0 %v1894, 64
      %v1903 = vpop.permute.xlu0 %1902
      %v1905 = vmul.f32 %v1900, %v1903
      %v1906 = vadd.f32 %v1897, %v1905
      %1907 = vset.pattern.permute.xlu0 4
      %1908 = vperm.xlu0 %1907, %v1265
      %v1909 = vpop.permute.xlu0 %1908
      %v1919 = vrot.slane %v1812, 7
      %v1920 = vsel %vm788, %v1919, %v1809
      %v1921 = vrot.slane %v1815, 6
      %v1922 = vsel %vm790, %v1921, %v1920
      %v1923 = vrot.slane %v1818, 5
      %v1924 = vsel %vm792, %v1923, %v1922
      %v1925 = vrot.slane %v1821, 4
      %v1926 = vsel %vm794, %v1925, %v1924
      %v1927 = vrot.slane %v1824, 3
      %v1928 = vsel %vm796, %v1927, %v1926
      %v1929 = vrot.slane %v1827, 2
      %v1930 = vsel %vm798, %v1929, %v1928
      %v1931 = vrot.slane %v1830, 1
      %v1932 = vsel %vm800, %v1931, %v1930
      %v1934 = vmul.f32 %v1909, %v1932
      %v1935 = vadd.f32 %v1906, %v1934
      %vm1960 = vcmask 1046528
      %v1961 = vrot.slane %v564, 1
      %v1962 = vrot.slane %v565, 1
      %v1963 = vsel %vm1960, %v1961, %v1962
      %v1964 = vrot.slane %v566, 1
      %v1965 = vsel %vm1960, %v1962, %v1964
      %v1966 = vrot.slane %v568, 1
      %v1967 = vrot.slane %v569, 1
      %v1968 = vsel %vm1960, %v1966, %v1967
      %v1969 = vrot.slane %v570, 1
      %v1970 = vsel %vm1960, %v1967, %v1969
      %v1971 = vrot.slane %v572, 1
      %v1972 = vrot.slane %v573, 1
      %v1973 = vsel %vm1960, %v1971, %v1972
      %v1974 = vrot.slane %v574, 1
      %v1975 = vsel %vm1960, %v1972, %v1974
      %v1976 = vrot.slane %v576, 1
      %v1977 = vrot.slane %v577, 1
      %v1978 = vsel %vm1960, %v1976, %v1977
      %v1979 = vrot.slane %v578, 1
      %v1980 = vsel %vm1960, %v1977, %v1979
      %v1981 = vrot.slane %v580, 1
      %v1982 = vrot.slane %v581, 1
      %v1983 = vsel %vm1960, %v1981, %v1982
      %v1984 = vrot.slane %v582, 1
      %v1985 = vsel %vm1960, %v1982, %v1984
      %v1986 = vrot.slane %v584, 1
      %v1987 = vrot.slane %v585, 1
      %v1988 = vsel %vm1960, %v1986, %v1987
      %v1989 = vrot.slane %v586, 1
      %v1990 = vsel %vm1960, %v1987, %v1989
      %v1991 = vrot.slane %v588, 1
      %v1992 = vrot.slane %v589, 1
      %v1993 = vsel %vm1960, %v1991, %v1992
      %v1994 = vrot.slane %v590, 1
      %v1995 = vsel %vm1960, %v1992, %v1994
      %v1996 = vrot.slane %v592, 1
      %v1997 = vrot.slane %v593, 1
      %v1998 = vsel %vm1960, %v1996, %v1997
      %v1999 = vrot.slane %v594, 1
      %v2000 = vsel %vm1960, %v1997, %v1999
      %v2017 = vpack.c.bf16 %v1965, %v1963
      %v2018 = vpack.c.bf16 %v1970, %v1968
      %v2019 = vpack.c.bf16 %v1975, %v1973
      %v2020 = vpack.c.bf16 %v1980, %v1978
      %v2021 = vpack.c.bf16 %v1985, %v1983
      %v2022 = vpack.c.bf16 %v1990, %v1988
      %v2023 = vpack.c.bf16 %v1995, %v1993
      %v2024 = vpack.c.bf16 %v2000, %v1998
      %2033 = vrot.lane.b32.xlu0 %v2017, 32
      %v2034 = vpop.permute.xlu0 %2033
      %2035 = vrot.lane.b32.xlu0 %v2018, 32
      %v2036 = vpop.permute.xlu0 %2035
      %2037 = vrot.lane.b32.xlu0 %v2019, 32
      %v2038 = vpop.permute.xlu0 %2037
      %2039 = vrot.lane.b32.xlu0 %v2020, 32
      %v2040 = vpop.permute.xlu0 %2039
      %2041 = vrot.lane.b32.xlu0 %v2021, 32
      %v2042 = vpop.permute.xlu0 %2041
      %2043 = vrot.lane.b32.xlu0 %v2022, 32
      %v2044 = vpop.permute.xlu0 %2043
      %2045 = vrot.lane.b32.xlu0 %v2023, 32
      %v2046 = vpop.permute.xlu0 %2045
      %2047 = vrot.lane.b32.xlu0 %v2024, 32
      %v2048 = vpop.permute.xlu0 %2047
      %v2050 = vsel %vm619, %v1269, %v2034
      %v2052 = vsel %vm619, %v1270, %v2036
      %v2054 = vsel %vm619, %v1271, %v2038
      %v2056 = vsel %vm619, %v1272, %v2040
      %v2058 = vsel %vm619, %v1273, %v2042
      %v2060 = vsel %vm619, %v1274, %v2044
      %v2062 = vsel %vm619, %v1275, %v2046
      %v2064 = vsel %vm619, %v1276, %v2048
      %v2065 = vld [vmem:[%s11] sm:$0xff]
      %v2066 = vld [vmem:[%s11 + $0x8] sm:$0xf]
      %v2067 = vld [vmem:[%s11 + $0xc] sm:$0xff]
      %v2068 = vld [vmem:[%s11 + $0x14] sm:$0xf]
      %v2069 = vld [vmem:[%s11 + $0x18] sm:$0xff]
      %v2070 = vld [vmem:[%s11 + $0x20] sm:$0xf]
      %v2071 = vld [vmem:[%s11 + $0x24] sm:$0xff]
      %v2072 = vld [vmem:[%s11 + $0x2c] sm:$0xf]
      %v2073 = vld [vmem:[%s11 + $0x30] sm:$0xff]
      %v2074 = vld [vmem:[%s11 + $0x38] sm:$0xf]
      %v2075 = vld [vmem:[%s11 + $0x3c] sm:$0xff]
      %v2076 = vld [vmem:[%s11 + $0x44] sm:$0xf]
      %v2077 = vld [vmem:[%s11 + $0x48] sm:$0xff]
      %v2078 = vld [vmem:[%s11 + $0x50] sm:$0xf]
      %v2079 = vld [vmem:[%s11 + $0x54] sm:$0xff]
      %v2080 = vld [vmem:[%s11 + $0x5c] sm:$0xf]
      %v2097 = vunpack.c.l.b16 %v2065
      %v2098 = vunpack.c.h.b16 %v2065
      %v2099 = vunpack.c.l.b16 %v2066
      %v2100 = vunpack.c.l.b16 %v2067
      %v2101 = vunpack.c.h.b16 %v2067
      %v2102 = vunpack.c.l.b16 %v2068
      %v2103 = vunpack.c.l.b16 %v2069
      %v2104 = vunpack.c.h.b16 %v2069
      %v2105 = vunpack.c.l.b16 %v2070
      %v2106 = vunpack.c.l.b16 %v2071
      %v2107 = vunpack.c.h.b16 %v2071
      %v2108 = vunpack.c.l.b16 %v2072
      %v2109 = vunpack.c.l.b16 %v2073
      %v2110 = vunpack.c.h.b16 %v2073
      %v2111 = vunpack.c.l.b16 %v2074
      %v2112 = vunpack.c.l.b16 %v2075
      %v2113 = vunpack.c.h.b16 %v2075
      %v2114 = vunpack.c.l.b16 %v2076
      %v2115 = vunpack.c.l.b16 %v2077
      %v2116 = vunpack.c.h.b16 %v2077
      %v2117 = vunpack.c.l.b16 %v2078
      %v2118 = vunpack.c.l.b16 %v2079
      %v2119 = vunpack.c.h.b16 %v2079
      %v2120 = vunpack.c.l.b16 %v2080
      %v2121 = vpack.c.b16 %v2100, %v2097
      %v2122 = vpack.c.b16 %v2101, %v2098
      %v2123 = vpack.c.b16 %v2102, %v2099
      %v2124 = vpack.c.b16 %v2106, %v2103
      %v2125 = vpack.c.b16 %v2107, %v2104
      %v2126 = vpack.c.b16 %v2108, %v2105
      %v2127 = vpack.c.b16 %v2112, %v2109
      %v2128 = vpack.c.b16 %v2113, %v2110
      %v2129 = vpack.c.b16 %v2114, %v2111
      %v2130 = vpack.c.b16 %v2118, %v2115
      %v2131 = vpack.c.b16 %v2119, %v2116
      %v2132 = vpack.c.b16 %v2120, %v2117
      %v2145 = vsel %vm1619, %v2050, 0
      %v2147 = vsel %vm1619, %v2052, 0
      %v2149 = vsel %vm1619, %v2054, 0
      %v2151 = vsel %vm1619, %v2056, 0
      %v2153 = vsel %vm1619, %v2058, 0
      %v2155 = vsel %vm1619, %v2060, 0
      %v2157 = vsel %vm1619, %v2062, 0
      %v2159 = vsel %vm1619, %v2064, 0
      %2161 = vmatprep.subr.bf16.mxu0 %v2122
      %2162 = vmatpush1.bf16.msra.mxu0 %v2121
      %2163 = vmatprep.subr.bf16.mxu0 %v2125
      %2164 = vmatpush1.bf16.msra.mxu0 %v2124
      %2165 = vmatprep.subr.bf16.mxu0 %v2128
      %2166 = vmatpush1.bf16.msra.mxu0 %v2127
      %2167 = vmatprep.subr.bf16.mxu0 %v2131
      %2168 = vmatpush1.bf16.msra.mxu0 %v2130
      %2169 = vmatprep.subr.bf16.mxu0 0
      %2170 = vmatpush1.bf16.msra.mxu0 0
      %2171 = vmatprep.subr.bf16.mxu0 0
      %2172 = vmatpush1.bf16.msra.mxu0 0
      %2173 = vmatprep.subr.bf16.mxu0 0
      %2174 = vmatpush1.bf16.msra.mxu0 0
      %2175 = vmatprep.subr.bf16.mxu0 0
      %2176 = vmatpush1.bf16.msra.mxu0 0
      %2177 = vmatprep.subr.bf16.mxu0 0
      %2178 = vmatpush1.bf16.msra.mxu0 0
      %2179 = vmatprep.subr.bf16.mxu0 0
      %2180 = vmatpush1.bf16.msra.mxu0 0
      %2181 = vmatprep.subr.bf16.mxu0 0
      %2182 = vmatpush1.bf16.msra.mxu0 0
      %2183 = vmatprep.subr.bf16.mxu0 0
      %2184 = vmatpush1.bf16.msra.mxu0 0
      %2185 = vmatprep.subr.bf16.mxu0 0
      %2186 = vmatpush1.bf16.msra.mxu0 0
      %2187 = vmatprep.subr.bf16.mxu0 0
      %2188 = vmatpush1.bf16.msra.mxu0 0
      %2189 = vmatprep.subr.bf16.mxu0 0
      %2190 = vmatpush1.bf16.msra.mxu0 0
      %2191 = vmatprep.subr.bf16.mxu0 0
      %2192 = vmatpush1.bf16.msra.mxu0 0
      %2193 = vmatprep.mubr.bf16.mxu0 0
      %2194 = vmatmul.mubr.bf16.gmra.mrb[0].mxu0 %v2145
      %v2195 = vpop.f32.mrb[0].mxu0
      %v2196 = vadd.f32 0.0, %v2195
      %v2197 = vpop.f32.mrb[0].mxu0
      %v2198 = vadd.f32 0.0, %v2197
      %v2199 = vpop.f32.mrb[0].mxu0
      %v2200 = vadd.f32 0.0, %v2199
      %v2201 = vpop.f32.mrb[0].mxu0
      %v2202 = vadd.f32 0.0, %v2201
      %2203 = vmatprep.mubr.bf16.mxu0 0
      %2204 = vmatmul.mubr.bf16.gmra.mrb[0].mxu0 %v2147
      %v2205 = vpop.f32.mrb[0].mxu0
      %v2206 = vadd.f32 0.0, %v2205
      %v2207 = vpop.f32.mrb[0].mxu0
      %v2208 = vadd.f32 0.0, %v2207
      %v2209 = vpop.f32.mrb[0].mxu0
      %v2210 = vadd.f32 0.0, %v2209
      %v2211 = vpop.f32.mrb[0].mxu0
      %v2212 = vadd.f32 0.0, %v2211
      %2213 = vmatprep.mubr.bf16.mxu0 0
      %2214 = vmatmul.mubr.bf16.gmra.mrb[0].mxu0 %v2149
      %v2215 = vpop.f32.mrb[0].mxu0
      %v2216 = vadd.f32 0.0, %v2215
      %v2217 = vpop.f32.mrb[0].mxu0
      %v2218 = vadd.f32 0.0, %v2217
      %v2219 = vpop.f32.mrb[0].mxu0
      %v2220 = vadd.f32 0.0, %v2219
      %v2221 = vpop.f32.mrb[0].mxu0
      %v2222 = vadd.f32 0.0, %v2221
      %2223 = vmatprep.mubr.bf16.mxu0 0
      %2224 = vmatmul.mubr.bf16.gmra.mrb[0].mxu0 %v2151
      %v2225 = vpop.f32.mrb[0].mxu0
      %v2226 = vadd.f32 0.0, %v2225
      %v2227 = vpop.f32.mrb[0].mxu0
      %v2228 = vadd.f32 0.0, %v2227
      %v2229 = vpop.f32.mrb[0].mxu0
      %v2230 = vadd.f32 0.0, %v2229
      %v2231 = vpop.f32.mrb[0].mxu0
      %v2232 = vadd.f32 0.0, %v2231
      %2233 = vmatprep.mubr.bf16.mxu0 0
      %2234 = vmatmul.mubr.bf16.gmra.mrb[0].mxu0 %v2153
      %v2235 = vpop.f32.mrb[0].mxu0
      %v2236 = vadd.f32 0.0, %v2235
      %v2237 = vpop.f32.mrb[0].mxu0
      %v2238 = vadd.f32 0.0, %v2237
      %v2239 = vpop.f32.mrb[0].mxu0
      %v2240 = vadd.f32 0.0, %v2239
      %v2241 = vpop.f32.mrb[0].mxu0
      %v2242 = vadd.f32 0.0, %v2241
      %2243 = vmatprep.mubr.bf16.mxu0 0
      %2244 = vmatmul.mubr.bf16.gmra.mrb[0].mxu0 %v2155
      %v2245 = vpop.f32.mrb[0].mxu0
      %v2246 = vadd.f32 0.0, %v2245
      %v2247 = vpop.f32.mrb[0].mxu0
      %v2248 = vadd.f32 0.0, %v2247
      %v2249 = vpop.f32.mrb[0].mxu0
      %v2250 = vadd.f32 0.0, %v2249
      %v2251 = vpop.f32.mrb[0].mxu0
      %v2252 = vadd.f32 0.0, %v2251
      %2253 = vmatprep.mubr.bf16.mxu0 0
      %2254 = vmatmul.mubr.bf16.gmra.mrb[0].mxu0 %v2157
      %v2255 = vpop.f32.mrb[0].mxu0
      %v2256 = vadd.f32 0.0, %v2255
      %v2257 = vpop.f32.mrb[0].mxu0
      %v2258 = vadd.f32 0.0, %v2257
      %v2259 = vpop.f32.mrb[0].mxu0
      %v2260 = vadd.f32 0.0, %v2259
      %v2261 = vpop.f32.mrb[0].mxu0
      %v2262 = vadd.f32 0.0, %v2261
      %2263 = vmatprep.mubr.bf16.mxu0 0
      %2264 = vmatmul.mubr.bf16.gmra.mrb[0].mxu0 %v2159
      %v2265 = vpop.f32.mrb[0].mxu0
      %v2266 = vadd.f32 0.0, %v2265
      %v2267 = vpop.f32.mrb[0].mxu0
      %v2268 = vadd.f32 0.0, %v2267
      %v2269 = vpop.f32.mrb[0].mxu0
      %v2270 = vadd.f32 0.0, %v2269
      %v2271 = vpop.f32.mrb[0].mxu0
      %v2272 = vadd.f32 0.0, %v2271
      %2273 = vdwg.mxu0
      %2274 = vmatprep.subr.bf16.mxu0 0
      %2275 = vmatpush1.bf16.msra.mxu0 %v2123
      %2276 = vmatprep.subr.bf16.mxu0 0
      %2277 = vmatpush1.bf16.msra.mxu0 %v2126
      %2278 = vmatprep.subr.bf16.mxu0 0
      %2279 = vmatpush1.bf16.msra.mxu0 %v2129
      %2280 = vmatprep.subr.bf16.mxu0 0
      %2281 = vmatpush1.bf16.msra.mxu0 %v2132
      %2282 = vmatprep.subr.bf16.mxu0 0
      %2283 = vmatpush1.bf16.msra.mxu0 0
      %2284 = vmatprep.subr.bf16.mxu0 0
      %2285 = vmatpush1.bf16.msra.mxu0 0
      %2286 = vmatprep.subr.bf16.mxu0 0
      %2287 = vmatpush1.bf16.msra.mxu0 0
      %2288 = vmatprep.subr.bf16.mxu0 0
      %2289 = vmatpush1.bf16.msra.mxu0 0
      %2290 = vmatprep.subr.bf16.mxu0 0
      %2291 = vmatpush1.bf16.msra.mxu0 0
      %2292 = vmatprep.subr.bf16.mxu0 0
      %2293 = vmatpush1.bf16.msra.mxu0 0
      %2294 = vmatprep.subr.bf16.mxu0 0
      %2295 = vmatpush1.bf16.msra.mxu0 0
      %2296 = vmatprep.subr.bf16.mxu0 0
      %2297 = vmatpush1.bf16.msra.mxu0 0
      %2298 = vmatprep.subr.bf16.mxu0 0
      %2299 = vmatpush1.bf16.msra.mxu0 0
      %2300 = vmatprep.subr.bf16.mxu0 0
      %2301 = vmatpush1.bf16.msra.mxu0 0
      %2302 = vmatprep.subr.bf16.mxu0 0
      %2303 = vmatpush1.bf16.msra.mxu0 0
      %2304 = vmatprep.subr.bf16.mxu0 0
      %2305 = vmatpush1.bf16.msra.mxu0 0
      %2306 = vmatprep.mubr.bf16.mxu0 0
      %2307 = vmatmul.mubr.bf16.gmra.mrb[0].mxu0 %v2145
      %v2308 = vpop.f32.mrb[0].mxu0
      %v2309 = vadd.f32 0.0, %v2308
      %v2310 = vpop.f32.mrb[0].mxu0
      %v2311 = vpop.f32.mrb[0].mxu0
      %v2312 = vadd.f32 0.0, %v2311
      %v2313 = vpop.f32.mrb[0].mxu0
      %2314 = vmatprep.mubr.bf16.mxu0 0
      %2315 = vmatmul.mubr.bf16.gmra.mrb[0].mxu0 %v2147
      %v2316 = vpop.f32.mrb[0].mxu0
      %v2317 = vadd.f32 0.0, %v2316
      %v2318 = vpop.f32.mrb[0].mxu0
      %v2319 = vpop.f32.mrb[0].mxu0
      %v2320 = vadd.f32 0.0, %v2319
      %v2321 = vpop.f32.mrb[0].mxu0
      %2322 = vmatprep.mubr.bf16.mxu0 0
      %2323 = vmatmul.mubr.bf16.gmra.mrb[0].mxu0 %v2149
      %v2324 = vpop.f32.mrb[0].mxu0
      %v2325 = vadd.f32 0.0, %v2324
      %v2326 = vpop.f32.mrb[0].mxu0
      %v2327 = vpop.f32.mrb[0].mxu0
      %v2328 = vadd.f32 0.0, %v2327
      %v2329 = vpop.f32.mrb[0].mxu0
      %2330 = vmatprep.mubr.bf16.mxu0 0
      %2331 = vmatmul.mubr.bf16.gmra.mrb[0].mxu0 %v2151
      %v2332 = vpop.f32.mrb[0].mxu0
      %v2333 = vadd.f32 0.0, %v2332
      %v2334 = vpop.f32.mrb[0].mxu0
      %v2335 = vpop.f32.mrb[0].mxu0
      %v2336 = vadd.f32 0.0, %v2335
      %v2337 = vpop.f32.mrb[0].mxu0
      %2338 = vmatprep.mubr.bf16.mxu0 0
      %2339 = vmatmul.mubr.bf16.gmra.mrb[0].mxu0 %v2153
      %v2340 = vpop.f32.mrb[0].mxu0
      %v2341 = vadd.f32 0.0, %v2340
      %v2342 = vpop.f32.mrb[0].mxu0
      %v2343 = vpop.f32.mrb[0].mxu0
      %v2344 = vadd.f32 0.0, %v2343
      %v2345 = vpop.f32.mrb[0].mxu0
      %2346 = vmatprep.mubr.bf16.mxu0 0
      %2347 = vmatmul.mubr.bf16.gmra.mrb[0].mxu0 %v2155
      %v2348 = vpop.f32.mrb[0].mxu0
      %v2349 = vadd.f32 0.0, %v2348
      %v2350 = vpop.f32.mrb[0].mxu0
      %v2351 = vpop.f32.mrb[0].mxu0
      %v2352 = vadd.f32 0.0, %v2351
      %v2353 = vpop.f32.mrb[0].mxu0
      %2354 = vmatprep.mubr.bf16.mxu0 0
      %2355 = vmatmul.mubr.bf16.gmra.mrb[0].mxu0 %v2157
      %v2356 = vpop.f32.mrb[0].mxu0
      %v2357 = vadd.f32 0.0, %v2356
      %v2358 = vpop.f32.mrb[0].mxu0
      %v2359 = vpop.f32.mrb[0].mxu0
      %v2360 = vadd.f32 0.0, %v2359
      %v2361 = vpop.f32.mrb[0].mxu0
      %2362 = vmatprep.mubr.bf16.mxu0 0
      %2363 = vmatmul.mubr.bf16.gmra.mrb[0].mxu0 %v2159
      %v2364 = vpop.f32.mrb[0].mxu0
      %v2365 = vadd.f32 0.0, %v2364
      %v2366 = vpop.f32.mrb[0].mxu0
      %v2367 = vpop.f32.mrb[0].mxu0
      %v2368 = vadd.f32 0.0, %v2367
      %v2369 = vpop.f32.mrb[0].mxu0
      %2370 = vdwg.mxu0
      %vm2371 = vcmp.lt.s32.totalorder %v1267, 15
      %vm2372 = vcmp.lt.s32.totalorder %v1268, 15
      %v2373 = vsel %vm2371, 1, 0
      %v2374 = vsel %vm2372, 1, 0
      %vm2375 = vcmp.eq.s32.totalorder %v2373, 1
      %vm2376 = vcmp.eq.s32.totalorder %v2374, 1
      %v2377 = vsel %vm2375, %v2196, -inf
      %v2378 = vsel %vm2375, %v2198, -inf
      %v2379 = vsel %vm2375, %v2309, -inf
      %v2380 = vsel %vm2376, %v2200, -inf
      %v2381 = vsel %vm2376, %v2202, -inf
      %v2382 = vsel %vm2376, %v2312, -inf
      %v2383 = vsel %vm2375, %v2206, -inf
      %v2384 = vsel %vm2375, %v2208, -inf
      %v2385 = vsel %vm2375, %v2317, -inf
      %v2386 = vsel %vm2376, %v2210, -inf
      %v2387 = vsel %vm2376, %v2212, -inf
      %v2388 = vsel %vm2376, %v2320, -inf
      %v2389 = vsel %vm2375, %v2216, -inf
      %v2390 = vsel %vm2375, %v2218, -inf
      %v2391 = vsel %vm2375, %v2325, -inf
      %v2392 = vsel %vm2376, %v2220, -inf
      %v2393 = vsel %vm2376, %v2222, -inf
      %v2394 = vsel %vm2376, %v2328, -inf
      %v2395 = vsel %vm2375, %v2226, -inf
      %v2396 = vsel %vm2375, %v2228, -inf
      %v2397 = vsel %vm2375, %v2333, -inf
      %v2398 = vsel %vm2376, %v2230, -inf
      %v2399 = vsel %vm2376, %v2232, -inf
      %v2400 = vsel %vm2376, %v2336, -inf
      %v2401 = vsel %vm2375, %v2236, -inf
      %v2402 = vsel %vm2375, %v2238, -inf
      %v2403 = vsel %vm2375, %v2341, -inf
      %v2404 = vsel %vm2376, %v2240, -inf
      %v2405 = vsel %vm2376, %v2242, -inf
      %v2406 = vsel %vm2376, %v2344, -inf
      %v2407 = vsel %vm2375, %v2246, -inf
      %v2408 = vsel %vm2375, %v2248, -inf
      %v2409 = vsel %vm2375, %v2349, -inf
      %v2410 = vsel %vm2376, %v2250, -inf
      %v2411 = vsel %vm2376, %v2252, -inf
      %v2412 = vsel %vm2376, %v2352, -inf
      %v2413 = vsel %vm2375, %v2256, -inf
      %v2414 = vsel %vm2375, %v2258, -inf
      %v2415 = vsel %vm2375, %v2357, -inf
      %v2416 = vsel %vm2376, %v2260, -inf
      %v2417 = vsel %vm2376, %v2262, -inf
      %v2418 = vsel %vm2376, %v2360, -inf
      %v2419 = vsel %vm2375, %v2266, -inf
      %v2420 = vsel %vm2375, %v2268, -inf
      %v2421 = vsel %vm2375, %v2365, -inf
      %v2422 = vsel %vm2376, %v2270, -inf
      %v2423 = vsel %vm2376, %v2272, -inf
      %v2424 = vsel %vm2376, %v2368, -inf
      %v2425 = vmax.f32 %v2377, %v2380
      %v2426 = vrot.slane %v2425, 4
      %v2427 = vmax.f32 %v2425, %v2426
      %v2428 = vrot.slane %v2427, 2
      %v2429 = vmax.f32 %v2427, %v2428
      %v2430 = vrot.slane %v2429, 1
      %v2431 = vmax.f32 %v2429, %v2430
      %v2432 = vmax.f32 %v2378, %v2381
      %v2433 = vrot.slane %v2432, 4
      %v2434 = vmax.f32 %v2432, %v2433
      %v2435 = vrot.slane %v2434, 2
      %v2436 = vmax.f32 %v2434, %v2435
      %v2437 = vrot.slane %v2436, 1
      %v2438 = vmax.f32 %v2436, %v2437
      %v2439 = vsel %vm1619, %v2379, -inf
      %v2440 = vsel %vm1619, %v2382, -inf
      %v2441 = vmax.f32 %v2439, %v2440
      %v2442 = vrot.slane %v2441, 4
      %v2443 = vmax.f32 %v2441, %v2442
      %v2444 = vrot.slane %v2443, 2
      %v2445 = vmax.f32 %v2443, %v2444
      %v2446 = vrot.slane %v2445, 1
      %v2447 = vmax.f32 %v2445, %v2446
      %v2448 = vmax.f32 %v2383, %v2386
      %v2449 = vrot.slane %v2448, 4
      %v2450 = vmax.f32 %v2448, %v2449
      %v2451 = vrot.slane %v2450, 2
      %v2452 = vmax.f32 %v2450, %v2451
      %v2453 = vrot.slane %v2452, 1
      %v2454 = vmax.f32 %v2452, %v2453
      %v2455 = vmax.f32 %v2384, %v2387
      %v2456 = vrot.slane %v2455, 4
      %v2457 = vmax.f32 %v2455, %v2456
      %v2458 = vrot.slane %v2457, 2
      %v2459 = vmax.f32 %v2457, %v2458
      %v2460 = vrot.slane %v2459, 1
      %v2461 = vmax.f32 %v2459, %v2460
      %v2462 = vsel %vm1619, %v2385, -inf
      %v2463 = vsel %vm1619, %v2388, -inf
      %v2464 = vmax.f32 %v2462, %v2463
      %v2465 = vrot.slane %v2464, 4
      %v2466 = vmax.f32 %v2464, %v2465
      %v2467 = vrot.slane %v2466, 2
      %v2468 = vmax.f32 %v2466, %v2467
      %v2469 = vrot.slane %v2468, 1
      %v2470 = vmax.f32 %v2468, %v2469
      %v2471 = vmax.f32 %v2389, %v2392
      %v2472 = vrot.slane %v2471, 4
      %v2473 = vmax.f32 %v2471, %v2472
      %v2474 = vrot.slane %v2473, 2
      %v2475 = vmax.f32 %v2473, %v2474
      %v2476 = vrot.slane %v2475, 1
      %v2477 = vmax.f32 %v2475, %v2476
      %v2478 = vmax.f32 %v2390, %v2393
      %v2479 = vrot.slane %v2478, 4
      %v2480 = vmax.f32 %v2478, %v2479
      %v2481 = vrot.slane %v2480, 2
      %v2482 = vmax.f32 %v2480, %v2481
      %v2483 = vrot.slane %v2482, 1
      %v2484 = vmax.f32 %v2482, %v2483
      %v2485 = vsel %vm1619, %v2391, -inf
      %v2486 = vsel %vm1619, %v2394, -inf
      %v2487 = vmax.f32 %v2485, %v2486
      %v2488 = vrot.slane %v2487, 4
      %v2489 = vmax.f32 %v2487, %v2488
      %v2490 = vrot.slane %v2489, 2
      %v2491 = vmax.f32 %v2489, %v2490
      %v2492 = vrot.slane %v2491, 1
      %v2493 = vmax.f32 %v2491, %v2492
      %v2494 = vmax.f32 %v2395, %v2398
      %v2495 = vrot.slane %v2494, 4
      %v2496 = vmax.f32 %v2494, %v2495
      %v2497 = vrot.slane %v2496, 2
      %v2498 = vmax.f32 %v2496, %v2497
      %v2499 = vrot.slane %v2498, 1
      %v2500 = vmax.f32 %v2498, %v2499
      %v2501 = vmax.f32 %v2396, %v2399
      %v2502 = vrot.slane %v2501, 4
      %v2503 = vmax.f32 %v2501, %v2502
      %v2504 = vrot.slane %v2503, 2
      %v2505 = vmax.f32 %v2503, %v2504
      %v2506 = vrot.slane %v2505, 1
      %v2507 = vmax.f32 %v2505, %v2506
      %v2508 = vsel %vm1619, %v2397, -inf
      %v2509 = vsel %vm1619, %v2400, -inf
      %v2510 = vmax.f32 %v2508, %v2509
      %v2511 = vrot.slane %v2510, 4
      %v2512 = vmax.f32 %v2510, %v2511
      %v2513 = vrot.slane %v2512, 2
      %v2514 = vmax.f32 %v2512, %v2513
      %v2515 = vrot.slane %v2514, 1
      %v2516 = vmax.f32 %v2514, %v2515
      %v2517 = vmax.f32 %v2401, %v2404
      %v2518 = vrot.slane %v2517, 4
      %v2519 = vmax.f32 %v2517, %v2518
      %v2520 = vrot.slane %v2519, 2
      %v2521 = vmax.f32 %v2519, %v2520
      %v2522 = vrot.slane %v2521, 1
      %v2523 = vmax.f32 %v2521, %v2522
      %v2524 = vmax.f32 %v2402, %v2405
      %v2525 = vrot.slane %v2524, 4
      %v2526 = vmax.f32 %v2524, %v2525
      %v2527 = vrot.slane %v2526, 2
      %v2528 = vmax.f32 %v2526, %v2527
      %v2529 = vrot.slane %v2528, 1
      %v2530 = vmax.f32 %v2528, %v2529
      %v2531 = vsel %vm1619, %v2403, -inf
      %v2532 = vsel %vm1619, %v2406, -inf
      %v2533 = vmax.f32 %v2531, %v2532
      %v2534 = vrot.slane %v2533, 4
      %v2535 = vmax.f32 %v2533, %v2534
      %v2536 = vrot.slane %v2535, 2
      %v2537 = vmax.f32 %v2535, %v2536
      %v2538 = vrot.slane %v2537, 1
      %v2539 = vmax.f32 %v2537, %v2538
      %v2540 = vmax.f32 %v2407, %v2410
      %v2541 = vrot.slane %v2540, 4
      %v2542 = vmax.f32 %v2540, %v2541
      %v2543 = vrot.slane %v2542, 2
      %v2544 = vmax.f32 %v2542, %v2543
      %v2545 = vrot.slane %v2544, 1
      %v2546 = vmax.f32 %v2544, %v2545
      %v2547 = vmax.f32 %v2408, %v2411
      %v2548 = vrot.slane %v2547, 4
      %v2549 = vmax.f32 %v2547, %v2548
      %v2550 = vrot.slane %v2549, 2
      %v2551 = vmax.f32 %v2549, %v2550
      %v2552 = vrot.slane %v2551, 1
      %v2553 = vmax.f32 %v2551, %v2552
      %v2554 = vsel %vm1619, %v2409, -inf
      %v2555 = vsel %vm1619, %v2412, -inf
      %v2556 = vmax.f32 %v2554, %v2555
      %v2557 = vrot.slane %v2556, 4
      %v2558 = vmax.f32 %v2556, %v2557
      %v2559 = vrot.slane %v2558, 2
      %v2560 = vmax.f32 %v2558, %v2559
      %v2561 = vrot.slane %v2560, 1
      %v2562 = vmax.f32 %v2560, %v2561
      %v2563 = vmax.f32 %v2413, %v2416
      %v2564 = vrot.slane %v2563, 4
      %v2565 = vmax.f32 %v2563, %v2564
      %v2566 = vrot.slane %v2565, 2
      %v2567 = vmax.f32 %v2565, %v2566
      %v2568 = vrot.slane %v2567, 1
      %v2569 = vmax.f32 %v2567, %v2568
      %v2570 = vmax.f32 %v2414, %v2417
      %v2571 = vrot.slane %v2570, 4
      %v2572 = vmax.f32 %v2570, %v2571
      %v2573 = vrot.slane %v2572, 2
      %v2574 = vmax.f32 %v2572, %v2573
      %v2575 = vrot.slane %v2574, 1
      %v2576 = vmax.f32 %v2574, %v2575
      %v2577 = vsel %vm1619, %v2415, -inf
      %v2578 = vsel %vm1619, %v2418, -inf
      %v2579 = vmax.f32 %v2577, %v2578
      %v2580 = vrot.slane %v2579, 4
      %v2581 = vmax.f32 %v2579, %v2580
      %v2582 = vrot.slane %v2581, 2
      %v2583 = vmax.f32 %v2581, %v2582
      %v2584 = vrot.slane %v2583, 1
      %v2585 = vmax.f32 %v2583, %v2584
      %v2586 = vmax.f32 %v2419, %v2422
      %v2587 = vrot.slane %v2586, 4
      %v2588 = vmax.f32 %v2586, %v2587
      %v2589 = vrot.slane %v2588, 2
      %v2590 = vmax.f32 %v2588, %v2589
      %v2591 = vrot.slane %v2590, 1
      %v2592 = vmax.f32 %v2590, %v2591
      %v2593 = vmax.f32 %v2420, %v2423
      %v2594 = vrot.slane %v2593, 4
      %v2595 = vmax.f32 %v2593, %v2594
      %v2596 = vrot.slane %v2595, 2
      %v2597 = vmax.f32 %v2595, %v2596
      %v2598 = vrot.slane %v2597, 1
      %v2599 = vmax.f32 %v2597, %v2598
      %v2600 = vsel %vm1619, %v2421, -inf
      %v2601 = vsel %vm1619, %v2424, -inf
      %v2602 = vmax.f32 %v2600, %v2601
      %v2603 = vrot.slane %v2602, 4
      %v2604 = vmax.f32 %v2602, %v2603
      %v2605 = vrot.slane %v2604, 2
      %v2606 = vmax.f32 %v2604, %v2605
      %v2607 = vrot.slane %v2606, 1
      %v2608 = vmax.f32 %v2606, %v2607
      %s2609 = scalar_lea.vmem %s15, 3
      %v2610 = vld [vmem:[%s2609] sm:$0x7]
      %v2612 = vlaneseq
      %v2613 = vshrl.u32 %v2612, 7
      %v2614 = vsub.s32 0, %v2613
      %v2615 = vrot.slane %v2610, %v2614
      %v2616 = vlaneseq
      %v2617 = vshrl.u32 %v2616, 7
      %v2618 = vsub.s32 1, %v2617
      %v2619 = vrot.slane %v2610, %v2618
      %v2620 = vlaneseq
      %v2621 = vshrl.u32 %v2620, 7
      %v2622 = vsub.s32 2, %v2621
      %v2623 = vrot.slane %v2610, %v2622
      %v2627 = vadd.f32 %v2431, %v2615
      %v2628 = vadd.f32 %v2438, %v2619
      %v2629 = vadd.f32 %v2447, %v2623
      %v2630 = vadd.f32 %v2454, %v2615
      %v2631 = vadd.f32 %v2461, %v2619
      %v2632 = vadd.f32 %v2470, %v2623
      %v2633 = vadd.f32 %v2477, %v2615
      %v2634 = vadd.f32 %v2484, %v2619
      %v2635 = vadd.f32 %v2493, %v2623
      %v2636 = vadd.f32 %v2500, %v2615
      %v2637 = vadd.f32 %v2507, %v2619
      %v2638 = vadd.f32 %v2516, %v2623
      %v2639 = vadd.f32 %v2523, %v2615
      %v2640 = vadd.f32 %v2530, %v2619
      %v2641 = vadd.f32 %v2539, %v2623
      %v2642 = vadd.f32 %v2546, %v2615
      %v2643 = vadd.f32 %v2553, %v2619
      %v2644 = vadd.f32 %v2562, %v2623
      %v2645 = vadd.f32 %v2569, %v2615
      %v2646 = vadd.f32 %v2576, %v2619
      %v2647 = vadd.f32 %v2585, %v2623
      %v2648 = vadd.f32 %v2592, %v2615
      %v2649 = vadd.f32 %v2599, %v2619
      %v2650 = vadd.f32 %v2608, %v2623
      %v2659 = vrot.slane %v2630, 7
      %v2660 = vsel %vm788, %v2659, %v2627
      %v2661 = vrot.slane %v2633, 6
      %v2662 = vsel %vm790, %v2661, %v2660
      %v2663 = vrot.slane %v2636, 5
      %v2664 = vsel %vm792, %v2663, %v2662
      %v2665 = vrot.slane %v2639, 4
      %v2666 = vsel %vm794, %v2665, %v2664
      %v2667 = vrot.slane %v2642, 3
      %v2668 = vsel %vm796, %v2667, %v2666
      %v2669 = vrot.slane %v2645, 2
      %v2670 = vsel %vm798, %v2669, %v2668
      %v2671 = vrot.slane %v2648, 1
      %v2672 = vsel %vm800, %v2671, %v2670
      %v2674 = vmul.f32 %v1834, %v2672
      %2675 = vrot.lane.b32.xlu0 %v2672, 64
      %v2676 = vpop.permute.xlu0 %2675
      %v2678 = vmul.f32 %v1862, %v2676
      %v2679 = vadd.f32 %v2674, %v2678
      %v2688 = vrot.slane %v2631, 7
      %v2689 = vsel %vm788, %v2688, %v2628
      %v2690 = vrot.slane %v2634, 6
      %v2691 = vsel %vm790, %v2690, %v2689
      %v2692 = vrot.slane %v2637, 5
      %v2693 = vsel %vm792, %v2692, %v2691
      %v2694 = vrot.slane %v2640, 4
      %v2695 = vsel %vm794, %v2694, %v2693
      %v2696 = vrot.slane %v2643, 3
      %v2697 = vsel %vm796, %v2696, %v2695
      %v2698 = vrot.slane %v2646, 2
      %v2699 = vsel %vm798, %v2698, %v2697
      %v2700 = vrot.slane %v2649, 1
      %v2701 = vsel %vm800, %v2700, %v2699
      %v2703 = vmul.f32 %v1871, %v2701
      %v2704 = vadd.f32 %v2679, %v2703
      %2705 = vrot.lane.b32.xlu0 %v2701, 64
      %v2706 = vpop.permute.xlu0 %2705
      %v2708 = vmul.f32 %v1900, %v2706
      %v2709 = vadd.f32 %v2704, %v2708
      %v2718 = vrot.slane %v2632, 7
      %v2719 = vsel %vm788, %v2718, %v2629
      %v2720 = vrot.slane %v2635, 6
      %v2721 = vsel %vm790, %v2720, %v2719
      %v2722 = vrot.slane %v2638, 5
      %v2723 = vsel %vm792, %v2722, %v2721
      %v2724 = vrot.slane %v2641, 4
      %v2725 = vsel %vm794, %v2724, %v2723
      %v2726 = vrot.slane %v2644, 3
      %v2727 = vsel %vm796, %v2726, %v2725
      %v2728 = vrot.slane %v2647, 2
      %v2729 = vsel %vm798, %v2728, %v2727
      %v2730 = vrot.slane %v2650, 1
      %v2731 = vsel %vm800, %v2730, %v2729
      %v2733 = vmul.f32 %v1909, %v2731
      %v2734 = vadd.f32 %v2709, %v2733
      %vm2735 = vcmask 1045504
      %v2736 = vrot.slane %v564, 2
      %v2737 = vrot.slane %v565, 2
      %v2738 = vsel %vm2735, %v2736, %v2737
      %v2739 = vrot.slane %v566, 2
      %v2740 = vsel %vm2735, %v2737, %v2739
      %v2741 = vrot.slane %v568, 2
      %v2742 = vrot.slane %v569, 2
      %v2743 = vsel %vm2735, %v2741, %v2742
      %v2744 = vrot.slane %v570, 2
      %v2745 = vsel %vm2735, %v2742, %v2744
      %v2746 = vrot.slane %v572, 2
      %v2747 = vrot.slane %v573, 2
      %v2748 = vsel %vm2735, %v2746, %v2747
      %v2749 = vrot.slane %v574, 2
      %v2750 = vsel %vm2735, %v2747, %v2749
      %v2751 = vrot.slane %v576, 2
      %v2752 = vrot.slane %v577, 2
      %v2753 = vsel %vm2735, %v2751, %v2752
      %v2754 = vrot.slane %v578, 2
      %v2755 = vsel %vm2735, %v2752, %v2754
      %v2756 = vrot.slane %v580, 2
      %v2757 = vrot.slane %v581, 2
      %v2758 = vsel %vm2735, %v2756, %v2757
      %v2759 = vrot.slane %v582, 2
      %v2760 = vsel %vm2735, %v2757, %v2759
      %v2761 = vrot.slane %v584, 2
      %v2762 = vrot.slane %v585, 2
      %v2763 = vsel %vm2735, %v2761, %v2762
      %v2764 = vrot.slane %v586, 2
      %v2765 = vsel %vm2735, %v2762, %v2764
      %v2766 = vrot.slane %v588, 2
      %v2767 = vrot.slane %v589, 2
      %v2768 = vsel %vm2735, %v2766, %v2767
      %v2769 = vrot.slane %v590, 2
      %v2770 = vsel %vm2735, %v2767, %v2769
      %v2771 = vrot.slane %v592, 2
      %v2772 = vrot.slane %v593, 2
      %v2773 = vsel %vm2735, %v2771, %v2772
      %v2774 = vrot.slane %v594, 2
      %v2775 = vsel %vm2735, %v2772, %v2774
      %v2792 = vpack.c.bf16 %v2740, %v2738
      %v2793 = vpack.c.bf16 %v2745, %v2743
      %v2794 = vpack.c.bf16 %v2750, %v2748
      %v2795 = vpack.c.bf16 %v2755, %v2753
      %v2796 = vpack.c.bf16 %v2760, %v2758
      %v2797 = vpack.c.bf16 %v2765, %v2763
      %v2798 = vpack.c.bf16 %v2770, %v2768
      %v2799 = vpack.c.bf16 %v2775, %v2773
      %2808 = vrot.lane.b32.xlu0 %v2792, 64
      %v2809 = vpop.permute.xlu0 %2808
      %2810 = vrot.lane.b32.xlu0 %v2793, 64
      %v2811 = vpop.permute.xlu0 %2810
      %2812 = vrot.lane.b32.xlu0 %v2794, 64
      %v2813 = vpop.permute.xlu0 %2812
      %2814 = vrot.lane.b32.xlu0 %v2795, 64
      %v2815 = vpop.permute.xlu0 %2814
      %2816 = vrot.lane.b32.xlu0 %v2796, 64
      %v2817 = vpop.permute.xlu0 %2816
      %2818 = vrot.lane.b32.xlu0 %v2797, 64
      %v2819 = vpop.permute.xlu0 %2818
      %2820 = vrot.lane.b32.xlu0 %v2798, 64
      %v2821 = vpop.permute.xlu0 %2820
      %2822 = vrot.lane.b32.xlu0 %v2799, 64
      %v2823 = vpop.permute.xlu0 %2822
      %v2825 = vsel %vm1619, %v2050, %v2809
      %v2827 = vsel %vm1619, %v2052, %v2811
      %v2829 = vsel %vm1619, %v2054, %v2813
      %v2831 = vsel %vm1619, %v2056, %v2815
      %v2833 = vsel %vm1619, %v2058, %v2817
      %v2835 = vsel %vm1619, %v2060, %v2819
      %v2837 = vsel %vm1619, %v2062, %v2821
      %v2839 = vsel %vm1619, %v2064, %v2823
      %v2840 = vld [vmem:[%s12] sm:$0xff]
      %v2841 = vld [vmem:[%s12 + $0x8] sm:$0xf]
      %v2842 = vld [vmem:[%s12 + $0xc] sm:$0xff]
      %v2843 = vld [vmem:[%s12 + $0x14] sm:$0xf]
      %v2844 = vld [vmem:[%s12 + $0x18] sm:$0xff]
      %v2845 = vld [vmem:[%s12 + $0x20] sm:$0xf]
      %v2846 = vld [vmem:[%s12 + $0x24] sm:$0xff]
      %v2847 = vld [vmem:[%s12 + $0x2c] sm:$0xf]
      %v2848 = vld [vmem:[%s12 + $0x30] sm:$0xff]
      %v2849 = vld [vmem:[%s12 + $0x38] sm:$0xf]
      %v2850 = vld [vmem:[%s12 + $0x3c] sm:$0xff]
      %v2851 = vld [vmem:[%s12 + $0x44] sm:$0xf]
      %v2852 = vld [vmem:[%s12 + $0x48] sm:$0xff]
      %v2853 = vld [vmem:[%s12 + $0x50] sm:$0xf]
      %v2854 = vld [vmem:[%s12 + $0x54] sm:$0xff]
      %v2855 = vld [vmem:[%s12 + $0x5c] sm:$0xf]
      %v2856 = vld [vmem:[%s12 + $0x60] sm:$0xff]
      %v2857 = vld [vmem:[%s12 + $0x68] sm:$0xf]
      %v2858 = vld [vmem:[%s12 + $0x6c] sm:$0xff]
      %v2859 = vld [vmem:[%s12 + $0x74] sm:$0xf]
      %v2860 = vld [vmem:[%s12 + $0x78] sm:$0xff]
      %v2861 = vld [vmem:[%s12 + $0x80] sm:$0xf]
      %v2862 = vld [vmem:[%s12 + $0x84] sm:$0xff]
      %v2863 = vld [vmem:[%s12 + $0x8c] sm:$0xf]
      %v2888 = vunpack.c.l.b16 %v2840
      %v2889 = vunpack.c.h.b16 %v2840
      %v2890 = vunpack.c.l.b16 %v2841
      %v2891 = vunpack.c.l.b16 %v2842
      %v2892 = vunpack.c.h.b16 %v2842
      %v2893 = vunpack.c.l.b16 %v2843
      %v2894 = vunpack.c.l.b16 %v2844
      %v2895 = vunpack.c.h.b16 %v2844
      %v2896 = vunpack.c.l.b16 %v2845
      %v2897 = vunpack.c.l.b16 %v2846
      %v2898 = vunpack.c.h.b16 %v2846
      %v2899 = vunpack.c.l.b16 %v2847
      %v2900 = vunpack.c.l.b16 %v2848
      %v2901 = vunpack.c.h.b16 %v2848
      %v2902 = vunpack.c.l.b16 %v2849
      %v2903 = vunpack.c.l.b16 %v2850
      %v2904 = vunpack.c.h.b16 %v2850
      %v2905 = vunpack.c.l.b16 %v2851
      %v2906 = vunpack.c.l.b16 %v2852
      %v2907 = vunpack.c.h.b16 %v2852
      %v2908 = vunpack.c.l.b16 %v2853
      %v2909 = vunpack.c.l.b16 %v2854
      %v2910 = vunpack.c.h.b16 %v2854
      %v2911 = vunpack.c.l.b16 %v2855
      %v2912 = vunpack.c.l.b16 %v2856
      %v2913 = vunpack.c.h.b16 %v2856
      %v2914 = vunpack.c.l.b16 %v2857
      %v2915 = vunpack.c.l.b16 %v2858
      %v2916 = vunpack.c.h.b16 %v2858
      %v2917 = vunpack.c.l.b16 %v2859
      %v2918 = vunpack.c.l.b16 %v2860
      %v2919 = vunpack.c.h.b16 %v2860
      %v2920 = vunpack.c.l.b16 %v2861
      %v2921 = vunpack.c.l.b16 %v2862
      %v2922 = vunpack.c.h.b16 %v2862
      %v2923 = vunpack.c.l.b16 %v2863
      %v2924 = vpack.c.b16 %v2891, %v2888
      %v2925 = vpack.c.b16 %v2892, %v2889
      %v2926 = vpack.c.b16 %v2893, %v2890
      %v2927 = vpack.c.b16 %v2897, %v2894
      %v2928 = vpack.c.b16 %v2898, %v2895
      %v2929 = vpack.c.b16 %v2899, %v2896
      %v2930 = vpack.c.b16 %v2903, %v2900
      %v2931 = vpack.c.b16 %v2904, %v2901
      %v2932 = vpack.c.b16 %v2905, %v2902
      %v2933 = vpack.c.b16 %v2909, %v2906
      %v2934 = vpack.c.b16 %v2910, %v2907
      %v2935 = vpack.c.b16 %v2911, %v2908
      %v2936 = vpack.c.b16 %v2915, %v2912
      %v2937 = vpack.c.b16 %v2916, %v2913
      %v2938 = vpack.c.b16 %v2917, %v2914
      %v2939 = vpack.c.b16 %v2921, %v2918
      %v2940 = vpack.c.b16 %v2922, %v2919
      %v2941 = vpack.c.b16 %v2923, %v2920
      %vm2960 = vcmask 785408
      %v2961 = vsel %vm2960, %v2825, 0
      %v2963 = vsel %vm2960, %v2827, 0
      %v2965 = vsel %vm2960, %v2829, 0
      %v2967 = vsel %vm2960, %v2831, 0
      %v2969 = vsel %vm2960, %v2833, 0
      %v2971 = vsel %vm2960, %v2835, 0
      %v2973 = vsel %vm2960, %v2837, 0
      %v2975 = vsel %vm2960, %v2839, 0
      %2977 = vmatprep.subr.bf16.mxu0 %v2925
      %2978 = vmatpush1.bf16.msra.mxu0 %v2924
      %2979 = vmatprep.subr.bf16.mxu0 %v2928
      %2980 = vmatpush1.bf16.msra.mxu0 %v2927
      %2981 = vmatprep.subr.bf16.mxu0 %v2931
      %2982 = vmatpush1.bf16.msra.mxu0 %v2930
      %2983 = vmatprep.subr.bf16.mxu0 %v2934
      %2984 = vmatpush1.bf16.msra.mxu0 %v2933
      %2985 = vmatprep.subr.bf16.mxu0 %v2937
      %2986 = vmatpush1.bf16.msra.mxu0 %v2936
      %2987 = vmatprep.subr.bf16.mxu0 %v2940
      %2988 = vmatpush1.bf16.msra.mxu0 %v2939
      %2989 = vmatprep.subr.bf16.mxu0 0
      %2990 = vmatpush1.bf16.msra.mxu0 0
      %2991 = vmatprep.subr.bf16.mxu0 0
      %2992 = vmatpush1.bf16.msra.mxu0 0
      %2993 = vmatprep.subr.bf16.mxu0 0
      %2994 = vmatpush1.bf16.msra.mxu0 0
      %2995 = vmatprep.subr.bf16.mxu0 0
      %2996 = vmatpush1.bf16.msra.mxu0 0
      %2997 = vmatprep.subr.bf16.mxu0 0
      %2998 = vmatpush1.bf16.msra.mxu0 0
      %2999 = vmatprep.subr.bf16.mxu0 0
      %3000 = vmatpush1.bf16.msra.mxu0 0
      %3001 = vmatprep.subr.bf16.mxu0 0
      %3002 = vmatpush1.bf16.msra.mxu0 0
      %3003 = vmatprep.subr.bf16.mxu0 0
      %3004 = vmatpush1.bf16.msra.mxu0 0
      %3005 = vmatprep.subr.bf16.mxu0 0
      %3006 = vmatpush1.bf16.msra.mxu0 0
      %3007 = vmatprep.subr.bf16.mxu0 0
      %3008 = vmatpush1.bf16.msra.mxu0 0
      %3009 = vmatprep.mubr.bf16.mxu0 0
      %3010 = vmatmul.mubr.bf16.gmra.mrb[0].mxu0 %v2961
      %v3011 = vpop.f32.mrb[0].mxu0
      %v3012 = vadd.f32 0.0, %v3011
      %v3013 = vpop.f32.mrb[0].mxu0
      %v3014 = vadd.f32 0.0, %v3013
      %v3015 = vpop.f32.mrb[0].mxu0
      %v3016 = vadd.f32 0.0, %v3015
      %v3017 = vpop.f32.mrb[0].mxu0
      %v3018 = vadd.f32 0.0, %v3017
      %3019 = vmatprep.mubr.bf16.mxu0 0
      %3020 = vmatmul.mubr.bf16.gmra.mrb[0].mxu0 %v2963
      %v3021 = vpop.f32.mrb[0].mxu0
      %v3022 = vadd.f32 0.0, %v3021
      %v3023 = vpop.f32.mrb[0].mxu0
      %v3024 = vadd.f32 0.0, %v3023
      %v3025 = vpop.f32.mrb[0].mxu0
      %v3026 = vadd.f32 0.0, %v3025
      %v3027 = vpop.f32.mrb[0].mxu0
      %v3028 = vadd.f32 0.0, %v3027
      %3029 = vmatprep.mubr.bf16.mxu0 0
      %3030 = vmatmul.mubr.bf16.gmra.mrb[0].mxu0 %v2965
      %v3031 = vpop.f32.mrb[0].mxu0
      %v3032 = vadd.f32 0.0, %v3031
      %v3033 = vpop.f32.mrb[0].mxu0
      %v3034 = vadd.f32 0.0, %v3033
      %v3035 = vpop.f32.mrb[0].mxu0
      %v3036 = vadd.f32 0.0, %v3035
      %v3037 = vpop.f32.mrb[0].mxu0
      %v3038 = vadd.f32 0.0, %v3037
      %3039 = vmatprep.mubr.bf16.mxu0 0
      %3040 = vmatmul.mubr.bf16.gmra.mrb[0].mxu0 %v2967
      %v3041 = vpop.f32.mrb[0].mxu0
      %v3042 = vadd.f32 0.0, %v3041
      %v3043 = vpop.f32.mrb[0].mxu0
      %v3044 = vadd.f32 0.0, %v3043
      %v3045 = vpop.f32.mrb[0].mxu0
      %v3046 = vadd.f32 0.0, %v3045
      %v3047 = vpop.f32.mrb[0].mxu0
      %v3048 = vadd.f32 0.0, %v3047
      %3049 = vmatprep.mubr.bf16.mxu0 0
      %3050 = vmatmul.mubr.bf16.gmra.mrb[0].mxu0 %v2969
      %v3051 = vpop.f32.mrb[0].mxu0
      %v3052 = vadd.f32 0.0, %v3051
      %v3053 = vpop.f32.mrb[0].mxu0
      %v3054 = vadd.f32 0.0, %v3053
      %v3055 = vpop.f32.mrb[0].mxu0
      %v3056 = vadd.f32 0.0, %v3055
      %v3057 = vpop.f32.mrb[0].mxu0
      %v3058 = vadd.f32 0.0, %v3057
      %3059 = vmatprep.mubr.bf16.mxu0 0
      %3060 = vmatmul.mubr.bf16.gmra.mrb[0].mxu0 %v2971
      %v3061 = vpop.f32.mrb[0].mxu0
      %v3062 = vadd.f32 0.0, %v3061
      %v3063 = vpop.f32.mrb[0].mxu0
      %v3064 = vadd.f32 0.0, %v3063
      %v3065 = vpop.f32.mrb[0].mxu0
      %v3066 = vadd.f32 0.0, %v3065
      %v3067 = vpop.f32.mrb[0].mxu0
      %v3068 = vadd.f32 0.0, %v3067
      %3069 = vmatprep.mubr.bf16.mxu0 0
      %3070 = vmatmul.mubr.bf16.gmra.mrb[0].mxu0 %v2973
      %v3071 = vpop.f32.mrb[0].mxu0
      %v3072 = vadd.f32 0.0, %v3071
      %v3073 = vpop.f32.mrb[0].mxu0
      %v3074 = vadd.f32 0.0, %v3073
      %v3075 = vpop.f32.mrb[0].mxu0
      %v3076 = vadd.f32 0.0, %v3075
      %v3077 = vpop.f32.mrb[0].mxu0
      %v3078 = vadd.f32 0.0, %v3077
      %3079 = vmatprep.mubr.bf16.mxu0 0
      %3080 = vmatmul.mubr.bf16.gmra.mrb[0].mxu0 %v2975
      %v3081 = vpop.f32.mrb[0].mxu0
      %v3082 = vadd.f32 0.0, %v3081
      %v3083 = vpop.f32.mrb[0].mxu0
      %v3084 = vadd.f32 0.0, %v3083
      %v3085 = vpop.f32.mrb[0].mxu0
      %v3086 = vadd.f32 0.0, %v3085
      %v3087 = vpop.f32.mrb[0].mxu0
      %v3088 = vadd.f32 0.0, %v3087
      %3089 = vdwg.mxu0
      %3090 = vmatprep.subr.bf16.mxu0 0
      %3091 = vmatpush1.bf16.msra.mxu0 %v2926
      %3092 = vmatprep.subr.bf16.mxu0 0
      %3093 = vmatpush1.bf16.msra.mxu0 %v2929
      %3094 = vmatprep.subr.bf16.mxu0 0
      %3095 = vmatpush1.bf16.msra.mxu0 %v2932
      %3096 = vmatprep.subr.bf16.mxu0 0
      %3097 = vmatpush1.bf16.msra.mxu0 %v2935
      %3098 = vmatprep.subr.bf16.mxu0 0
      %3099 = vmatpush1.bf16.msra.mxu0 %v2938
      %3100 = vmatprep.subr.bf16.mxu0 0
      %3101 = vmatpush1.bf16.msra.mxu0 %v2941
      %3102 = vmatprep.subr.bf16.mxu0 0
      %3103 = vmatpush1.bf16.msra.mxu0 0
      %3104 = vmatprep.subr.bf16.mxu0 0
      %3105 = vmatpush1.bf16.msra.mxu0 0
      %3106 = vmatprep.subr.bf16.mxu0 0
      %3107 = vmatpush1.bf16.msra.mxu0 0
      %3108 = vmatprep.subr.bf16.mxu0 0
      %3109 = vmatpush1.bf16.msra.mxu0 0
      %3110 = vmatprep.subr.bf16.mxu0 0
      %3111 = vmatpush1.bf16.msra.mxu0 0
      %3112 = vmatprep.subr.bf16.mxu0 0
      %3113 = vmatpush1.bf16.msra.mxu0 0
      %3114 = vmatprep.subr.bf16.mxu0 0
      %3115 = vmatpush1.bf16.msra.mxu0 0
      %3116 = vmatprep.subr.bf16.mxu0 0
      %3117 = vmatpush1.bf16.msra.mxu0 0
      %3118 = vmatprep.subr.bf16.mxu0 0
      %3119 = vmatpush1.bf16.msra.mxu0 0
      %3120 = vmatprep.subr.bf16.mxu0 0
      %3121 = vmatpush1.bf16.msra.mxu0 0
      %3122 = vmatprep.mubr.bf16.mxu0 0
      %3123 = vmatmul.mubr.bf16.gmra.mrb[0].mxu0 %v2961
      %v3124 = vpop.f32.mrb[0].mxu0
      %v3125 = vadd.f32 0.0, %v3124
      %v3126 = vpop.f32.mrb[0].mxu0
      %v3127 = vpop.f32.mrb[0].mxu0
      %v3128 = vadd.f32 0.0, %v3127
      %v3129 = vpop.f32.mrb[0].mxu0
      %3130 = vmatprep.mubr.bf16.mxu0 0
      %3131 = vmatmul.mubr.bf16.gmra.mrb[0].mxu0 %v2963
      %v3132 = vpop.f32.mrb[0].mxu0
      %v3133 = vadd.f32 0.0, %v3132
      %v3134 = vpop.f32.mrb[0].mxu0
      %v3135 = vpop.f32.mrb[0].mxu0
      %v3136 = vadd.f32 0.0, %v3135
      %v3137 = vpop.f32.mrb[0].mxu0
      %3138 = vmatprep.mubr.bf16.mxu0 0
      %3139 = vmatmul.mubr.bf16.gmra.mrb[0].mxu0 %v2965
      %v3140 = vpop.f32.mrb[0].mxu0
      %v3141 = vadd.f32 0.0, %v3140
      %v3142 = vpop.f32.mrb[0].mxu0
      %v3143 = vpop.f32.mrb[0].mxu0
      %v3144 = vadd.f32 0.0, %v3143
      %v3145 = vpop.f32.mrb[0].mxu0
      %3146 = vmatprep.mubr.bf16.mxu0 0
      %3147 = vmatmul.mubr.bf16.gmra.mrb[0].mxu0 %v2967
      %v3148 = vpop.f32.mrb[0].mxu0
      %v3149 = vadd.f32 0.0, %v3148
      %v3150 = vpop.f32.mrb[0].mxu0
      %v3151 = vpop.f32.mrb[0].mxu0
      %v3152 = vadd.f32 0.0, %v3151
      %v3153 = vpop.f32.mrb[0].mxu0
      %3154 = vmatprep.mubr.bf16.mxu0 0
      %3155 = vmatmul.mubr.bf16.gmra.mrb[0].mxu0 %v2969
      %v3156 = vpop.f32.mrb[0].mxu0
      %v3157 = vadd.f32 0.0, %v3156
      %v3158 = vpop.f32.mrb[0].mxu0
      %v3159 = vpop.f32.mrb[0].mxu0
      %v3160 = vadd.f32 0.0, %v3159
      %v3161 = vpop.f32.mrb[0].mxu0
      %3162 = vmatprep.mubr.bf16.mxu0 0
      %3163 = vmatmul.mubr.bf16.gmra.mrb[0].mxu0 %v2971
      %v3164 = vpop.f32.mrb[0].mxu0
      %v3165 = vadd.f32 0.0, %v3164
      %v3166 = vpop.f32.mrb[0].mxu0
      %v3167 = vpop.f32.mrb[0].mxu0
      %v3168 = vadd.f32 0.0, %v3167
      %v3169 = vpop.f32.mrb[0].mxu0
      %3170 = vmatprep.mubr.bf16.mxu0 0
      %3171 = vmatmul.mubr.bf16.gmra.mrb[0].mxu0 %v2973
      %v3172 = vpop.f32.mrb[0].mxu0
      %v3173 = vadd.f32 0.0, %v3172
      %v3174 = vpop.f32.mrb[0].mxu0
      %v3175 = vpop.f32.mrb[0].mxu0
      %v3176 = vadd.f32 0.0, %v3175
      %v3177 = vpop.f32.mrb[0].mxu0
      %3178 = vmatprep.mubr.bf16.mxu0 0
      %3179 = vmatmul.mubr.bf16.gmra.mrb[0].mxu0 %v2975
      %v3180 = vpop.f32.mrb[0].mxu0
      %v3181 = vadd.f32 0.0, %v3180
      %v3182 = vpop.f32.mrb[0].mxu0
      %v3183 = vpop.f32.mrb[0].mxu0
      %v3184 = vadd.f32 0.0, %v3183
      %v3185 = vpop.f32.mrb[0].mxu0
      %3186 = vdwg.mxu0
      %vm3187 = vcmp.lt.s32.totalorder %v1267, 14
      %vm3188 = vcmp.lt.s32.totalorder %v1268, 14
      %v3189 = vsel %vm3187, 1, 0
      %v3190 = vsel %vm3188, 1, 0
      %vm3191 = vcmp.eq.s32.totalorder %v3189, 1
      %vm3192 = vcmp.eq.s32.totalorder %v3190, 1
      %v3193 = vsel %vm3191, %v3012, -inf
      %v3194 = vsel %vm3191, %v3014, -inf
      %v3195 = vsel %vm3191, %v3125, -inf
      %v3196 = vsel %vm3192, %v3016, -inf
      %v3197 = vsel %vm3192, %v3018, -inf
      %v3198 = vsel %vm3192, %v3128, -inf
      %v3199 = vsel %vm3191, %v3022, -inf
      %v3200 = vsel %vm3191, %v3024, -inf
      %v3201 = vsel %vm3191, %v3133, -inf
      %v3202 = vsel %vm3192, %v3026, -inf
      %v3203 = vsel %vm3192, %v3028, -inf
      %v3204 = vsel %vm3192, %v3136, -inf
      %v3205 = vsel %vm3191, %v3032, -inf
      %v3206 = vsel %vm3191, %v3034, -inf
      %v3207 = vsel %vm3191, %v3141, -inf
      %v3208 = vsel %vm3192, %v3036, -inf
      %v3209 = vsel %vm3192, %v3038, -inf
      %v3210 = vsel %vm3192, %v3144, -inf
      %v3211 = vsel %vm3191, %v3042, -inf
      %v3212 = vsel %vm3191, %v3044, -inf
      %v3213 = vsel %vm3191, %v3149, -inf
      %v3214 = vsel %vm3192, %v3046, -inf
      %v3215 = vsel %vm3192, %v3048, -inf
      %v3216 = vsel %vm3192, %v3152, -inf
      %v3217 = vsel %vm3191, %v3052, -inf
      %v3218 = vsel %vm3191, %v3054, -inf
      %v3219 = vsel %vm3191, %v3157, -inf
      %v3220 = vsel %vm3192, %v3056, -inf
      %v3221 = vsel %vm3192, %v3058, -inf
      %v3222 = vsel %vm3192, %v3160, -inf
      %v3223 = vsel %vm3191, %v3062, -inf
      %v3224 = vsel %vm3191, %v3064, -inf
      %v3225 = vsel %vm3191, %v3165, -inf
      %v3226 = vsel %vm3192, %v3066, -inf
      %v3227 = vsel %vm3192, %v3068, -inf
      %v3228 = vsel %vm3192, %v3168, -inf
      %v3229 = vsel %vm3191, %v3072, -inf
      %v3230 = vsel %vm3191, %v3074, -inf
      %v3231 = vsel %vm3191, %v3173, -inf
      %v3232 = vsel %vm3192, %v3076, -inf
      %v3233 = vsel %vm3192, %v3078, -inf
      %v3234 = vsel %vm3192, %v3176, -inf
      %v3235 = vsel %vm3191, %v3082, -inf
      %v3236 = vsel %vm3191, %v3084, -inf
      %v3237 = vsel %vm3191, %v3181, -inf
      %v3238 = vsel %vm3192, %v3086, -inf
      %v3239 = vsel %vm3192, %v3088, -inf
      %v3240 = vsel %vm3192, %v3184, -inf
      %v3241 = vmax.f32 %v3193, %v3196
      %v3242 = vrot.slane %v3241, 4
      %v3243 = vmax.f32 %v3241, %v3242
      %v3244 = vrot.slane %v3243, 2
      %v3245 = vmax.f32 %v3243, %v3244
      %v3246 = vrot.slane %v3245, 1
      %v3247 = vmax.f32 %v3245, %v3246
      %v3248 = vmax.f32 %v3194, %v3197
      %v3249 = vrot.slane %v3248, 4
      %v3250 = vmax.f32 %v3248, %v3249
      %v3251 = vrot.slane %v3250, 2
      %v3252 = vmax.f32 %v3250, %v3251
      %v3253 = vrot.slane %v3252, 1
      %v3254 = vmax.f32 %v3252, %v3253
      %v3255 = vsel %vm1619, %v3195, -inf
      %v3256 = vsel %vm1619, %v3198, -inf
      %v3257 = vmax.f32 %v3255, %v3256
      %v3258 = vrot.slane %v3257, 4
      %v3259 = vmax.f32 %v3257, %v3258
      %v3260 = vrot.slane %v3259, 2
      %v3261 = vmax.f32 %v3259, %v3260
      %v3262 = vrot.slane %v3261, 1
      %v3263 = vmax.f32 %v3261, %v3262
      %v3264 = vmax.f32 %v3199, %v3202
      %v3265 = vrot.slane %v3264, 4
      %v3266 = vmax.f32 %v3264, %v3265
      %v3267 = vrot.slane %v3266, 2
      %v3268 = vmax.f32 %v3266, %v3267
      %v3269 = vrot.slane %v3268, 1
      %v3270 = vmax.f32 %v3268, %v3269
      %v3271 = vmax.f32 %v3200, %v3203
      %v3272 = vrot.slane %v3271, 4
      %v3273 = vmax.f32 %v3271, %v3272
      %v3274 = vrot.slane %v3273, 2
      %v3275 = vmax.f32 %v3273, %v3274
      %v3276 = vrot.slane %v3275, 1
      %v3277 = vmax.f32 %v3275, %v3276
      %v3278 = vsel %vm1619, %v3201, -inf
      %v3279 = vsel %vm1619, %v3204, -inf
      %v3280 = vmax.f32 %v3278, %v3279
      %v3281 = vrot.slane %v3280, 4
      %v3282 = vmax.f32 %v3280, %v3281
      %v3283 = vrot.slane %v3282, 2
      %v3284 = vmax.f32 %v3282, %v3283
      %v3285 = vrot.slane %v3284, 1
      %v3286 = vmax.f32 %v3284, %v3285
      %v3287 = vmax.f32 %v3205, %v3208
      %v3288 = vrot.slane %v3287, 4
      %v3289 = vmax.f32 %v3287, %v3288
      %v3290 = vrot.slane %v3289, 2
      %v3291 = vmax.f32 %v3289, %v3290
      %v3292 = vrot.slane %v3291, 1
      %v3293 = vmax.f32 %v3291, %v3292
      %v3294 = vmax.f32 %v3206, %v3209
      %v3295 = vrot.slane %v3294, 4
      %v3296 = vmax.f32 %v3294, %v3295
      %v3297 = vrot.slane %v3296, 2
      %v3298 = vmax.f32 %v3296, %v3297
      %v3299 = vrot.slane %v3298, 1
      %v3300 = vmax.f32 %v3298, %v3299
      %v3301 = vsel %vm1619, %v3207, -inf
      %v3302 = vsel %vm1619, %v3210, -inf
      %v3303 = vmax.f32 %v3301, %v3302
      %v3304 = vrot.slane %v3303, 4
      %v3305 = vmax.f32 %v3303, %v3304
      %v3306 = vrot.slane %v3305, 2
      %v3307 = vmax.f32 %v3305, %v3306
      %v3308 = vrot.slane %v3307, 1
      %v3309 = vmax.f32 %v3307, %v3308
      %v3310 = vmax.f32 %v3211, %v3214
      %v3311 = vrot.slane %v3310, 4
      %v3312 = vmax.f32 %v3310, %v3311
      %v3313 = vrot.slane %v3312, 2
      %v3314 = vmax.f32 %v3312, %v3313
      %v3315 = vrot.slane %v3314, 1
      %v3316 = vmax.f32 %v3314, %v3315
      %v3317 = vmax.f32 %v3212, %v3215
      %v3318 = vrot.slane %v3317, 4
      %v3319 = vmax.f32 %v3317, %v3318
      %v3320 = vrot.slane %v3319, 2
      %v3321 = vmax.f32 %v3319, %v3320
      %v3322 = vrot.slane %v3321, 1
      %v3323 = vmax.f32 %v3321, %v3322
      %v3324 = vsel %vm1619, %v3213, -inf
      %v3325 = vsel %vm1619, %v3216, -inf
      %v3326 = vmax.f32 %v3324, %v3325
      %v3327 = vrot.slane %v3326, 4
      %v3328 = vmax.f32 %v3326, %v3327
      %v3329 = vrot.slane %v3328, 2
      %v3330 = vmax.f32 %v3328, %v3329
      %v3331 = vrot.slane %v3330, 1
      %v3332 = vmax.f32 %v3330, %v3331
      %v3333 = vmax.f32 %v3217, %v3220
      %v3334 = vrot.slane %v3333, 4
      %v3335 = vmax.f32 %v3333, %v3334
      %v3336 = vrot.slane %v3335, 2
      %v3337 = vmax.f32 %v3335, %v3336
      %v3338 = vrot.slane %v3337, 1
      %v3339 = vmax.f32 %v3337, %v3338
      %v3340 = vmax.f32 %v3218, %v3221
      %v3341 = vrot.slane %v3340, 4
      %v3342 = vmax.f32 %v3340, %v3341
      %v3343 = vrot.slane %v3342, 2
      %v3344 = vmax.f32 %v3342, %v3343
      %v3345 = vrot.slane %v3344, 1
      %v3346 = vmax.f32 %v3344, %v3345
      %v3347 = vsel %vm1619, %v3219, -inf
      %v3348 = vsel %vm1619, %v3222, -inf
      %v3349 = vmax.f32 %v3347, %v3348
      %v3350 = vrot.slane %v3349, 4
      %v3351 = vmax.f32 %v3349, %v3350
      %v3352 = vrot.slane %v3351, 2
      %v3353 = vmax.f32 %v3351, %v3352
      %v3354 = vrot.slane %v3353, 1
      %v3355 = vmax.f32 %v3353, %v3354
      %v3356 = vmax.f32 %v3223, %v3226
      %v3357 = vrot.slane %v3356, 4
      %v3358 = vmax.f32 %v3356, %v3357
      %v3359 = vrot.slane %v3358, 2
      %v3360 = vmax.f32 %v3358, %v3359
      %v3361 = vrot.slane %v3360, 1
      %v3362 = vmax.f32 %v3360, %v3361
      %v3363 = vmax.f32 %v3224, %v3227
      %v3364 = vrot.slane %v3363, 4
      %v3365 = vmax.f32 %v3363, %v3364
      %v3366 = vrot.slane %v3365, 2
      %v3367 = vmax.f32 %v3365, %v3366
      %v3368 = vrot.slane %v3367, 1
      %v3369 = vmax.f32 %v3367, %v3368
      %v3370 = vsel %vm1619, %v3225, -inf
      %v3371 = vsel %vm1619, %v3228, -inf
      %v3372 = vmax.f32 %v3370, %v3371
      %v3373 = vrot.slane %v3372, 4
      %v3374 = vmax.f32 %v3372, %v3373
      %v3375 = vrot.slane %v3374, 2
      %v3376 = vmax.f32 %v3374, %v3375
      %v3377 = vrot.slane %v3376, 1
      %v3378 = vmax.f32 %v3376, %v3377
      %v3379 = vmax.f32 %v3229, %v3232
      %v3380 = vrot.slane %v3379, 4
      %v3381 = vmax.f32 %v3379, %v3380
      %v3382 = vrot.slane %v3381, 2
      %v3383 = vmax.f32 %v3381, %v3382
      %v3384 = vrot.slane %v3383, 1
      %v3385 = vmax.f32 %v3383, %v3384
      %v3386 = vmax.f32 %v3230, %v3233
      %v3387 = vrot.slane %v3386, 4
      %v3388 = vmax.f32 %v3386, %v3387
      %v3389 = vrot.slane %v3388, 2
      %v3390 = vmax.f32 %v3388, %v3389
      %v3391 = vrot.slane %v3390, 1
      %v3392 = vmax.f32 %v3390, %v3391
      %v3393 = vsel %vm1619, %v3231, -inf
      %v3394 = vsel %vm1619, %v3234, -inf
      %v3395 = vmax.f32 %v3393, %v3394
      %v3396 = vrot.slane %v3395, 4
      %v3397 = vmax.f32 %v3395, %v3396
      %v3398 = vrot.slane %v3397, 2
      %v3399 = vmax.f32 %v3397, %v3398
      %v3400 = vrot.slane %v3399, 1
      %v3401 = vmax.f32 %v3399, %v3400
      %v3402 = vmax.f32 %v3235, %v3238
      %v3403 = vrot.slane %v3402, 4
      %v3404 = vmax.f32 %v3402, %v3403
      %v3405 = vrot.slane %v3404, 2
      %v3406 = vmax.f32 %v3404, %v3405
      %v3407 = vrot.slane %v3406, 1
      %v3408 = vmax.f32 %v3406, %v3407
      %v3409 = vmax.f32 %v3236, %v3239
      %v3410 = vrot.slane %v3409, 4
      %v3411 = vmax.f32 %v3409, %v3410
      %v3412 = vrot.slane %v3411, 2
      %v3413 = vmax.f32 %v3411, %v3412
      %v3414 = vrot.slane %v3413, 1
      %v3415 = vmax.f32 %v3413, %v3414
      %v3416 = vsel %vm1619, %v3237, -inf
      %v3417 = vsel %vm1619, %v3240, -inf
      %v3418 = vmax.f32 %v3416, %v3417
      %v3419 = vrot.slane %v3418, 4
      %v3420 = vmax.f32 %v3418, %v3419
      %v3421 = vrot.slane %v3420, 2
      %v3422 = vmax.f32 %v3420, %v3421
      %v3423 = vrot.slane %v3422, 1
      %v3424 = vmax.f32 %v3422, %v3423
      %s3425 = scalar_lea.vmem %s15, 6
      %v3426 = vld [vmem:[%s3425] sm:$0x7]
      %v3428 = vlaneseq
      %v3429 = vshrl.u32 %v3428, 7
      %v3430 = vsub.s32 0, %v3429
      %v3431 = vrot.slane %v3426, %v3430
      %v3432 = vlaneseq
      %v3433 = vshrl.u32 %v3432, 7
      %v3434 = vsub.s32 1, %v3433
      %v3435 = vrot.slane %v3426, %v3434
      %v3436 = vlaneseq
      %v3437 = vshrl.u32 %v3436, 7
      %v3438 = vsub.s32 2, %v3437
      %v3439 = vrot.slane %v3426, %v3438
      %v3443 = vadd.f32 %v3247, %v3431
      %v3444 = vadd.f32 %v3254, %v3435
      %v3445 = vadd.f32 %v3263, %v3439
      %v3446 = vadd.f32 %v3270, %v3431
      %v3447 = vadd.f32 %v3277, %v3435
      %v3448 = vadd.f32 %v3286, %v3439
      %v3449 = vadd.f32 %v3293, %v3431
      %v3450 = vadd.f32 %v3300, %v3435
      %v3451 = vadd.f32 %v3309, %v3439
      %v3452 = vadd.f32 %v3316, %v3431
      %v3453 = vadd.f32 %v3323, %v3435
      %v3454 = vadd.f32 %v3332, %v3439
      %v3455 = vadd.f32 %v3339, %v3431
      %v3456 = vadd.f32 %v3346, %v3435
      %v3457 = vadd.f32 %v3355, %v3439
      %v3458 = vadd.f32 %v3362, %v3431
      %v3459 = vadd.f32 %v3369, %v3435
      %v3460 = vadd.f32 %v3378, %v3439
      %v3461 = vadd.f32 %v3385, %v3431
      %v3462 = vadd.f32 %v3392, %v3435
      %v3463 = vadd.f32 %v3401, %v3439
      %v3464 = vadd.f32 %v3408, %v3431
      %v3465 = vadd.f32 %v3415, %v3435
      %v3466 = vadd.f32 %v3424, %v3439
      %v3475 = vrot.slane %v3446, 7
      %v3476 = vsel %vm788, %v3475, %v3443
      %v3477 = vrot.slane %v3449, 6
      %v3478 = vsel %vm790, %v3477, %v3476
      %v3479 = vrot.slane %v3452, 5
      %v3480 = vsel %vm792, %v3479, %v3478
      %v3481 = vrot.slane %v3455, 4
      %v3482 = vsel %vm794, %v3481, %v3480
      %v3483 = vrot.slane %v3458, 3
      %v3484 = vsel %vm796, %v3483, %v3482
      %v3485 = vrot.slane %v3461, 2
      %v3486 = vsel %vm798, %v3485, %v3484
      %v3487 = vrot.slane %v3464, 1
      %v3488 = vsel %vm800, %v3487, %v3486
      %v3490 = vmul.f32 %v1834, %v3488
      %3491 = vrot.lane.b32.xlu0 %v3488, 64
      %v3492 = vpop.permute.xlu0 %3491
      %v3494 = vmul.f32 %v1862, %v3492
      %v3495 = vadd.f32 %v3490, %v3494
      %v3504 = vrot.slane %v3447, 7
      %v3505 = vsel %vm788, %v3504, %v3444
      %v3506 = vrot.slane %v3450, 6
      %v3507 = vsel %vm790, %v3506, %v3505
      %v3508 = vrot.slane %v3453, 5
      %v3509 = vsel %vm792, %v3508, %v3507
      %v3510 = vrot.slane %v3456, 4
      %v3511 = vsel %vm794, %v3510, %v3509
      %v3512 = vrot.slane %v3459, 3
      %v3513 = vsel %vm796, %v3512, %v3511
      %v3514 = vrot.slane %v3462, 2
      %v3515 = vsel %vm798, %v3514, %v3513
      %v3516 = vrot.slane %v3465, 1
      %v3517 = vsel %vm800, %v3516, %v3515
      %v3519 = vmul.f32 %v1871, %v3517
      %v3520 = vadd.f32 %v3495, %v3519
      %3521 = vrot.lane.b32.xlu0 %v3517, 64
      %v3522 = vpop.permute.xlu0 %3521
      %v3524 = vmul.f32 %v1900, %v3522
      %v3525 = vadd.f32 %v3520, %v3524
      %v3534 = vrot.slane %v3448, 7
      %v3535 = vsel %vm788, %v3534, %v3445
      %v3536 = vrot.slane %v3451, 6
      %v3537 = vsel %vm790, %v3536, %v3535
      %v3538 = vrot.slane %v3454, 5
      %v3539 = vsel %vm792, %v3538, %v3537
      %v3540 = vrot.slane %v3457, 4
      %v3541 = vsel %vm794, %v3540, %v3539
      %v3542 = vrot.slane %v3460, 3
      %v3543 = vsel %vm796, %v3542, %v3541
      %v3544 = vrot.slane %v3463, 2
      %v3545 = vsel %vm798, %v3544, %v3543
      %v3546 = vrot.slane %v3466, 1
      %v3547 = vsel %vm800, %v3546, %v3545
      %v3549 = vmul.f32 %v1909, %v3547
      %v3550 = vadd.f32 %v3525, %v3549
      %vm3551 = vcmask 1044480
      %v3552 = vrot.slane %v564, 3
      %v3553 = vrot.slane %v565, 3
      %v3554 = vsel %vm3551, %v3552, %v3553
      %v3555 = vrot.slane %v566, 3
      %v3556 = vsel %vm3551, %v3553, %v3555
      %v3557 = vrot.slane %v568, 3
      %v3558 = vrot.slane %v569, 3
      %v3559 = vsel %vm3551, %v3557, %v3558
      %v3560 = vrot.slane %v570, 3
      %v3561 = vsel %vm3551, %v3558, %v3560
      %v3562 = vrot.slane %v572, 3
      %v3563 = vrot.slane %v573, 3
      %v3564 = vsel %vm3551, %v3562, %v3563
      %v3565 = vrot.slane %v574, 3
      %v3566 = vsel %vm3551, %v3563, %v3565
      %v3567 = vrot.slane %v576, 3
      %v3568 = vrot.slane %v577, 3
      %v3569 = vsel %vm3551, %v3567, %v3568
      %v3570 = vrot.slane %v578, 3
      %v3571 = vsel %vm3551, %v3568, %v3570
      %v3572 = vrot.slane %v580, 3
      %v3573 = vrot.slane %v581, 3
      %v3574 = vsel %vm3551, %v3572, %v3573
      %v3575 = vrot.slane %v582, 3
      %v3576 = vsel %vm3551, %v3573, %v3575
      %v3577 = vrot.slane %v584, 3
      %v3578 = vrot.slane %v585, 3
      %v3579 = vsel %vm3551, %v3577, %v3578
      %v3580 = vrot.slane %v586, 3
      %v3581 = vsel %vm3551, %v3578, %v3580
      %v3582 = vrot.slane %v588, 3
      %v3583 = vrot.slane %v589, 3
      %v3584 = vsel %vm3551, %v3582, %v3583
      %v3585 = vrot.slane %v590, 3
      %v3586 = vsel %vm3551, %v3583, %v3585
      %v3587 = vrot.slane %v592, 3
      %v3588 = vrot.slane %v593, 3
      %v3589 = vsel %vm3551, %v3587, %v3588
      %v3590 = vrot.slane %v594, 3
      %v3591 = vsel %vm3551, %v3588, %v3590
      %v3608 = vpack.c.bf16 %v3556, %v3554
      %v3609 = vpack.c.bf16 %v3561, %v3559
      %v3610 = vpack.c.bf16 %v3566, %v3564
      %v3611 = vpack.c.bf16 %v3571, %v3569
      %v3612 = vpack.c.bf16 %v3576, %v3574
      %v3613 = vpack.c.bf16 %v3581, %v3579
      %v3614 = vpack.c.bf16 %v3586, %v3584
      %v3615 = vpack.c.bf16 %v3591, %v3589
      %vm3616 = vcmask 1043456
      %v3617 = vrot.slane %v564, 4
      %v3618 = vrot.slane %v565, 4
      %v3619 = vsel %vm3616, %v3617, %v3618
      %v3620 = vrot.slane %v566, 4
      %v3621 = vsel %vm3616, %v3618, %v3620
      %v3622 = vrot.slane %v568, 4
      %v3623 = vrot.slane %v569, 4
      %v3624 = vsel %vm3616, %v3622, %v3623
      %v3625 = vrot.slane %v570, 4
      %v3626 = vsel %vm3616, %v3623, %v3625
      %v3627 = vrot.slane %v572, 4
      %v3628 = vrot.slane %v573, 4
      %v3629 = vsel %vm3616, %v3627, %v3628
      %v3630 = vrot.slane %v574, 4
      %v3631 = vsel %vm3616, %v3628, %v3630
      %v3632 = vrot.slane %v576, 4
      %v3633 = vrot.slane %v577, 4
      %v3634 = vsel %vm3616, %v3632, %v3633
      %v3635 = vrot.slane %v578, 4
      %v3636 = vsel %vm3616, %v3633, %v3635
      %v3637 = vrot.slane %v580, 4
      %v3638 = vrot.slane %v581, 4
      %v3639 = vsel %vm3616, %v3637, %v3638
      %v3640 = vrot.slane %v582, 4
      %v3641 = vsel %vm3616, %v3638, %v3640
      %v3642 = vrot.slane %v584, 4
      %v3643 = vrot.slane %v585, 4
      %v3644 = vsel %vm3616, %v3642, %v3643
      %v3645 = vrot.slane %v586, 4
      %v3646 = vsel %vm3616, %v3643, %v3645
      %v3647 = vrot.slane %v588, 4
      %v3648 = vrot.slane %v589, 4
      %v3649 = vsel %vm3616, %v3647, %v3648
      %v3650 = vrot.slane %v590, 4
      %v3651 = vsel %vm3616, %v3648, %v3650
      %v3652 = vrot.slane %v592, 4
      %v3653 = vrot.slane %v593, 4
      %v3654 = vsel %vm3616, %v3652, %v3653
      %v3655 = vrot.slane %v594, 4
      %v3656 = vsel %vm3616, %v3653, %v3655
      %v3673 = vpack.c.bf16 %v3621, %v3619
      %v3674 = vpack.c.bf16 %v3626, %v3624
      %v3675 = vpack.c.bf16 %v3631, %v3629
      %v3676 = vpack.c.bf16 %v3636, %v3634
      %v3677 = vpack.c.bf16 %v3641, %v3639
      %v3678 = vpack.c.bf16 %v3646, %v3644
      %v3679 = vpack.c.bf16 %v3651, %v3649
      %v3680 = vpack.c.bf16 %v3656, %v3654
      %3689 = vrot.lane.b32.xlu0 %v3608, 96
      %v3690 = vpop.permute.xlu0 %3689
      %3691 = vrot.lane.b32.xlu0 %v3609, 96
      %v3692 = vpop.permute.xlu0 %3691
      %3693 = vrot.lane.b32.xlu0 %v3610, 96
      %v3694 = vpop.permute.xlu0 %3693
      %3695 = vrot.lane.b32.xlu0 %v3611, 96
      %v3696 = vpop.permute.xlu0 %3695
      %3697 = vrot.lane.b32.xlu0 %v3612, 96
      %v3698 = vpop.permute.xlu0 %3697
      %3699 = vrot.lane.b32.xlu0 %v3613, 96
      %v3700 = vpop.permute.xlu0 %3699
      %3701 = vrot.lane.b32.xlu0 %v3614, 96
      %v3702 = vpop.permute.xlu0 %3701
      %3703 = vrot.lane.b32.xlu0 %v3615, 96
      %v3704 = vpop.permute.xlu0 %3703
      %v3706 = vsel %vm2960, %v2825, %v3690
      %v3709 = vsel %vm2960, %v2827, %v3692
      %v3712 = vsel %vm2960, %v2829, %v3694
      %v3715 = vsel %vm2960, %v2831, %v3696
      %v3718 = vsel %vm2960, %v2833, %v3698
      %v3721 = vsel %vm2960, %v2835, %v3700
      %v3724 = vsel %vm2960, %v2837, %v3702
      %v3727 = vsel %vm2960, %v2839, %v3704
      %v3729 = vld [vmem:[%s13] sm:$0xff]
      %v3730 = vld [vmem:[%s13 + $0x8] sm:$0xf]
      %v3731 = vld [vmem:[%s13 + $0xc] sm:$0xff]
      %v3732 = vld [vmem:[%s13 + $0x14] sm:$0xf]
      %v3733 = vld [vmem:[%s13 + $0x18] sm:$0xff]
      %v3734 = vld [vmem:[%s13 + $0x20] sm:$0xf]
      %v3735 = vld [vmem:[%s13 + $0x24] sm:$0xff]
      %v3736 = vld [vmem:[%s13 + $0x2c] sm:$0xf]
      %v3737 = vld [vmem:[%s13 + $0x30] sm:$0xff]
      %v3738 = vld [vmem:[%s13 + $0x38] sm:$0xf]
      %v3739 = vld [vmem:[%s13 + $0x3c] sm:$0xff]
      %v3740 = vld [vmem:[%s13 + $0x44] sm:$0xf]
      %v3741 = vld [vmem:[%s13 + $0x48] sm:$0xff]
      %v3742 = vld [vmem:[%s13 + $0x50] sm:$0xf]
      %v3743 = vld [vmem:[%s13 + $0x54] sm:$0xff]
      %v3744 = vld [vmem:[%s13 + $0x5c] sm:$0xf]
      %v3745 = vld [vmem:[%s13 + $0x60] sm:$0xff]
      %v3746 = vld [vmem:[%s13 + $0x68] sm:$0xf]
      %v3747 = vld [vmem:[%s13 + $0x6c] sm:$0xff]
      %v3748 = vld [vmem:[%s13 + $0x74] sm:$0xf]
      %v3749 = vld [vmem:[%s13 + $0x78] sm:$0xff]
      %v3750 = vld [vmem:[%s13 + $0x80] sm:$0xf]
      %v3751 = vld [vmem:[%s13 + $0x84] sm:$0xff]
      %v3752 = vld [vmem:[%s13 + $0x8c] sm:$0xf]
      %v3753 = vld [vmem:[%s13 + $0x90] sm:$0xff]
      %v3754 = vld [vmem:[%s13 + $0x98] sm:$0xf]
      %v3755 = vld [vmem:[%s13 + $0x9c] sm:$0xff]
      %v3756 = vld [vmem:[%s13 + $0xa4] sm:$0xf]
      %v3757 = vld [vmem:[%s13 + $0xa8] sm:$0xff]
      %v3758 = vld [vmem:[%s13 + $0xb0] sm:$0xf]
      %v3759 = vld [vmem:[%s13 + $0xb4] sm:$0xff]
      %v3760 = vld [vmem:[%s13 + $0xbc] sm:$0xf]
      %v3761 = vld [vmem:[%s13 + $0xc0] sm:$0xff]
      %v3762 = vld [vmem:[%s13 + $0xc8] sm:$0xf]
      %v3763 = vld [vmem:[%s13 + $0xcc] sm:$0xff]
      %v3764 = vld [vmem:[%s13 + $0xd4] sm:$0xf]
      %v3765 = vld [vmem:[%s13 + $0xd8] sm:$0xff]
      %v3766 = vld [vmem:[%s13 + $0xe0] sm:$0xf]
      %v3767 = vld [vmem:[%s13 + $0xe4] sm:$0xff]
      %v3768 = vld [vmem:[%s13 + $0xec] sm:$0xf]
      %v3809 = vunpack.c.l.b16 %v3729
      %v3810 = vunpack.c.h.b16 %v3729
      %v3811 = vunpack.c.l.b16 %v3730
      %v3812 = vunpack.c.l.b16 %v3731
      %v3813 = vunpack.c.h.b16 %v3731
      %v3814 = vunpack.c.l.b16 %v3732
      %v3815 = vunpack.c.l.b16 %v3733
      %v3816 = vunpack.c.h.b16 %v3733
      %v3817 = vunpack.c.l.b16 %v3734
      %v3818 = vunpack.c.l.b16 %v3735
      %v3819 = vunpack.c.h.b16 %v3735
      %v3820 = vunpack.c.l.b16 %v3736
      %v3821 = vunpack.c.l.b16 %v3737
      %v3822 = vunpack.c.h.b16 %v3737
      %v3823 = vunpack.c.l.b16 %v3738
      %v3824 = vunpack.c.l.b16 %v3739
      %v3825 = vunpack.c.h.b16 %v3739
      %v3826 = vunpack.c.l.b16 %v3740
      %v3827 = vunpack.c.l.b16 %v3741
      %v3828 = vunpack.c.h.b16 %v3741
      %v3829 = vunpack.c.l.b16 %v3742
      %v3830 = vunpack.c.l.b16 %v3743
      %v3831 = vunpack.c.h.b16 %v3743
      %v3832 = vunpack.c.l.b16 %v3744
      %v3833 = vunpack.c.l.b16 %v3745
      %v3834 = vunpack.c.h.b16 %v3745
      %v3835 = vunpack.c.l.b16 %v3746
      %v3836 = vunpack.c.l.b16 %v3747
      %v3837 = vunpack.c.h.b16 %v3747
      %v3838 = vunpack.c.l.b16 %v3748
      %v3839 = vunpack.c.l.b16 %v3749
      %v3840 = vunpack.c.h.b16 %v3749
      %v3841 = vunpack.c.l.b16 %v3750
      %v3842 = vunpack.c.l.b16 %v3751
      %v3843 = vunpack.c.h.b16 %v3751
      %v3844 = vunpack.c.l.b16 %v3752
      %v3845 = vunpack.c.l.b16 %v3753
      %v3846 = vunpack.c.h.b16 %v3753
      %v3847 = vunpack.c.l.b16 %v3754
      %v3848 = vunpack.c.l.b16 %v3755
      %v3849 = vunpack.c.h.b16 %v3755
      %v3850 = vunpack.c.l.b16 %v3756
      %v3851 = vunpack.c.l.b16 %v3757
      %v3852 = vunpack.c.h.b16 %v3757
      %v3853 = vunpack.c.l.b16 %v3758
      %v3854 = vunpack.c.l.b16 %v3759
      %v3855 = vunpack.c.h.b16 %v3759
      %v3856 = vunpack.c.l.b16 %v3760
      %v3857 = vunpack.c.l.b16 %v3761
      %v3858 = vunpack.c.h.b16 %v3761
      %v3859 = vunpack.c.l.b16 %v3762
      %v3860 = vunpack.c.l.b16 %v3763
      %v3861 = vunpack.c.h.b16 %v3763
      %v3862 = vunpack.c.l.b16 %v3764
      %v3863 = vunpack.c.l.b16 %v3765
      %v3864 = vunpack.c.h.b16 %v3765
      %v3865 = vunpack.c.l.b16 %v3766
      %v3866 = vunpack.c.l.b16 %v3767
      %v3867 = vunpack.c.h.b16 %v3767
      %v3868 = vunpack.c.l.b16 %v3768
      %v3869 = vpack.c.b16 %v3812, %v3809
      %v3870 = vpack.c.b16 %v3813, %v3810
      %v3871 = vpack.c.b16 %v3814, %v3811
      %v3872 = vpack.c.b16 %v3818, %v3815
      %v3873 = vpack.c.b16 %v3819, %v3816
      %v3874 = vpack.c.b16 %v3820, %v3817
      %v3875 = vpack.c.b16 %v3824, %v3821
      %v3876 = vpack.c.b16 %v3825, %v3822
      %v3877 = vpack.c.b16 %v3826, %v3823
      %v3878 = vpack.c.b16 %v3830, %v3827
      %v3879 = vpack.c.b16 %v3831, %v3828
      %v3880 = vpack.c.b16 %v3832, %v3829
      %v3881 = vpack.c.b16 %v3836, %v3833
      %v3882 = vpack.c.b16 %v3837, %v3834
      %v3883 = vpack.c.b16 %v3838, %v3835
      %v3884 = vpack.c.b16 %v3842, %v3839
      %v3885 = vpack.c.b16 %v3843, %v3840
      %v3886 = vpack.c.b16 %v3844, %v3841
      %v3887 = vpack.c.b16 %v3848, %v3845
      %v3888 = vpack.c.b16 %v3849, %v3846
      %v3889 = vpack.c.b16 %v3850, %v3847
      %v3890 = vpack.c.b16 %v3854, %v3851
      %v3891 = vpack.c.b16 %v3855, %v3852
      %v3892 = vpack.c.b16 %v3856, %v3853
      %v3893 = vpack.c.b16 %v3860, %v3857
      %v3894 = vpack.c.b16 %v3861, %v3858
      %v3895 = vpack.c.b16 %v3862, %v3859
      %v3896 = vpack.c.b16 %v3866, %v3863
      %v3897 = vpack.c.b16 %v3867, %v3864
      %v3898 = vpack.c.b16 %v3868, %v3865
      %v3930 = vsel %vm619, %v3673, 0
      %v3933 = vsel %vm619, %v3674, 0
      %v3936 = vsel %vm619, %v3675, 0
      %v3939 = vsel %vm619, %v3676, 0
      %v3942 = vsel %vm619, %v3677, 0
      %v3945 = vsel %vm619, %v3678, 0
      %v3948 = vsel %vm619, %v3679, 0
      %v3951 = vsel %vm619, %v3680, 0
      %3953 = vmatprep.subr.bf16.mxu0 %v3870
      %3954 = vmatpush1.bf16.msra.mxu0 %v3869
      %3955 = vmatprep.subr.bf16.mxu0 %v3873
      %3956 = vmatpush1.bf16.msra.mxu0 %v3872
      %3957 = vmatprep.subr.bf16.mxu0 %v3876
      %3958 = vmatpush1.bf16.msra.mxu0 %v3875
      %3959 = vmatprep.subr.bf16.mxu0 %v3879
      %3960 = vmatpush1.bf16.msra.mxu0 %v3878
      %3961 = vmatprep.subr.bf16.mxu0 %v3882
      %3962 = vmatpush1.bf16.msra.mxu0 %v3881
      %3963 = vmatprep.subr.bf16.mxu0 %v3885
      %3964 = vmatpush1.bf16.msra.mxu0 %v3884
      %3965 = vmatprep.subr.bf16.mxu0 %v3888
      %3966 = vmatpush1.bf16.msra.mxu0 %v3887
      %3967 = vmatprep.subr.bf16.mxu0 %v3891
      %3968 = vmatpush1.bf16.msra.mxu0 %v3890
      %3969 = vmatprep.subr.bf16.mxu0 %v3894
      %3970 = vmatpush1.bf16.msra.mxu0 %v3893
      %3971 = vmatprep.subr.bf16.mxu0 %v3897
      %3972 = vmatpush1.bf16.msra.mxu0 %v3896
      %3973 = vmatprep.subr.bf16.mxu0 0
      %3974 = vmatpush1.bf16.msra.mxu0 0
      %3975 = vmatprep.subr.bf16.mxu0 0
      %3976 = vmatpush1.bf16.msra.mxu0 0
      %3977 = vmatprep.subr.bf16.mxu0 0
      %3978 = vmatpush1.bf16.msra.mxu0 0
      %3979 = vmatprep.subr.bf16.mxu0 0
      %3980 = vmatpush1.bf16.msra.mxu0 0
      %3981 = vmatprep.subr.bf16.mxu0 0
      %3982 = vmatpush1.bf16.msra.mxu0 0
      %3983 = vmatprep.subr.bf16.mxu0 0
      %3984 = vmatpush1.bf16.msra.mxu0 0
      %3985 = vmatprep.mubr.bf16.mxu0 %v3930
      %3986 = vmatmul.mubr.bf16.gmra.mrb[0].mxu0 %v3706
      %v3987 = vpop.f32.mrb[0].mxu0
      %v3988 = vadd.f32 0.0, %v3987
      %v3989 = vpop.f32.mrb[0].mxu0
      %v3990 = vadd.f32 0.0, %v3989
      %v3991 = vpop.f32.mrb[0].mxu0
      %v3992 = vadd.f32 0.0, %v3991
      %v3993 = vpop.f32.mrb[0].mxu0
      %v3994 = vadd.f32 0.0, %v3993
      %3995 = vmatprep.mubr.bf16.mxu0 %v3933
      %3996 = vmatmul.mubr.bf16.gmra.mrb[0].mxu0 %v3709
      %v3997 = vpop.f32.mrb[0].mxu0
      %v3998 = vadd.f32 0.0, %v3997
      %v3999 = vpop.f32.mrb[0].mxu0
      %v4000 = vadd.f32 0.0, %v3999
      %v4001 = vpop.f32.mrb[0].mxu0
      %v4002 = vadd.f32 0.0, %v4001
      %v4003 = vpop.f32.mrb[0].mxu0
      %v4004 = vadd.f32 0.0, %v4003
      %4005 = vmatprep.mubr.bf16.mxu0 %v3936
      %4006 = vmatmul.mubr.bf16.gmra.mrb[0].mxu0 %v3712
      %v4007 = vpop.f32.mrb[0].mxu0
      %v4008 = vadd.f32 0.0, %v4007
      %v4009 = vpop.f32.mrb[0].mxu0
      %v4010 = vadd.f32 0.0, %v4009
      %v4011 = vpop.f32.mrb[0].mxu0
      %v4012 = vadd.f32 0.0, %v4011
      %v4013 = vpop.f32.mrb[0].mxu0
      %v4014 = vadd.f32 0.0, %v4013
      %4015 = vmatprep.mubr.bf16.mxu0 %v3939
      %4016 = vmatmul.mubr.bf16.gmra.mrb[0].mxu0 %v3715
      %v4017 = vpop.f32.mrb[0].mxu0
      %v4018 = vadd.f32 0.0, %v4017
      %v4019 = vpop.f32.mrb[0].mxu0
      %v4020 = vadd.f32 0.0, %v4019
      %v4021 = vpop.f32.mrb[0].mxu0
      %v4022 = vadd.f32 0.0, %v4021
      %v4023 = vpop.f32.mrb[0].mxu0
      %v4024 = vadd.f32 0.0, %v4023
      %4025 = vmatprep.mubr.bf16.mxu0 %v3942
      %4026 = vmatmul.mubr.bf16.gmra.mrb[0].mxu0 %v3718
      %v4027 = vpop.f32.mrb[0].mxu0
      %v4028 = vadd.f32 0.0, %v4027
      %v4029 = vpop.f32.mrb[0].mxu0
      %v4030 = vadd.f32 0.0, %v4029
      %v4031 = vpop.f32.mrb[0].mxu0
      %v4032 = vadd.f32 0.0, %v4031
      %v4033 = vpop.f32.mrb[0].mxu0
      %v4034 = vadd.f32 0.0, %v4033
      %4035 = vmatprep.mubr.bf16.mxu0 %v3945
      %4036 = vmatmul.mubr.bf16.gmra.mrb[0].mxu0 %v3721
      %v4037 = vpop.f32.mrb[0].mxu0
      %v4038 = vadd.f32 0.0, %v4037
      %v4039 = vpop.f32.mrb[0].mxu0
      %v4040 = vadd.f32 0.0, %v4039
      %v4041 = vpop.f32.mrb[0].mxu0
      %v4042 = vadd.f32 0.0, %v4041
      %v4043 = vpop.f32.mrb[0].mxu0
      %v4044 = vadd.f32 0.0, %v4043
      %4045 = vmatprep.mubr.bf16.mxu0 %v3948
      %4046 = vmatmul.mubr.bf16.gmra.mrb[0].mxu0 %v3724
      %v4047 = vpop.f32.mrb[0].mxu0
      %v4048 = vadd.f32 0.0, %v4047
      %v4049 = vpop.f32.mrb[0].mxu0
      %v4050 = vadd.f32 0.0, %v4049
      %v4051 = vpop.f32.mrb[0].mxu0
      %v4052 = vadd.f32 0.0, %v4051
      %v4053 = vpop.f32.mrb[0].mxu0
      %v4054 = vadd.f32 0.0, %v4053
      %4055 = vmatprep.mubr.bf16.mxu0 %v3951
      %4056 = vmatmul.mubr.bf16.gmra.mrb[0].mxu0 %v3727
      %v4057 = vpop.f32.mrb[0].mxu0
      %v4058 = vadd.f32 0.0, %v4057
      %v4059 = vpop.f32.mrb[0].mxu0
      %v4060 = vadd.f32 0.0, %v4059
      %v4061 = vpop.f32.mrb[0].mxu0
      %v4062 = vadd.f32 0.0, %v4061
      %v4063 = vpop.f32.mrb[0].mxu0
      %v4064 = vadd.f32 0.0, %v4063
      %4065 = vdwg.mxu0
      %4066 = vmatprep.subr.bf16.mxu0 0
      %4067 = vmatpush1.bf16.msra.mxu0 %v3871
      %4068 = vmatprep.subr.bf16.mxu0 0
      %4069 = vmatpush1.bf16.msra.mxu0 %v3874
      %4070 = vmatprep.subr.bf16.mxu0 0
      %4071 = vmatpush1.bf16.msra.mxu0 %v3877
      %4072 = vmatprep.subr.bf16.mxu0 0
      %4073 = vmatpush1.bf16.msra.mxu0 %v3880
      %4074 = vmatprep.subr.bf16.mxu0 0
      %4075 = vmatpush1.bf16.msra.mxu0 %v3883
      %4076 = vmatprep.subr.bf16.mxu0 0
      %4077 = vmatpush1.bf16.msra.mxu0 %v3886
      %4078 = vmatprep.subr.bf16.mxu0 0
      %4079 = vmatpush1.bf16.msra.mxu0 %v3889
      %4080 = vmatprep.subr.bf16.mxu0 0
      %4081 = vmatpush1.bf16.msra.mxu0 %v3892
      %4082 = vmatprep.subr.bf16.mxu0 0
      %4083 = vmatpush1.bf16.msra.mxu0 %v3895
      %4084 = vmatprep.subr.bf16.mxu0 0
      %4085 = vmatpush1.bf16.msra.mxu0 %v3898
      %4086 = vmatprep.subr.bf16.mxu0 0
      %4087 = vmatpush1.bf16.msra.mxu0 0
      %4088 = vmatprep.subr.bf16.mxu0 0
      %4089 = vmatpush1.bf16.msra.mxu0 0
      %4090 = vmatprep.subr.bf16.mxu0 0
      %4091 = vmatpush1.bf16.msra.mxu0 0
      %4092 = vmatprep.subr.bf16.mxu0 0
      %4093 = vmatpush1.bf16.msra.mxu0 0
      %4094 = vmatprep.subr.bf16.mxu0 0
      %4095 = vmatpush1.bf16.msra.mxu0 0
      %4096 = vmatprep.subr.bf16.mxu0 0
      %4097 = vmatpush1.bf16.msra.mxu0 0
      %4098 = vmatprep.mubr.bf16.mxu0 %v3930
      %4099 = vmatmul.mubr.bf16.gmra.mrb[0].mxu0 %v3706
      %v4100 = vpop.f32.mrb[0].mxu0
      %v4101 = vadd.f32 0.0, %v4100
      %v4102 = vpop.f32.mrb[0].mxu0
      %v4103 = vpop.f32.mrb[0].mxu0
      %v4104 = vadd.f32 0.0, %v4103
      %v4105 = vpop.f32.mrb[0].mxu0
      %4106 = vmatprep.mubr.bf16.mxu0 %v3933
      %4107 = vmatmul.mubr.bf16.gmra.mrb[0].mxu0 %v3709
      %v4108 = vpop.f32.mrb[0].mxu0
      %v4109 = vadd.f32 0.0, %v4108
      %v4110 = vpop.f32.mrb[0].mxu0
      %v4111 = vpop.f32.mrb[0].mxu0
      %v4112 = vadd.f32 0.0, %v4111
      %v4113 = vpop.f32.mrb[0].mxu0
      %4114 = vmatprep.mubr.bf16.mxu0 %v3936
      %4115 = vmatmul.mubr.bf16.gmra.mrb[0].mxu0 %v3712
      %v4116 = vpop.f32.mrb[0].mxu0
      %v4117 = vadd.f32 0.0, %v4116
      %v4118 = vpop.f32.mrb[0].mxu0
      %v4119 = vpop.f32.mrb[0].mxu0
      %v4120 = vadd.f32 0.0, %v4119
      %v4121 = vpop.f32.mrb[0].mxu0
      %4122 = vmatprep.mubr.bf16.mxu0 %v3939
      %4123 = vmatmul.mubr.bf16.gmra.mrb[0].mxu0 %v3715
      %v4124 = vpop.f32.mrb[0].mxu0
      %v4125 = vadd.f32 0.0, %v4124
      %v4126 = vpop.f32.mrb[0].mxu0
      %v4127 = vpop.f32.mrb[0].mxu0
      %v4128 = vadd.f32 0.0, %v4127
      %v4129 = vpop.f32.mrb[0].mxu0
      %4130 = vmatprep.mubr.bf16.mxu0 %v3942
      %4131 = vmatmul.mubr.bf16.gmra.mrb[0].mxu0 %v3718
      %v4132 = vpop.f32.mrb[0].mxu0
      %v4133 = vadd.f32 0.0, %v4132
      %v4134 = vpop.f32.mrb[0].mxu0
      %v4135 = vpop.f32.mrb[0].mxu0
      %v4136 = vadd.f32 0.0, %v4135
      %v4137 = vpop.f32.mrb[0].mxu0
      %4138 = vmatprep.mubr.bf16.mxu0 %v3945
      %4139 = vmatmul.mubr.bf16.gmra.mrb[0].mxu0 %v3721
      %v4140 = vpop.f32.mrb[0].mxu0
      %v4141 = vadd.f32 0.0, %v4140
      %v4142 = vpop.f32.mrb[0].mxu0
      %v4143 = vpop.f32.mrb[0].mxu0
      %v4144 = vadd.f32 0.0, %v4143
      %v4145 = vpop.f32.mrb[0].mxu0
      %4146 = vmatprep.mubr.bf16.mxu0 %v3948
      %4147 = vmatmul.mubr.bf16.gmra.mrb[0].mxu0 %v3724
      %v4148 = vpop.f32.mrb[0].mxu0
      %v4149 = vadd.f32 0.0, %v4148
      %v4150 = vpop.f32.mrb[0].mxu0
      %v4151 = vpop.f32.mrb[0].mxu0
      %v4152 = vadd.f32 0.0, %v4151
      %v4153 = vpop.f32.mrb[0].mxu0
      %4154 = vmatprep.mubr.bf16.mxu0 %v3951
      %4155 = vmatmul.mubr.bf16.gmra.mrb[0].mxu0 %v3727
      %v4156 = vpop.f32.mrb[0].mxu0
      %v4157 = vadd.f32 0.0, %v4156
      %v4158 = vpop.f32.mrb[0].mxu0
      %v4159 = vpop.f32.mrb[0].mxu0
      %v4160 = vadd.f32 0.0, %v4159
      %v4161 = vpop.f32.mrb[0].mxu0
      %4162 = vdwg.mxu0
      %vm4163 = vcmp.lt.s32.totalorder %v1267, 12
      %vm4164 = vcmp.lt.s32.totalorder %v1268, 12
      %v4165 = vsel %vm4163, 1, 0
      %v4166 = vsel %vm4164, 1, 0
      %vm4167 = vcmp.eq.s32.totalorder %v4165, 1
      %vm4168 = vcmp.eq.s32.totalorder %v4166, 1
      %v4169 = vsel %vm4167, %v3988, -inf
      %v4170 = vsel %vm4167, %v3990, -inf
      %v4171 = vsel %vm4167, %v4101, -inf
      %v4172 = vsel %vm4168, %v3992, -inf
      %v4173 = vsel %vm4168, %v3994, -inf
      %v4174 = vsel %vm4168, %v4104, -inf
      %v4175 = vsel %vm4167, %v3998, -inf
      %v4176 = vsel %vm4167, %v4000, -inf
      %v4177 = vsel %vm4167, %v4109, -inf
      %v4178 = vsel %vm4168, %v4002, -inf
      %v4179 = vsel %vm4168, %v4004, -inf
      %v4180 = vsel %vm4168, %v4112, -inf
      %v4181 = vsel %vm4167, %v4008, -inf
      %v4182 = vsel %vm4167, %v4010, -inf
      %v4183 = vsel %vm4167, %v4117, -inf
      %v4184 = vsel %vm4168, %v4012, -inf
      %v4185 = vsel %vm4168, %v4014, -inf
      %v4186 = vsel %vm4168, %v4120, -inf
      %v4187 = vsel %vm4167, %v4018, -inf
      %v4188 = vsel %vm4167, %v4020, -inf
      %v4189 = vsel %vm4167, %v4125, -inf
      %v4190 = vsel %vm4168, %v4022, -inf
      %v4191 = vsel %vm4168, %v4024, -inf
      %v4192 = vsel %vm4168, %v4128, -inf
      %v4193 = vsel %vm4167, %v4028, -inf
      %v4194 = vsel %vm4167, %v4030, -inf
      %v4195 = vsel %vm4167, %v4133, -inf
      %v4196 = vsel %vm4168, %v4032, -inf
      %v4197 = vsel %vm4168, %v4034, -inf
      %v4198 = vsel %vm4168, %v4136, -inf
      %v4199 = vsel %vm4167, %v4038, -inf
      %v4200 = vsel %vm4167, %v4040, -inf
      %v4201 = vsel %vm4167, %v4141, -inf
      %v4202 = vsel %vm4168, %v4042, -inf
      %v4203 = vsel %vm4168, %v4044, -inf
      %v4204 = vsel %vm4168, %v4144, -inf
      %v4205 = vsel %vm4167, %v4048, -inf
      %v4206 = vsel %vm4167, %v4050, -inf
      %v4207 = vsel %vm4167, %v4149, -inf
      %v4208 = vsel %vm4168, %v4052, -inf
      %v4209 = vsel %vm4168, %v4054, -inf
      %v4210 = vsel %vm4168, %v4152, -inf
      %v4211 = vsel %vm4167, %v4058, -inf
      %v4212 = vsel %vm4167, %v4060, -inf
      %v4213 = vsel %vm4167, %v4157, -inf
      %v4214 = vsel %vm4168, %v4062, -inf
      %v4215 = vsel %vm4168, %v4064, -inf
      %v4216 = vsel %vm4168, %v4160, -inf
      %v4217 = vmax.f32 %v4169, %v4172
      %v4218 = vrot.slane %v4217, 4
      %v4219 = vmax.f32 %v4217, %v4218
      %v4220 = vrot.slane %v4219, 2
      %v4221 = vmax.f32 %v4219, %v4220
      %v4222 = vrot.slane %v4221, 1
      %v4223 = vmax.f32 %v4221, %v4222
      %v4224 = vmax.f32 %v4170, %v4173
      %v4225 = vrot.slane %v4224, 4
      %v4226 = vmax.f32 %v4224, %v4225
      %v4227 = vrot.slane %v4226, 2
      %v4228 = vmax.f32 %v4226, %v4227
      %v4229 = vrot.slane %v4228, 1
      %v4230 = vmax.f32 %v4228, %v4229
      %v4231 = vsel %vm1619, %v4171, -inf
      %v4232 = vsel %vm1619, %v4174, -inf
      %v4233 = vmax.f32 %v4231, %v4232
      %v4234 = vrot.slane %v4233, 4
      %v4235 = vmax.f32 %v4233, %v4234
      %v4236 = vrot.slane %v4235, 2
      %v4237 = vmax.f32 %v4235, %v4236
      %v4238 = vrot.slane %v4237, 1
      %v4239 = vmax.f32 %v4237, %v4238
      %v4240 = vmax.f32 %v4175, %v4178
      %v4241 = vrot.slane %v4240, 4
      %v4242 = vmax.f32 %v4240, %v4241
      %v4243 = vrot.slane %v4242, 2
      %v4244 = vmax.f32 %v4242, %v4243
      %v4245 = vrot.slane %v4244, 1
      %v4246 = vmax.f32 %v4244, %v4245
      %v4247 = vmax.f32 %v4176, %v4179
      %v4248 = vrot.slane %v4247, 4
      %v4249 = vmax.f32 %v4247, %v4248
      %v4250 = vrot.slane %v4249, 2
      %v4251 = vmax.f32 %v4249, %v4250
      %v4252 = vrot.slane %v4251, 1
      %v4253 = vmax.f32 %v4251, %v4252
      %v4254 = vsel %vm1619, %v4177, -inf
      %v4255 = vsel %vm1619, %v4180, -inf
      %v4256 = vmax.f32 %v4254, %v4255
      %v4257 = vrot.slane %v4256, 4
      %v4258 = vmax.f32 %v4256, %v4257
      %v4259 = vrot.slane %v4258, 2
      %v4260 = vmax.f32 %v4258, %v4259
      %v4261 = vrot.slane %v4260, 1
      %v4262 = vmax.f32 %v4260, %v4261
      %v4263 = vmax.f32 %v4181, %v4184
      %v4264 = vrot.slane %v4263, 4
      %v4265 = vmax.f32 %v4263, %v4264
      %v4266 = vrot.slane %v4265, 2
      %v4267 = vmax.f32 %v4265, %v4266
      %v4268 = vrot.slane %v4267, 1
      %v4269 = vmax.f32 %v4267, %v4268
      %v4270 = vmax.f32 %v4182, %v4185
      %v4271 = vrot.slane %v4270, 4
      %v4272 = vmax.f32 %v4270, %v4271
      %v4273 = vrot.slane %v4272, 2
      %v4274 = vmax.f32 %v4272, %v4273
      %v4275 = vrot.slane %v4274, 1
      %v4276 = vmax.f32 %v4274, %v4275
      %v4277 = vsel %vm1619, %v4183, -inf
      %v4278 = vsel %vm1619, %v4186, -inf
      %v4279 = vmax.f32 %v4277, %v4278
      %v4280 = vrot.slane %v4279, 4
      %v4281 = vmax.f32 %v4279, %v4280
      %v4282 = vrot.slane %v4281, 2
      %v4283 = vmax.f32 %v4281, %v4282
      %v4284 = vrot.slane %v4283, 1
      %v4285 = vmax.f32 %v4283, %v4284
      %v4286 = vmax.f32 %v4187, %v4190
      %v4287 = vrot.slane %v4286, 4
      %v4288 = vmax.f32 %v4286, %v4287
      %v4289 = vrot.slane %v4288, 2
      %v4290 = vmax.f32 %v4288, %v4289
      %v4291 = vrot.slane %v4290, 1
      %v4292 = vmax.f32 %v4290, %v4291
      %v4293 = vmax.f32 %v4188, %v4191
      %v4294 = vrot.slane %v4293, 4
      %v4295 = vmax.f32 %v4293, %v4294
      %v4296 = vrot.slane %v4295, 2
      %v4297 = vmax.f32 %v4295, %v4296
      %v4298 = vrot.slane %v4297, 1
      %v4299 = vmax.f32 %v4297, %v4298
      %v4300 = vsel %vm1619, %v4189, -inf
      %v4301 = vsel %vm1619, %v4192, -inf
      %v4302 = vmax.f32 %v4300, %v4301
      %v4303 = vrot.slane %v4302, 4
      %v4304 = vmax.f32 %v4302, %v4303
      %v4305 = vrot.slane %v4304, 2
      %v4306 = vmax.f32 %v4304, %v4305
      %v4307 = vrot.slane %v4306, 1
      %v4308 = vmax.f32 %v4306, %v4307
      %v4309 = vmax.f32 %v4193, %v4196
      %v4310 = vrot.slane %v4309, 4
      %v4311 = vmax.f32 %v4309, %v4310
      %v4312 = vrot.slane %v4311, 2
      %v4313 = vmax.f32 %v4311, %v4312
      %v4314 = vrot.slane %v4313, 1
      %v4315 = vmax.f32 %v4313, %v4314
      %v4316 = vmax.f32 %v4194, %v4197
      %v4317 = vrot.slane %v4316, 4
      %v4318 = vmax.f32 %v4316, %v4317
      %v4319 = vrot.slane %v4318, 2
      %v4320 = vmax.f32 %v4318, %v4319
      %v4321 = vrot.slane %v4320, 1
      %v4322 = vmax.f32 %v4320, %v4321
      %v4323 = vsel %vm1619, %v4195, -inf
      %v4324 = vsel %vm1619, %v4198, -inf
      %v4325 = vmax.f32 %v4323, %v4324
      %v4326 = vrot.slane %v4325, 4
      %v4327 = vmax.f32 %v4325, %v4326
      %v4328 = vrot.slane %v4327, 2
      %v4329 = vmax.f32 %v4327, %v4328
      %v4330 = vrot.slane %v4329, 1
      %v4331 = vmax.f32 %v4329, %v4330
      %v4332 = vmax.f32 %v4199, %v4202
      %v4333 = vrot.slane %v4332, 4
      %v4334 = vmax.f32 %v4332, %v4333
      %v4335 = vrot.slane %v4334, 2
      %v4336 = vmax.f32 %v4334, %v4335
      %v4337 = vrot.slane %v4336, 1
      %v4338 = vmax.f32 %v4336, %v4337
      %v4339 = vmax.f32 %v4200, %v4203
      %v4340 = vrot.slane %v4339, 4
      %v4341 = vmax.f32 %v4339, %v4340
      %v4342 = vrot.slane %v4341, 2
      %v4343 = vmax.f32 %v4341, %v4342
      %v4344 = vrot.slane %v4343, 1
      %v4345 = vmax.f32 %v4343, %v4344
      %v4346 = vsel %vm1619, %v4201, -inf
      %v4347 = vsel %vm1619, %v4204, -inf
      %v4348 = vmax.f32 %v4346, %v4347
      %v4349 = vrot.slane %v4348, 4
      %v4350 = vmax.f32 %v4348, %v4349
      %v4351 = vrot.slane %v4350, 2
      %v4352 = vmax.f32 %v4350, %v4351
      %v4353 = vrot.slane %v4352, 1
      %v4354 = vmax.f32 %v4352, %v4353
      %v4355 = vmax.f32 %v4205, %v4208
      %v4356 = vrot.slane %v4355, 4
      %v4357 = vmax.f32 %v4355, %v4356
      %v4358 = vrot.slane %v4357, 2
      %v4359 = vmax.f32 %v4357, %v4358
      %v4360 = vrot.slane %v4359, 1
      %v4361 = vmax.f32 %v4359, %v4360
      %v4362 = vmax.f32 %v4206, %v4209
      %v4363 = vrot.slane %v4362, 4
      %v4364 = vmax.f32 %v4362, %v4363
      %v4365 = vrot.slane %v4364, 2
      %v4366 = vmax.f32 %v4364, %v4365
      %v4367 = vrot.slane %v4366, 1
      %v4368 = vmax.f32 %v4366, %v4367
      %v4369 = vsel %vm1619, %v4207, -inf
      %v4370 = vsel %vm1619, %v4210, -inf
      %v4371 = vmax.f32 %v4369, %v4370
      %v4372 = vrot.slane %v4371, 4
      %v4373 = vmax.f32 %v4371, %v4372
      %v4374 = vrot.slane %v4373, 2
      %v4375 = vmax.f32 %v4373, %v4374
      %v4376 = vrot.slane %v4375, 1
      %v4377 = vmax.f32 %v4375, %v4376
      %v4378 = vmax.f32 %v4211, %v4214
      %v4379 = vrot.slane %v4378, 4
      %v4380 = vmax.f32 %v4378, %v4379
      %v4381 = vrot.slane %v4380, 2
      %v4382 = vmax.f32 %v4380, %v4381
      %v4383 = vrot.slane %v4382, 1
      %v4384 = vmax.f32 %v4382, %v4383
      %v4385 = vmax.f32 %v4212, %v4215
      %v4386 = vrot.slane %v4385, 4
      %v4387 = vmax.f32 %v4385, %v4386
      %v4388 = vrot.slane %v4387, 2
      %v4389 = vmax.f32 %v4387, %v4388
      %v4390 = vrot.slane %v4389, 1
      %v4391 = vmax.f32 %v4389, %v4390
      %v4392 = vsel %vm1619, %v4213, -inf
      %v4393 = vsel %vm1619, %v4216, -inf
      %v4394 = vmax.f32 %v4392, %v4393
      %v4395 = vrot.slane %v4394, 4
      %v4396 = vmax.f32 %v4394, %v4395
      %v4397 = vrot.slane %v4396, 2
      %v4398 = vmax.f32 %v4396, %v4397
      %v4399 = vrot.slane %v4398, 1
      %v4400 = vmax.f32 %v4398, %v4399
      %s4401 = scalar_lea.vmem %s15, 9
      %v4402 = vld [vmem:[%s4401] sm:$0x7]
      %v4404 = vlaneseq
      %v4405 = vshrl.u32 %v4404, 7
      %v4406 = vsub.s32 0, %v4405
      %v4407 = vrot.slane %v4402, %v4406
      %v4408 = vlaneseq
      %v4409 = vshrl.u32 %v4408, 7
      %v4410 = vsub.s32 1, %v4409
      %v4411 = vrot.slane %v4402, %v4410
      %v4412 = vlaneseq
      %v4413 = vshrl.u32 %v4412, 7
      %v4414 = vsub.s32 2, %v4413
      %v4415 = vrot.slane %v4402, %v4414
      %v4419 = vadd.f32 %v4223, %v4407
      %v4420 = vadd.f32 %v4230, %v4411
      %v4421 = vadd.f32 %v4239, %v4415
      %v4422 = vadd.f32 %v4246, %v4407
      %v4423 = vadd.f32 %v4253, %v4411
      %v4424 = vadd.f32 %v4262, %v4415
      %v4425 = vadd.f32 %v4269, %v4407
      %v4426 = vadd.f32 %v4276, %v4411
      %v4427 = vadd.f32 %v4285, %v4415
      %v4428 = vadd.f32 %v4292, %v4407
      %v4429 = vadd.f32 %v4299, %v4411
      %v4430 = vadd.f32 %v4308, %v4415
      %v4431 = vadd.f32 %v4315, %v4407
      %v4432 = vadd.f32 %v4322, %v4411
      %v4433 = vadd.f32 %v4331, %v4415
      %v4434 = vadd.f32 %v4338, %v4407
      %v4435 = vadd.f32 %v4345, %v4411
      %v4436 = vadd.f32 %v4354, %v4415
      %v4437 = vadd.f32 %v4361, %v4407
      %v4438 = vadd.f32 %v4368, %v4411
      %v4439 = vadd.f32 %v4377, %v4415
      %v4440 = vadd.f32 %v4384, %v4407
      %v4441 = vadd.f32 %v4391, %v4411
      %v4442 = vadd.f32 %v4400, %v4415
      %v4451 = vrot.slane %v4422, 7
      %v4452 = vsel %vm788, %v4451, %v4419
      %v4453 = vrot.slane %v4425, 6
      %v4454 = vsel %vm790, %v4453, %v4452
      %v4455 = vrot.slane %v4428, 5
      %v4456 = vsel %vm792, %v4455, %v4454
      %v4457 = vrot.slane %v4431, 4
      %v4458 = vsel %vm794, %v4457, %v4456
      %v4459 = vrot.slane %v4434, 3
      %v4460 = vsel %vm796, %v4459, %v4458
      %v4461 = vrot.slane %v4437, 2
      %v4462 = vsel %vm798, %v4461, %v4460
      %v4463 = vrot.slane %v4440, 1
      %v4464 = vsel %vm800, %v4463, %v4462
      %v4466 = vmul.f32 %v1834, %v4464
      %4467 = vrot.lane.b32.xlu0 %v4464, 64
      %v4468 = vpop.permute.xlu0 %4467
      %v4470 = vmul.f32 %v1862, %v4468
      %v4471 = vadd.f32 %v4466, %v4470
      %v4480 = vrot.slane %v4423, 7
      %v4481 = vsel %vm788, %v4480, %v4420
      %v4482 = vrot.slane %v4426, 6
      %v4483 = vsel %vm790, %v4482, %v4481
      %v4484 = vrot.slane %v4429, 5
      %v4485 = vsel %vm792, %v4484, %v4483
      %v4486 = vrot.slane %v4432, 4
      %v4487 = vsel %vm794, %v4486, %v4485
      %v4488 = vrot.slane %v4435, 3
      %v4489 = vsel %vm796, %v4488, %v4487
      %v4490 = vrot.slane %v4438, 2
      %v4491 = vsel %vm798, %v4490, %v4489
      %v4492 = vrot.slane %v4441, 1
      %v4493 = vsel %vm800, %v4492, %v4491
      %v4495 = vmul.f32 %v1871, %v4493
      %v4496 = vadd.f32 %v4471, %v4495
      %4497 = vrot.lane.b32.xlu0 %v4493, 64
      %v4498 = vpop.permute.xlu0 %4497
      %v4500 = vmul.f32 %v1900, %v4498
      %v4501 = vadd.f32 %v4496, %v4500
      %v4510 = vrot.slane %v4424, 7
      %v4511 = vsel %vm788, %v4510, %v4421
      %v4512 = vrot.slane %v4427, 6
      %v4513 = vsel %vm790, %v4512, %v4511
      %v4514 = vrot.slane %v4430, 5
      %v4515 = vsel %vm792, %v4514, %v4513
      %v4516 = vrot.slane %v4433, 4
      %v4517 = vsel %vm794, %v4516, %v4515
      %v4518 = vrot.slane %v4436, 3
      %v4519 = vsel %vm796, %v4518, %v4517
      %v4520 = vrot.slane %v4439, 2
      %v4521 = vsel %vm798, %v4520, %v4519
      %v4522 = vrot.slane %v4442, 1
      %v4523 = vsel %vm800, %v4522, %v4521
      %v4525 = vmul.f32 %v1909, %v4523
      %v4526 = vadd.f32 %v4501, %v4525
      %vm4527 = vcmask 1042432
      %v4528 = vrot.slane %v564, 5
      %v4529 = vrot.slane %v565, 5
      %v4530 = vsel %vm4527, %v4528, %v4529
      %v4531 = vrot.slane %v566, 5
      %v4532 = vsel %vm4527, %v4529, %v4531
      %v4533 = vrot.slane %v568, 5
      %v4534 = vrot.slane %v569, 5
      %v4535 = vsel %vm4527, %v4533, %v4534
      %v4536 = vrot.slane %v570, 5
      %v4537 = vsel %vm4527, %v4534, %v4536
      %v4538 = vrot.slane %v572, 5
      %v4539 = vrot.slane %v573, 5
      %v4540 = vsel %vm4527, %v4538, %v4539
      %v4541 = vrot.slane %v574, 5
      %v4542 = vsel %vm4527, %v4539, %v4541
      %v4543 = vrot.slane %v576, 5
      %v4544 = vrot.slane %v577, 5
      %v4545 = vsel %vm4527, %v4543, %v4544
      %v4546 = vrot.slane %v578, 5
      %v4547 = vsel %vm4527, %v4544, %v4546
      %v4548 = vrot.slane %v580, 5
      %v4549 = vrot.slane %v581, 5
      %v4550 = vsel %vm4527, %v4548, %v4549
      %v4551 = vrot.slane %v582, 5
      %v4552 = vsel %vm4527, %v4549, %v4551
      %v4553 = vrot.slane %v584, 5
      %v4554 = vrot.slane %v585, 5
      %v4555 = vsel %vm4527, %v4553, %v4554
      %v4556 = vrot.slane %v586, 5
      %v4557 = vsel %vm4527, %v4554, %v4556
      %v4558 = vrot.slane %v588, 5
      %v4559 = vrot.slane %v589, 5
      %v4560 = vsel %vm4527, %v4558, %v4559
      %v4561 = vrot.slane %v590, 5
      %v4562 = vsel %vm4527, %v4559, %v4561
      %v4563 = vrot.slane %v592, 5
      %v4564 = vrot.slane %v593, 5
      %v4565 = vsel %vm4527, %v4563, %v4564
      %v4566 = vrot.slane %v594, 5
      %v4567 = vsel %vm4527, %v4564, %v4566
      %v4584 = vpack.c.bf16 %v4532, %v4530
      %v4585 = vpack.c.bf16 %v4537, %v4535
      %v4586 = vpack.c.bf16 %v4542, %v4540
      %v4587 = vpack.c.bf16 %v4547, %v4545
      %v4588 = vpack.c.bf16 %v4552, %v4550
      %v4589 = vpack.c.bf16 %v4557, %v4555
      %v4590 = vpack.c.bf16 %v4562, %v4560
      %v4591 = vpack.c.bf16 %v4567, %v4565
      %vm4592 = vcmask 1041408
      %v4593 = vrot.slane %v564, 6
      %v4594 = vrot.slane %v565, 6
      %v4595 = vsel %vm4592, %v4593, %v4594
      %v4596 = vrot.slane %v566, 6
      %v4597 = vsel %vm4592, %v4594, %v4596
      %v4598 = vrot.slane %v568, 6
      %v4599 = vrot.slane %v569, 6
      %v4600 = vsel %vm4592, %v4598, %v4599
      %v4601 = vrot.slane %v570, 6
      %v4602 = vsel %vm4592, %v4599, %v4601
      %v4603 = vrot.slane %v572, 6
      %v4604 = vrot.slane %v573, 6
      %v4605 = vsel %vm4592, %v4603, %v4604
      %v4606 = vrot.slane %v574, 6
      %v4607 = vsel %vm4592, %v4604, %v4606
      %v4608 = vrot.slane %v576, 6
      %v4609 = vrot.slane %v577, 6
      %v4610 = vsel %vm4592, %v4608, %v4609
      %v4611 = vrot.slane %v578, 6
      %v4612 = vsel %vm4592, %v4609, %v4611
      %v4613 = vrot.slane %v580, 6
      %v4614 = vrot.slane %v581, 6
      %v4615 = vsel %vm4592, %v4613, %v4614
      %v4616 = vrot.slane %v582, 6
      %v4617 = vsel %vm4592, %v4614, %v4616
      %v4618 = vrot.slane %v584, 6
      %v4619 = vrot.slane %v585, 6
      %v4620 = vsel %vm4592, %v4618, %v4619
      %v4621 = vrot.slane %v586, 6
      %v4622 = vsel %vm4592, %v4619, %v4621
      %v4623 = vrot.slane %v588, 6
      %v4624 = vrot.slane %v589, 6
      %v4625 = vsel %vm4592, %v4623, %v4624
      %v4626 = vrot.slane %v590, 6
      %v4627 = vsel %vm4592, %v4624, %v4626
      %v4628 = vrot.slane %v592, 6
      %v4629 = vrot.slane %v593, 6
      %v4630 = vsel %vm4592, %v4628, %v4629
      %v4631 = vrot.slane %v594, 6
      %v4632 = vsel %vm4592, %v4629, %v4631
      %v4649 = vpack.c.bf16 %v4597, %v4595
      %v4650 = vpack.c.bf16 %v4602, %v4600
      %v4651 = vpack.c.bf16 %v4607, %v4605
      %v4652 = vpack.c.bf16 %v4612, %v4610
      %v4653 = vpack.c.bf16 %v4617, %v4615
      %v4654 = vpack.c.bf16 %v4622, %v4620
      %v4655 = vpack.c.bf16 %v4627, %v4625
      %v4656 = vpack.c.bf16 %v4632, %v4630
      %vm4657 = vcmask 1040384
      %v4658 = vrot.slane %v564, 7
      %v4659 = vrot.slane %v565, 7
      %v4660 = vsel %vm4657, %v4658, %v4659
      %v4661 = vrot.slane %v566, 7
      %v4662 = vsel %vm4657, %v4659, %v4661
      %v4663 = vrot.slane %v568, 7
      %v4664 = vrot.slane %v569, 7
      %v4665 = vsel %vm4657, %v4663, %v4664
      %v4666 = vrot.slane %v570, 7
      %v4667 = vsel %vm4657, %v4664, %v4666
      %v4668 = vrot.slane %v572, 7
      %v4669 = vrot.slane %v573, 7
      %v4670 = vsel %vm4657, %v4668, %v4669
      %v4671 = vrot.slane %v574, 7
      %v4672 = vsel %vm4657, %v4669, %v4671
      %v4673 = vrot.slane %v576, 7
      %v4674 = vrot.slane %v577, 7
      %v4675 = vsel %vm4657, %v4673, %v4674
      %v4676 = vrot.slane %v578, 7
      %v4677 = vsel %vm4657, %v4674, %v4676
      %v4678 = vrot.slane %v580, 7
      %v4679 = vrot.slane %v581, 7
      %v4680 = vsel %vm4657, %v4678, %v4679
      %v4681 = vrot.slane %v582, 7
      %v4682 = vsel %vm4657, %v4679, %v4681
      %v4683 = vrot.slane %v584, 7
      %v4684 = vrot.slane %v585, 7
      %v4685 = vsel %vm4657, %v4683, %v4684
      %v4686 = vrot.slane %v586, 7
      %v4687 = vsel %vm4657, %v4684, %v4686
      %v4688 = vrot.slane %v588, 7
      %v4689 = vrot.slane %v589, 7
      %v4690 = vsel %vm4657, %v4688, %v4689
      %v4691 = vrot.slane %v590, 7
      %v4692 = vsel %vm4657, %v4689, %v4691
      %v4693 = vrot.slane %v592, 7
      %v4694 = vrot.slane %v593, 7
      %v4695 = vsel %vm4657, %v4693, %v4694
      %v4696 = vrot.slane %v594, 7
      %v4697 = vsel %vm4657, %v4694, %v4696
      %v4714 = vpack.c.bf16 %v4662, %v4660
      %v4715 = vpack.c.bf16 %v4667, %v4665
      %v4716 = vpack.c.bf16 %v4672, %v4670
      %v4717 = vpack.c.bf16 %v4677, %v4675
      %v4718 = vpack.c.bf16 %v4682, %v4680
      %v4719 = vpack.c.bf16 %v4687, %v4685
      %v4720 = vpack.c.bf16 %v4692, %v4690
      %v4721 = vpack.c.bf16 %v4697, %v4695
      %v4722 = vpack.c.bf16 %v566, %v565
      %v4723 = vpack.c.bf16 %v570, %v569
      %v4724 = vpack.c.bf16 %v574, %v573
      %v4725 = vpack.c.bf16 %v578, %v577
      %v4726 = vpack.c.bf16 %v582, %v581
      %v4727 = vpack.c.bf16 %v586, %v585
      %v4728 = vpack.c.bf16 %v590, %v589
      %v4729 = vpack.c.bf16 %v594, %v593
      %v4738 = vrot.slane %v567, 1
      %v4739 = vsel %vm1960, %v1964, %v4738
      %v4740 = vrot.slane %v571, 1
      %v4741 = vsel %vm1960, %v1969, %v4740
      %v4742 = vrot.slane %v575, 1
      %v4743 = vsel %vm1960, %v1974, %v4742
      %v4744 = vrot.slane %v579, 1
      %v4745 = vsel %vm1960, %v1979, %v4744
      %v4746 = vrot.slane %v583, 1
      %v4747 = vsel %vm1960, %v1984, %v4746
      %v4748 = vrot.slane %v587, 1
      %v4749 = vsel %vm1960, %v1989, %v4748
      %v4750 = vrot.slane %v591, 1
      %v4751 = vsel %vm1960, %v1994, %v4750
      %v4752 = vrot.slane %v595, 1
      %v4753 = vsel %vm1960, %v1999, %v4752
      %v4762 = vpack.c.bf16 %v4739, %v1965
      %v4763 = vpack.c.bf16 %v4741, %v1970
      %v4764 = vpack.c.bf16 %v4743, %v1975
      %v4765 = vpack.c.bf16 %v4745, %v1980
      %v4766 = vpack.c.bf16 %v4747, %v1985
      %v4767 = vpack.c.bf16 %v4749, %v1990
      %v4768 = vpack.c.bf16 %v4751, %v1995
      %v4769 = vpack.c.bf16 %v4753, %v2000
      %4778 = vrot.lane.b32.xlu0 %v4584, 32
      %v4779 = vpop.permute.xlu0 %4778
      %4780 = vrot.lane.b32.xlu0 %v4585, 32
      %v4781 = vpop.permute.xlu0 %4780
      %4782 = vrot.lane.b32.xlu0 %v4586, 32
      %v4783 = vpop.permute.xlu0 %4782
      %4784 = vrot.lane.b32.xlu0 %v4587, 32
      %v4785 = vpop.permute.xlu0 %4784
      %4786 = vrot.lane.b32.xlu0 %v4588, 32
      %v4787 = vpop.permute.xlu0 %4786
      %4788 = vrot.lane.b32.xlu0 %v4589, 32
      %v4789 = vpop.permute.xlu0 %4788
      %4790 = vrot.lane.b32.xlu0 %v4590, 32
      %v4791 = vpop.permute.xlu0 %4790
      %4792 = vrot.lane.b32.xlu0 %v4591, 32
      %v4793 = vpop.permute.xlu0 %4792
      %4802 = vrot.lane.b32.xlu0 %v4649, 64
      %v4803 = vpop.permute.xlu0 %4802
      %4804 = vrot.lane.b32.xlu0 %v4650, 64
      %v4805 = vpop.permute.xlu0 %4804
      %4806 = vrot.lane.b32.xlu0 %v4651, 64
      %v4807 = vpop.permute.xlu0 %4806
      %4808 = vrot.lane.b32.xlu0 %v4652, 64
      %v4809 = vpop.permute.xlu0 %4808
      %4810 = vrot.lane.b32.xlu0 %v4653, 64
      %v4811 = vpop.permute.xlu0 %4810
      %4812 = vrot.lane.b32.xlu0 %v4654, 64
      %v4813 = vpop.permute.xlu0 %4812
      %4814 = vrot.lane.b32.xlu0 %v4655, 64
      %v4815 = vpop.permute.xlu0 %4814
      %4816 = vrot.lane.b32.xlu0 %v4656, 64
      %v4817 = vpop.permute.xlu0 %4816
      %4826 = vrot.lane.b32.xlu0 %v4714, 96
      %v4827 = vpop.permute.xlu0 %4826
      %4828 = vrot.lane.b32.xlu0 %v4715, 96
      %v4829 = vpop.permute.xlu0 %4828
      %4830 = vrot.lane.b32.xlu0 %v4716, 96
      %v4831 = vpop.permute.xlu0 %4830
      %4832 = vrot.lane.b32.xlu0 %v4717, 96
      %v4833 = vpop.permute.xlu0 %4832
      %4834 = vrot.lane.b32.xlu0 %v4718, 96
      %v4835 = vpop.permute.xlu0 %4834
      %4836 = vrot.lane.b32.xlu0 %v4719, 96
      %v4837 = vpop.permute.xlu0 %4836
      %4838 = vrot.lane.b32.xlu0 %v4720, 96
      %v4839 = vpop.permute.xlu0 %4838
      %4840 = vrot.lane.b32.xlu0 %v4721, 96
      %v4841 = vpop.permute.xlu0 %4840
      %4850 = vrot.lane.b32.xlu0 %v4762, 32
      %v4851 = vpop.permute.xlu0 %4850
      %4852 = vrot.lane.b32.xlu0 %v4763, 32
      %v4853 = vpop.permute.xlu0 %4852
      %4854 = vrot.lane.b32.xlu0 %v4764, 32
      %v4855 = vpop.permute.xlu0 %4854
      %4856 = vrot.lane.b32.xlu0 %v4765, 32
      %v4857 = vpop.permute.xlu0 %4856
      %4858 = vrot.lane.b32.xlu0 %v4766, 32
      %v4859 = vpop.permute.xlu0 %4858
      %4860 = vrot.lane.b32.xlu0 %v4767, 32
      %v4861 = vpop.permute.xlu0 %4860
      %4862 = vrot.lane.b32.xlu0 %v4768, 32
      %v4863 = vpop.permute.xlu0 %4862
      %4864 = vrot.lane.b32.xlu0 %v4769, 32
      %v4865 = vpop.permute.xlu0 %4864
      %v4867 = vsel %vm619, %v3673, %v4779
      %v4869 = vsel %vm619, %v3674, %v4781
      %v4871 = vsel %vm619, %v3675, %v4783
      %v4873 = vsel %vm619, %v3676, %v4785
      %v4875 = vsel %vm619, %v3677, %v4787
      %v4877 = vsel %vm619, %v3678, %v4789
      %v4879 = vsel %vm619, %v3679, %v4791
      %v4881 = vsel %vm619, %v3680, %v4793
      %v4883 = vsel %vm1619, %v4867, %v4803
      %v4885 = vsel %vm1619, %v4869, %v4805
      %v4887 = vsel %vm1619, %v4871, %v4807
      %v4889 = vsel %vm1619, %v4873, %v4809
      %v4891 = vsel %vm1619, %v4875, %v4811
      %v4893 = vsel %vm1619, %v4877, %v4813
      %v4895 = vsel %vm1619, %v4879, %v4815
      %v4897 = vsel %vm1619, %v4881, %v4817
      %v4899 = vsel %vm2960, %v4883, %v4827
      %v4902 = vsel %vm2960, %v4885, %v4829
      %v4905 = vsel %vm2960, %v4887, %v4831
      %v4908 = vsel %vm2960, %v4889, %v4833
      %v4911 = vsel %vm2960, %v4891, %v4835
      %v4914 = vsel %vm2960, %v4893, %v4837
      %v4917 = vsel %vm2960, %v4895, %v4839
      %v4920 = vsel %vm2960, %v4897, %v4841
      %v4924 = vsel %vm619, %v4722, %v4851
      %v4927 = vsel %vm619, %v4723, %v4853
      %v4930 = vsel %vm619, %v4724, %v4855
      %v4933 = vsel %vm619, %v4725, %v4857
      %v4936 = vsel %vm619, %v4726, %v4859
      %v4939 = vsel %vm619, %v4727, %v4861
      %v4942 = vsel %vm619, %v4728, %v4863
      %v4945 = vsel %vm619, %v4729, %v4865
      %v4946 = vld [vmem:[%s14] sm:$0xff]
      %v4947 = vld [vmem:[%s14 + $0x8] sm:$0xf]
      %v4948 = vld [vmem:[%s14 + $0xc] sm:$0xff]
      %v4949 = vld [vmem:[%s14 + $0x14] sm:$0xf]
      %v4950 = vld [vmem:[%s14 + $0x18] sm:$0xff]
      %v4951 = vld [vmem:[%s14 + $0x20] sm:$0xf]
      %v4952 = vld [vmem:[%s14 + $0x24] sm:$0xff]
      %v4953 = vld [vmem:[%s14 + $0x2c] sm:$0xf]
      %v4954 = vld [vmem:[%s14 + $0x30] sm:$0xff]
      %v4955 = vld [vmem:[%s14 + $0x38] sm:$0xf]
      %v4956 = vld [vmem:[%s14 + $0x3c] sm:$0xff]
      %v4957 = vld [vmem:[%s14 + $0x44] sm:$0xf]
      %v4958 = vld [vmem:[%s14 + $0x48] sm:$0xff]
      %v4959 = vld [vmem:[%s14 + $0x50] sm:$0xf]
      %v4960 = vld [vmem:[%s14 + $0x54] sm:$0xff]
      %v4961 = vld [vmem:[%s14 + $0x5c] sm:$0xf]
      %v4962 = vld [vmem:[%s14 + $0x60] sm:$0xff]
      %v4963 = vld [vmem:[%s14 + $0x68] sm:$0xf]
      %v4964 = vld [vmem:[%s14 + $0x6c] sm:$0xff]
      %v4965 = vld [vmem:[%s14 + $0x74] sm:$0xf]
      %v4966 = vld [vmem:[%s14 + $0x78] sm:$0xff]
      %v4967 = vld [vmem:[%s14 + $0x80] sm:$0xf]
      %v4968 = vld [vmem:[%s14 + $0x84] sm:$0xff]
      %v4969 = vld [vmem:[%s14 + $0x8c] sm:$0xf]
      %v4970 = vld [vmem:[%s14 + $0x90] sm:$0xff]
      %v4971 = vld [vmem:[%s14 + $0x98] sm:$0xf]
      %v4972 = vld [vmem:[%s14 + $0x9c] sm:$0xff]
      %v4973 = vld [vmem:[%s14 + $0xa4] sm:$0xf]
      %v4974 = vld [vmem:[%s14 + $0xa8] sm:$0xff]
      %v4975 = vld [vmem:[%s14 + $0xb0] sm:$0xf]
      %v4976 = vld [vmem:[%s14 + $0xb4] sm:$0xff]
      %v4977 = vld [vmem:[%s14 + $0xbc] sm:$0xf]
      %v4978 = vld [vmem:[%s14 + $0xc0] sm:$0xff]
      %v4979 = vld [vmem:[%s14 + $0xc8] sm:$0xf]
      %v4980 = vld [vmem:[%s14 + $0xcc] sm:$0xff]
      %v4981 = vld [vmem:[%s14 + $0xd4] sm:$0xf]
      %v4982 = vld [vmem:[%s14 + $0xd8] sm:$0xff]
      %v4983 = vld [vmem:[%s14 + $0xe0] sm:$0xf]
      %v4984 = vld [vmem:[%s14 + $0xe4] sm:$0xff]
      %v4985 = vld [vmem:[%s14 + $0xec] sm:$0xf]
      %v4986 = vld [vmem:[%s14 + $0xf0] sm:$0xff]
      %v4987 = vld [vmem:[%s14 + $0xf8] sm:$0xf]
      %v4988 = vld [vmem:[%s14 + $0xfc] sm:$0xff]
      %v4989 = vld [vmem:[%s14 + $0x104] sm:$0xf]
      %v4990 = vld [vmem:[%s14 + $0x108] sm:$0xff]
      %v4991 = vld [vmem:[%s14 + $0x110] sm:$0xf]
      %v4992 = vld [vmem:[%s14 + $0x114] sm:$0xff]
      %v4993 = vld [vmem:[%s14 + $0x11c] sm:$0xf]
      %v4994 = vld [vmem:[%s14 + $0x120] sm:$0xff]
      %v4995 = vld [vmem:[%s14 + $0x128] sm:$0xf]
      %v4996 = vld [vmem:[%s14 + $0x12c] sm:$0xff]
      %v4997 = vld [vmem:[%s14 + $0x134] sm:$0xf]
      %v4998 = vld [vmem:[%s14 + $0x138] sm:$0xff]
      %v4999 = vld [vmem:[%s14 + $0x140] sm:$0xf]
      %v5000 = vld [vmem:[%s14 + $0x144] sm:$0xff]
      %v5001 = vld [vmem:[%s14 + $0x14c] sm:$0xf]
      %v5002 = vld [vmem:[%s14 + $0x150] sm:$0xff]
      %v5003 = vld [vmem:[%s14 + $0x158] sm:$0xf]
      %v5004 = vld [vmem:[%s14 + $0x15c] sm:$0xff]
      %v5005 = vld [vmem:[%s14 + $0x164] sm:$0xf]
      %v5006 = vld [vmem:[%s14 + $0x168] sm:$0xff]
      %v5007 = vld [vmem:[%s14 + $0x170] sm:$0xf]
      %v5008 = vld [vmem:[%s14 + $0x174] sm:$0xff]
      %v5009 = vld [vmem:[%s14 + $0x17c] sm:$0xf]
      %v5010 = vld [vmem:[%s14 + $0x180] sm:$0xff]
      %v5011 = vld [vmem:[%s14 + $0x188] sm:$0xf]
      %v5012 = vld [vmem:[%s14 + $0x18c] sm:$0xff]
      %v5013 = vld [vmem:[%s14 + $0x194] sm:$0xf]
      %v5014 = vld [vmem:[%s14 + $0x198] sm:$0xff]
      %v5015 = vld [vmem:[%s14 + $0x1a0] sm:$0xf]
      %v5016 = vld [vmem:[%s14 + $0x1a4] sm:$0xff]
      %v5017 = vld [vmem:[%s14 + $0x1ac] sm:$0xf]
      %v5018 = vld [vmem:[%s14 + $0x1b0] sm:$0xff]
      %v5019 = vld [vmem:[%s14 + $0x1b8] sm:$0xf]
      %v5020 = vld [vmem:[%s14 + $0x1bc] sm:$0xff]
      %v5021 = vld [vmem:[%s14 + $0x1c4] sm:$0xf]
      %v5022 = vld [vmem:[%s14 + $0x1c8] sm:$0xff]
      %v5023 = vld [vmem:[%s14 + $0x1d0] sm:$0xf]
      %v5024 = vld [vmem:[%s14 + $0x1d4] sm:$0xff]
      %v5025 = vld [vmem:[%s14 + $0x1dc] sm:$0xf]
      %v5106 = vunpack.c.l.b16 %v4946
      %v5107 = vunpack.c.h.b16 %v4946
      %v5108 = vunpack.c.l.b16 %v4947
      %v5109 = vunpack.c.l.b16 %v4948
      %v5110 = vunpack.c.h.b16 %v4948
      %v5111 = vunpack.c.l.b16 %v4949
      %v5112 = vunpack.c.l.b16 %v4950
      %v5113 = vunpack.c.h.b16 %v4950
      %v5114 = vunpack.c.l.b16 %v4951
      %v5115 = vunpack.c.l.b16 %v4952
      %v5116 = vunpack.c.h.b16 %v4952
      %v5117 = vunpack.c.l.b16 %v4953
      %v5118 = vunpack.c.l.b16 %v4954
      %v5119 = vunpack.c.h.b16 %v4954
      %v5120 = vunpack.c.l.b16 %v4955
      %v5121 = vunpack.c.l.b16 %v4956
      %v5122 = vunpack.c.h.b16 %v4956
      %v5123 = vunpack.c.l.b16 %v4957
      %v5124 = vunpack.c.l.b16 %v4958
      %v5125 = vunpack.c.h.b16 %v4958
      %v5126 = vunpack.c.l.b16 %v4959
      %v5127 = vunpack.c.l.b16 %v4960
      %v5128 = vunpack.c.h.b16 %v4960
      %v5129 = vunpack.c.l.b16 %v4961
      %v5130 = vunpack.c.l.b16 %v4962
      %v5131 = vunpack.c.h.b16 %v4962
      %v5132 = vunpack.c.l.b16 %v4963
      %v5133 = vunpack.c.l.b16 %v4964
      %v5134 = vunpack.c.h.b16 %v4964
      %v5135 = vunpack.c.l.b16 %v4965
      %v5136 = vunpack.c.l.b16 %v4966
      %v5137 = vunpack.c.h.b16 %v4966
      %v5138 = vunpack.c.l.b16 %v4967
      %v5139 = vunpack.c.l.b16 %v4968
      %v5140 = vunpack.c.h.b16 %v4968
      %v5141 = vunpack.c.l.b16 %v4969
      %v5142 = vunpack.c.l.b16 %v4970
      %v5143 = vunpack.c.h.b16 %v4970
      %v5144 = vunpack.c.l.b16 %v4971
      %v5145 = vunpack.c.l.b16 %v4972
      %v5146 = vunpack.c.h.b16 %v4972
      %v5147 = vunpack.c.l.b16 %v4973
      %v5148 = vunpack.c.l.b16 %v4974
      %v5149 = vunpack.c.h.b16 %v4974
      %v5150 = vunpack.c.l.b16 %v4975
      %v5151 = vunpack.c.l.b16 %v4976
      %v5152 = vunpack.c.h.b16 %v4976
      %v5153 = vunpack.c.l.b16 %v4977
      %v5154 = vunpack.c.l.b16 %v4978
      %v5155 = vunpack.c.h.b16 %v4978
      %v5156 = vunpack.c.l.b16 %v4979
      %v5157 = vunpack.c.l.b16 %v4980
      %v5158 = vunpack.c.h.b16 %v4980
      %v5159 = vunpack.c.l.b16 %v4981
      %v5160 = vunpack.c.l.b16 %v4982
      %v5161 = vunpack.c.h.b16 %v4982
      %v5162 = vunpack.c.l.b16 %v4983
      %v5163 = vunpack.c.l.b16 %v4984
      %v5164 = vunpack.c.h.b16 %v4984
      %v5165 = vunpack.c.l.b16 %v4985
      %v5166 = vunpack.c.l.b16 %v4986
      %v5167 = vunpack.c.h.b16 %v4986
      %v5168 = vunpack.c.l.b16 %v4987
      %v5169 = vunpack.c.l.b16 %v4988
      %v5170 = vunpack.c.h.b16 %v4988
      %v5171 = vunpack.c.l.b16 %v4989
      %v5172 = vunpack.c.l.b16 %v4990
      %v5173 = vunpack.c.h.b16 %v4990
      %v5174 = vunpack.c.l.b16 %v4991
      %v5175 = vunpack.c.l.b16 %v4992
      %v5176 = vunpack.c.h.b16 %v4992
      %v5177 = vunpack.c.l.b16 %v4993
      %v5178 = vunpack.c.l.b16 %v4994
      %v5179 = vunpack.c.h.b16 %v4994
      %v5180 = vunpack.c.l.b16 %v4995
      %v5181 = vunpack.c.l.b16 %v4996
      %v5182 = vunpack.c.h.b16 %v4996
      %v5183 = vunpack.c.l.b16 %v4997
      %v5184 = vunpack.c.l.b16 %v4998
      %v5185 = vunpack.c.h.b16 %v4998
      %v5186 = vunpack.c.l.b16 %v4999
      %v5187 = vunpack.c.l.b16 %v5000
      %v5188 = vunpack.c.h.b16 %v5000
      %v5189 = vunpack.c.l.b16 %v5001
      %v5190 = vunpack.c.l.b16 %v5002
      %v5191 = vunpack.c.h.b16 %v5002
      %v5192 = vunpack.c.l.b16 %v5003
      %v5193 = vunpack.c.l.b16 %v5004
      %v5194 = vunpack.c.h.b16 %v5004
      %v5195 = vunpack.c.l.b16 %v5005
      %v5196 = vunpack.c.l.b16 %v5006
      %v5197 = vunpack.c.h.b16 %v5006
      %v5198 = vunpack.c.l.b16 %v5007
      %v5199 = vunpack.c.l.b16 %v5008
      %v5200 = vunpack.c.h.b16 %v5008
      %v5201 = vunpack.c.l.b16 %v5009
      %v5202 = vunpack.c.l.b16 %v5010
      %v5203 = vunpack.c.h.b16 %v5010
      %v5204 = vunpack.c.l.b16 %v5011
      %v5205 = vunpack.c.l.b16 %v5012
      %v5206 = vunpack.c.h.b16 %v5012
      %v5207 = vunpack.c.l.b16 %v5013
      %v5208 = vunpack.c.l.b16 %v5014
      %v5209 = vunpack.c.h.b16 %v5014
      %v5210 = vunpack.c.l.b16 %v5015
      %v5211 = vunpack.c.l.b16 %v5016
      %v5212 = vunpack.c.h.b16 %v5016
      %v5213 = vunpack.c.l.b16 %v5017
      %v5214 = vunpack.c.l.b16 %v5018
      %v5215 = vunpack.c.h.b16 %v5018
      %v5216 = vunpack.c.l.b16 %v5019
      %v5217 = vunpack.c.l.b16 %v5020
      %v5218 = vunpack.c.h.b16 %v5020
      %v5219 = vunpack.c.l.b16 %v5021
      %v5220 = vunpack.c.l.b16 %v5022
      %v5221 = vunpack.c.h.b16 %v5022
      %v5222 = vunpack.c.l.b16 %v5023
      %v5223 = vunpack.c.l.b16 %v5024
      %v5224 = vunpack.c.h.b16 %v5024
      %v5225 = vunpack.c.l.b16 %v5025
      %v5226 = vpack.c.b16 %v5109, %v5106
      %v5227 = vpack.c.b16 %v5110, %v5107
      %v5228 = vpack.c.b16 %v5111, %v5108
      %v5229 = vpack.c.b16 %v5115, %v5112
      %v5230 = vpack.c.b16 %v5116, %v5113
      %v5231 = vpack.c.b16 %v5117, %v5114
      %v5232 = vpack.c.b16 %v5121, %v5118
      %v5233 = vpack.c.b16 %v5122, %v5119
      %v5234 = vpack.c.b16 %v5123, %v5120
      %v5235 = vpack.c.b16 %v5127, %v5124
      %v5236 = vpack.c.b16 %v5128, %v5125
      %v5237 = vpack.c.b16 %v5129, %v5126
      %v5238 = vpack.c.b16 %v5133, %v5130
      %v5239 = vpack.c.b16 %v5134, %v5131
      %v5240 = vpack.c.b16 %v5135, %v5132
      %v5241 = vpack.c.b16 %v5139, %v5136
      %v5242 = vpack.c.b16 %v5140, %v5137
      %v5243 = vpack.c.b16 %v5141, %v5138
      %v5244 = vpack.c.b16 %v5145, %v5142
      %v5245 = vpack.c.b16 %v5146, %v5143
      %v5246 = vpack.c.b16 %v5147, %v5144
      %v5247 = vpack.c.b16 %v5151, %v5148
      %v5248 = vpack.c.b16 %v5152, %v5149
      %v5249 = vpack.c.b16 %v5153, %v5150
      %v5250 = vpack.c.b16 %v5157, %v5154
      %v5251 = vpack.c.b16 %v5158, %v5155
      %v5252 = vpack.c.b16 %v5159, %v5156
      %v5253 = vpack.c.b16 %v5163, %v5160
      %v5254 = vpack.c.b16 %v5164, %v5161
      %v5255 = vpack.c.b16 %v5165, %v5162
      %v5256 = vpack.c.b16 %v5169, %v5166
      %v5257 = vpack.c.b16 %v5170, %v5167
      %v5258 = vpack.c.b16 %v5171, %v5168
      %v5259 = vpack.c.b16 %v5175, %v5172
      %v5260 = vpack.c.b16 %v5176, %v5173
      %v5261 = vpack.c.b16 %v5177, %v5174
      %v5262 = vpack.c.b16 %v5181, %v5178
      %v5263 = vpack.c.b16 %v5182, %v5179
      %v5264 = vpack.c.b16 %v5183, %v5180
      %v5265 = vpack.c.b16 %v5187, %v5184
      %v5266 = vpack.c.b16 %v5188, %v5185
      %v5267 = vpack.c.b16 %v5189, %v5186
      %v5268 = vpack.c.b16 %v5193, %v5190
      %v5269 = vpack.c.b16 %v5194, %v5191
      %v5270 = vpack.c.b16 %v5195, %v5192
      %v5271 = vpack.c.b16 %v5199, %v5196
      %v5272 = vpack.c.b16 %v5200, %v5197
      %v5273 = vpack.c.b16 %v5201, %v5198
      %v5274 = vpack.c.b16 %v5205, %v5202
      %v5275 = vpack.c.b16 %v5206, %v5203
      %v5276 = vpack.c.b16 %v5207, %v5204
      %v5277 = vpack.c.b16 %v5211, %v5208
      %v5278 = vpack.c.b16 %v5212, %v5209
      %v5279 = vpack.c.b16 %v5213, %v5210
      %v5280 = vpack.c.b16 %v5217, %v5214
      %v5281 = vpack.c.b16 %v5218, %v5215
      %v5282 = vpack.c.b16 %v5219, %v5216
      %v5283 = vpack.c.b16 %v5223, %v5220
      %v5284 = vpack.c.b16 %v5224, %v5221
      %v5285 = vpack.c.b16 %v5225, %v5222
      %v5346 = vsel %vm1619, %v4924, 0
      %v5348 = vsel %vm1619, %v4927, 0
      %v5350 = vsel %vm1619, %v4930, 0
      %v5352 = vsel %vm1619, %v4933, 0
      %v5354 = vsel %vm1619, %v4936, 0
      %v5356 = vsel %vm1619, %v4939, 0
      %v5358 = vsel %vm1619, %v4942, 0
      %v5360 = vsel %vm1619, %v4945, 0
      %5362 = vmatprep.subr.bf16.mxu0 %v5227
      %5363 = vmatpush1.bf16.msra.mxu0 %v5226
      %5364 = vmatprep.subr.bf16.mxu0 %v5230
      %5365 = vmatpush1.bf16.msra.mxu0 %v5229
      %5366 = vmatprep.subr.bf16.mxu0 %v5233
      %5367 = vmatpush1.bf16.msra.mxu0 %v5232
      %5368 = vmatprep.subr.bf16.mxu0 %v5236
      %5369 = vmatpush1.bf16.msra.mxu0 %v5235
      %5370 = vmatprep.subr.bf16.mxu0 %v5239
      %5371 = vmatpush1.bf16.msra.mxu0 %v5238
      %5372 = vmatprep.subr.bf16.mxu0 %v5242
      %5373 = vmatpush1.bf16.msra.mxu0 %v5241
      %5374 = vmatprep.subr.bf16.mxu0 %v5245
      %5375 = vmatpush1.bf16.msra.mxu0 %v5244
      %5376 = vmatprep.subr.bf16.mxu0 %v5248
      %5377 = vmatpush1.bf16.msra.mxu0 %v5247
      %5378 = vmatprep.subr.bf16.mxu0 %v5251
      %5379 = vmatpush1.bf16.msra.mxu0 %v5250
      %5380 = vmatprep.subr.bf16.mxu0 %v5254
      %5381 = vmatpush1.bf16.msra.mxu0 %v5253
      %5382 = vmatprep.subr.bf16.mxu0 %v5257
      %5383 = vmatpush1.bf16.msra.mxu0 %v5256
      %5384 = vmatprep.subr.bf16.mxu0 %v5260
      %5385 = vmatpush1.bf16.msra.mxu0 %v5259
      %5386 = vmatprep.subr.bf16.mxu0 %v5263
      %5387 = vmatpush1.bf16.msra.mxu0 %v5262
      %5388 = vmatprep.subr.bf16.mxu0 %v5266
      %5389 = vmatpush1.bf16.msra.mxu0 %v5265
      %5390 = vmatprep.subr.bf16.mxu0 %v5269
      %5391 = vmatpush1.bf16.msra.mxu0 %v5268
      %5392 = vmatprep.subr.bf16.mxu0 %v5272
      %5393 = vmatpush1.bf16.msra.mxu0 %v5271
      %5394 = vmatprep.mubr.bf16.mxu0 %v4899
      %5395 = vmatmul.mubr.bf16.gmra.mrb[0].mxu0 %v3706
      %v5396 = vpop.f32.mrb[0].mxu0
      %v5397 = vadd.f32 0.0, %v5396
      %v5398 = vpop.f32.mrb[0].mxu0
      %v5399 = vadd.f32 0.0, %v5398
      %v5400 = vpop.f32.mrb[0].mxu0
      %v5401 = vadd.f32 0.0, %v5400
      %v5402 = vpop.f32.mrb[0].mxu0
      %v5403 = vadd.f32 0.0, %v5402
      %5404 = vmatprep.mubr.bf16.mxu0 %v4902
      %5405 = vmatmul.mubr.bf16.gmra.mrb[0].mxu0 %v3709
      %v5406 = vpop.f32.mrb[0].mxu0
      %v5407 = vadd.f32 0.0, %v5406
      %v5408 = vpop.f32.mrb[0].mxu0
      %v5409 = vadd.f32 0.0, %v5408
      %v5410 = vpop.f32.mrb[0].mxu0
      %v5411 = vadd.f32 0.0, %v5410
      %v5412 = vpop.f32.mrb[0].mxu0
      %v5413 = vadd.f32 0.0, %v5412
      %5414 = vmatprep.mubr.bf16.mxu0 %v4905
      %5415 = vmatmul.mubr.bf16.gmra.mrb[0].mxu0 %v3712
      %v5416 = vpop.f32.mrb[0].mxu0
      %v5417 = vadd.f32 0.0, %v5416
      %v5418 = vpop.f32.mrb[0].mxu0
      %v5419 = vadd.f32 0.0, %v5418
      %v5420 = vpop.f32.mrb[0].mxu0
      %v5421 = vadd.f32 0.0, %v5420
      %v5422 = vpop.f32.mrb[0].mxu0
      %v5423 = vadd.f32 0.0, %v5422
      %5424 = vmatprep.mubr.bf16.mxu0 %v4908
      %5425 = vmatmul.mubr.bf16.gmra.mrb[0].mxu0 %v3715
      %v5426 = vpop.f32.mrb[0].mxu0
      %v5427 = vadd.f32 0.0, %v5426
      %v5428 = vpop.f32.mrb[0].mxu0
      %v5429 = vadd.f32 0.0, %v5428
      %v5430 = vpop.f32.mrb[0].mxu0
      %v5431 = vadd.f32 0.0, %v5430
      %v5432 = vpop.f32.mrb[0].mxu0
      %v5433 = vadd.f32 0.0, %v5432
      %5434 = vmatprep.mubr.bf16.mxu0 %v4911
      %5435 = vmatmul.mubr.bf16.gmra.mrb[0].mxu0 %v3718
      %v5436 = vpop.f32.mrb[0].mxu0
      %v5437 = vadd.f32 0.0, %v5436
      %v5438 = vpop.f32.mrb[0].mxu0
      %v5439 = vadd.f32 0.0, %v5438
      %v5440 = vpop.f32.mrb[0].mxu0
      %v5441 = vadd.f32 0.0, %v5440
      %v5442 = vpop.f32.mrb[0].mxu0
      %v5443 = vadd.f32 0.0, %v5442
      %5444 = vmatprep.mubr.bf16.mxu0 %v4914
      %5445 = vmatmul.mubr.bf16.gmra.mrb[0].mxu0 %v3721
      %v5446 = vpop.f32.mrb[0].mxu0
      %v5447 = vadd.f32 0.0, %v5446
      %v5448 = vpop.f32.mrb[0].mxu0
      %v5449 = vadd.f32 0.0, %v5448
      %v5450 = vpop.f32.mrb[0].mxu0
      %v5451 = vadd.f32 0.0, %v5450
      %v5452 = vpop.f32.mrb[0].mxu0
      %v5453 = vadd.f32 0.0, %v5452
      %5454 = vmatprep.mubr.bf16.mxu0 %v4917
      %5455 = vmatmul.mubr.bf16.gmra.mrb[0].mxu0 %v3724
      %v5456 = vpop.f32.mrb[0].mxu0
      %v5457 = vadd.f32 0.0, %v5456
      %v5458 = vpop.f32.mrb[0].mxu0
      %v5459 = vadd.f32 0.0, %v5458
      %v5460 = vpop.f32.mrb[0].mxu0
      %v5461 = vadd.f32 0.0, %v5460
      %v5462 = vpop.f32.mrb[0].mxu0
      %v5463 = vadd.f32 0.0, %v5462
      %5464 = vmatprep.mubr.bf16.mxu0 %v4920
      %5465 = vmatmul.mubr.bf16.gmra.mrb[0].mxu0 %v3727
      %v5466 = vpop.f32.mrb[0].mxu0
      %v5467 = vadd.f32 0.0, %v5466
      %v5468 = vpop.f32.mrb[0].mxu0
      %v5469 = vadd.f32 0.0, %v5468
      %v5470 = vpop.f32.mrb[0].mxu0
      %v5471 = vadd.f32 0.0, %v5470
      %v5472 = vpop.f32.mrb[0].mxu0
      %v5473 = vadd.f32 0.0, %v5472
      %5474 = vdwg.mxu0
      %5475 = vmatprep.subr.bf16.mxu0 %v5275
      %5476 = vmatpush1.bf16.msra.mxu0 %v5274
      %5477 = vmatprep.subr.bf16.mxu0 %v5278
      %5478 = vmatpush1.bf16.msra.mxu0 %v5277
      %5479 = vmatprep.subr.bf16.mxu0 %v5281
      %5480 = vmatpush1.bf16.msra.mxu0 %v5280
      %5481 = vmatprep.subr.bf16.mxu0 %v5284
      %5482 = vmatpush1.bf16.msra.mxu0 %v5283
      %5483 = vmatprep.subr.bf16.mxu0 0
      %5484 = vmatpush1.bf16.msra.mxu0 0
      %5485 = vmatprep.subr.bf16.mxu0 0
      %5486 = vmatpush1.bf16.msra.mxu0 0
      %5487 = vmatprep.subr.bf16.mxu0 0
      %5488 = vmatpush1.bf16.msra.mxu0 0
      %5489 = vmatprep.subr.bf16.mxu0 0
      %5490 = vmatpush1.bf16.msra.mxu0 0
      %5491 = vmatprep.subr.bf16.mxu0 0
      %5492 = vmatpush1.bf16.msra.mxu0 0
      %5493 = vmatprep.subr.bf16.mxu0 0
      %5494 = vmatpush1.bf16.msra.mxu0 0
      %5495 = vmatprep.subr.bf16.mxu0 0
      %5496 = vmatpush1.bf16.msra.mxu0 0
      %5497 = vmatprep.subr.bf16.mxu0 0
      %5498 = vmatpush1.bf16.msra.mxu0 0
      %5499 = vmatprep.subr.bf16.mxu0 0
      %5500 = vmatpush1.bf16.msra.mxu0 0
      %5501 = vmatprep.subr.bf16.mxu0 0
      %5502 = vmatpush1.bf16.msra.mxu0 0
      %5503 = vmatprep.subr.bf16.mxu0 0
      %5504 = vmatpush1.bf16.msra.mxu0 0
      %5505 = vmatprep.subr.bf16.mxu0 0
      %5506 = vmatpush1.bf16.msra.mxu0 0
      %5507 = vmatprep.mubr.bf16.mxu0 0
      %5508 = vmatmul.mubr.bf16.gmra.mrb[0].mxu0 %v5346
      %v5509 = vpop.f32.mrb[0].mxu0
      %v5510 = vadd.f32 %v5397, %v5509
      %v5511 = vpop.f32.mrb[0].mxu0
      %v5512 = vadd.f32 %v5399, %v5511
      %v5513 = vpop.f32.mrb[0].mxu0
      %v5514 = vadd.f32 %v5401, %v5513
      %v5515 = vpop.f32.mrb[0].mxu0
      %v5516 = vadd.f32 %v5403, %v5515
      %5517 = vmatprep.mubr.bf16.mxu0 0
      %5518 = vmatmul.mubr.bf16.gmra.mrb[0].mxu0 %v5348
      %v5519 = vpop.f32.mrb[0].mxu0
      %v5520 = vadd.f32 %v5407, %v5519
      %v5521 = vpop.f32.mrb[0].mxu0
      %v5522 = vadd.f32 %v5409, %v5521
      %v5523 = vpop.f32.mrb[0].mxu0
      %v5524 = vadd.f32 %v5411, %v5523
      %v5525 = vpop.f32.mrb[0].mxu0
      %v5526 = vadd.f32 %v5413, %v5525
      %5527 = vmatprep.mubr.bf16.mxu0 0
      %5528 = vmatmul.mubr.bf16.gmra.mrb[0].mxu0 %v5350
      %v5529 = vpop.f32.mrb[0].mxu0
      %v5530 = vadd.f32 %v5417, %v5529
      %v5531 = vpop.f32.mrb[0].mxu0
      %v5532 = vadd.f32 %v5419, %v5531
      %v5533 = vpop.f32.mrb[0].mxu0
      %v5534 = vadd.f32 %v5421, %v5533
      %v5535 = vpop.f32.mrb[0].mxu0
      %v5536 = vadd.f32 %v5423, %v5535
      %5537 = vmatprep.mubr.bf16.mxu0 0
      %5538 = vmatmul.mubr.bf16.gmra.mrb[0].mxu0 %v5352
      %v5539 = vpop.f32.mrb[0].mxu0
      %v5540 = vadd.f32 %v5427, %v5539
      %v5541 = vpop.f32.mrb[0].mxu0
      %v5542 = vadd.f32 %v5429, %v5541
      %v5543 = vpop.f32.mrb[0].mxu0
      %v5544 = vadd.f32 %v5431, %v5543
      %v5545 = vpop.f32.mrb[0].mxu0
      %v5546 = vadd.f32 %v5433, %v5545
      %5547 = vmatprep.mubr.bf16.mxu0 0
      %5548 = vmatmul.mubr.bf16.gmra.mrb[0].mxu0 %v5354
      %v5549 = vpop.f32.mrb[0].mxu0
      %v5550 = vadd.f32 %v5437, %v5549
      %v5551 = vpop.f32.mrb[0].mxu0
      %v5552 = vadd.f32 %v5439, %v5551
      %v5553 = vpop.f32.mrb[0].mxu0
      %v5554 = vadd.f32 %v5441, %v5553
      %v5555 = vpop.f32.mrb[0].mxu0
      %v5556 = vadd.f32 %v5443, %v5555
      %5557 = vmatprep.mubr.bf16.mxu0 0
      %5558 = vmatmul.mubr.bf16.gmra.mrb[0].mxu0 %v5356
      %v5559 = vpop.f32.mrb[0].mxu0
      %v5560 = vadd.f32 %v5447, %v5559
      %v5561 = vpop.f32.mrb[0].mxu0
      %v5562 = vadd.f32 %v5449, %v5561
      %v5563 = vpop.f32.mrb[0].mxu0
      %v5564 = vadd.f32 %v5451, %v5563
      %v5565 = vpop.f32.mrb[0].mxu0
      %v5566 = vadd.f32 %v5453, %v5565
      %5567 = vmatprep.mubr.bf16.mxu0 0
      %5568 = vmatmul.mubr.bf16.gmra.mrb[0].mxu0 %v5358
      %v5569 = vpop.f32.mrb[0].mxu0
      %v5570 = vadd.f32 %v5457, %v5569
      %v5571 = vpop.f32.mrb[0].mxu0
      %v5572 = vadd.f32 %v5459, %v5571
      %v5573 = vpop.f32.mrb[0].mxu0
      %v5574 = vadd.f32 %v5461, %v5573
      %v5575 = vpop.f32.mrb[0].mxu0
      %v5576 = vadd.f32 %v5463, %v5575
      %5577 = vmatprep.mubr.bf16.mxu0 0
      %5578 = vmatmul.mubr.bf16.gmra.mrb[0].mxu0 %v5360
      %v5579 = vpop.f32.mrb[0].mxu0
      %v5580 = vadd.f32 %v5467, %v5579
      %v5581 = vpop.f32.mrb[0].mxu0
      %v5582 = vadd.f32 %v5469, %v5581
      %v5583 = vpop.f32.mrb[0].mxu0
      %v5584 = vadd.f32 %v5471, %v5583
      %v5585 = vpop.f32.mrb[0].mxu0
      %v5586 = vadd.f32 %v5473, %v5585
      %5587 = vdwg.mxu0
      %5588 = vmatprep.subr.bf16.mxu0 0
      %5589 = vmatpush1.bf16.msra.mxu0 %v5228
      %5590 = vmatprep.subr.bf16.mxu0 0
      %5591 = vmatpush1.bf16.msra.mxu0 %v5231
      %5592 = vmatprep.subr.bf16.mxu0 0
      %5593 = vmatpush1.bf16.msra.mxu0 %v5234
      %5594 = vmatprep.subr.bf16.mxu0 0
      %5595 = vmatpush1.bf16.msra.mxu0 %v5237
      %5596 = vmatprep.subr.bf16.mxu0 0
      %5597 = vmatpush1.bf16.msra.mxu0 %v5240
      %5598 = vmatprep.subr.bf16.mxu0 0
      %5599 = vmatpush1.bf16.msra.mxu0 %v5243
      %5600 = vmatprep.subr.bf16.mxu0 0
      %5601 = vmatpush1.bf16.msra.mxu0 %v5246
      %5602 = vmatprep.subr.bf16.mxu0 0
      %5603 = vmatpush1.bf16.msra.mxu0 %v5249
      %5604 = vmatprep.subr.bf16.mxu0 0
      %5605 = vmatpush1.bf16.msra.mxu0 %v5252
      %5606 = vmatprep.subr.bf16.mxu0 0
      %5607 = vmatpush1.bf16.msra.mxu0 %v5255
      %5608 = vmatprep.subr.bf16.mxu0 0
      %5609 = vmatpush1.bf16.msra.mxu0 %v5258
      %5610 = vmatprep.subr.bf16.mxu0 0
      %5611 = vmatpush1.bf16.msra.mxu0 %v5261
      %5612 = vmatprep.subr.bf16.mxu0 0
      %5613 = vmatpush1.bf16.msra.mxu0 %v5264
      %5614 = vmatprep.subr.bf16.mxu0 0
      %5615 = vmatpush1.bf16.msra.mxu0 %v5267
      %5616 = vmatprep.subr.bf16.mxu0 0
      %5617 = vmatpush1.bf16.msra.mxu0 %v5270
      %5618 = vmatprep.subr.bf16.mxu0 0
      %5619 = vmatpush1.bf16.msra.mxu0 %v5273
      %5620 = vmatprep.mubr.bf16.mxu0 %v4899
      %5621 = vmatmul.mubr.bf16.gmra.mrb[0].mxu0 %v3706
      %v5622 = vpop.f32.mrb[0].mxu0
      %v5623 = vadd.f32 0.0, %v5622
      %v5624 = vpop.f32.mrb[0].mxu0
      %v5625 = vpop.f32.mrb[0].mxu0
      %v5626 = vadd.f32 0.0, %v5625
      %v5627 = vpop.f32.mrb[0].mxu0
      %5628 = vmatprep.mubr.bf16.mxu0 %v4902
      %5629 = vmatmul.mubr.bf16.gmra.mrb[0].mxu0 %v3709
      %v5630 = vpop.f32.mrb[0].mxu0
      %v5631 = vadd.f32 0.0, %v5630
      %v5632 = vpop.f32.mrb[0].mxu0
      %v5633 = vpop.f32.mrb[0].mxu0
      %v5634 = vadd.f32 0.0, %v5633
      %v5635 = vpop.f32.mrb[0].mxu0
      %5636 = vmatprep.mubr.bf16.mxu0 %v4905
      %5637 = vmatmul.mubr.bf16.gmra.mrb[0].mxu0 %v3712
      %v5638 = vpop.f32.mrb[0].mxu0
      %v5639 = vadd.f32 0.0, %v5638
      %v5640 = vpop.f32.mrb[0].mxu0
      %v5641 = vpop.f32.mrb[0].mxu0
      %v5642 = vadd.f32 0.0, %v5641
      %v5643 = vpop.f32.mrb[0].mxu0
      %5644 = vmatprep.mubr.bf16.mxu0 %v4908
      %5645 = vmatmul.mubr.bf16.gmra.mrb[0].mxu0 %v3715
      %v5646 = vpop.f32.mrb[0].mxu0
      %v5647 = vadd.f32 0.0, %v5646
      %v5648 = vpop.f32.mrb[0].mxu0
      %v5649 = vpop.f32.mrb[0].mxu0
      %v5650 = vadd.f32 0.0, %v5649
      %v5651 = vpop.f32.mrb[0].mxu0
      %5652 = vmatprep.mubr.bf16.mxu0 %v4911
      %5653 = vmatmul.mubr.bf16.gmra.mrb[0].mxu0 %v3718
      %v5654 = vpop.f32.mrb[0].mxu0
      %v5655 = vadd.f32 0.0, %v5654
      %v5656 = vpop.f32.mrb[0].mxu0
      %v5657 = vpop.f32.mrb[0].mxu0
      %v5658 = vadd.f32 0.0, %v5657
      %v5659 = vpop.f32.mrb[0].mxu0
      %5660 = vmatprep.mubr.bf16.mxu0 %v4914
      %5661 = vmatmul.mubr.bf16.gmra.mrb[0].mxu0 %v3721
      %v5662 = vpop.f32.mrb[0].mxu0
      %v5663 = vadd.f32 0.0, %v5662
      %v5664 = vpop.f32.mrb[0].mxu0
      %v5665 = vpop.f32.mrb[0].mxu0
      %v5666 = vadd.f32 0.0, %v5665
      %v5667 = vpop.f32.mrb[0].mxu0
      %5668 = vmatprep.mubr.bf16.mxu0 %v4917
      %5669 = vmatmul.mubr.bf16.gmra.mrb[0].mxu0 %v3724
      %v5670 = vpop.f32.mrb[0].mxu0
      %v5671 = vadd.f32 0.0, %v5670
      %v5672 = vpop.f32.mrb[0].mxu0
      %v5673 = vpop.f32.mrb[0].mxu0
      %v5674 = vadd.f32 0.0, %v5673
      %v5675 = vpop.f32.mrb[0].mxu0
      %5676 = vmatprep.mubr.bf16.mxu0 %v4920
      %5677 = vmatmul.mubr.bf16.gmra.mrb[0].mxu0 %v3727
      %v5678 = vpop.f32.mrb[0].mxu0
      %v5679 = vadd.f32 0.0, %v5678
      %v5680 = vpop.f32.mrb[0].mxu0
      %v5681 = vpop.f32.mrb[0].mxu0
      %v5682 = vadd.f32 0.0, %v5681
      %v5683 = vpop.f32.mrb[0].mxu0
      %5684 = vdwg.mxu0
      %5685 = vmatprep.subr.bf16.mxu0 0
      %5686 = vmatpush1.bf16.msra.mxu0 %v5276
      %5687 = vmatprep.subr.bf16.mxu0 0
      %5688 = vmatpush1.bf16.msra.mxu0 %v5279
      %5689 = vmatprep.subr.bf16.mxu0 0
      %5690 = vmatpush1.bf16.msra.mxu0 %v5282
      %5691 = vmatprep.subr.bf16.mxu0 0
      %5692 = vmatpush1.bf16.msra.mxu0 %v5285
      %5693 = vmatprep.subr.bf16.mxu0 0
      %5694 = vmatpush1.bf16.msra.mxu0 0
      %5695 = vmatprep.subr.bf16.mxu0 0
      %5696 = vmatpush1.bf16.msra.mxu0 0
      %5697 = vmatprep.subr.bf16.mxu0 0
      %5698 = vmatpush1.bf16.msra.mxu0 0
      %5699 = vmatprep.subr.bf16.mxu0 0
      %5700 = vmatpush1.bf16.msra.mxu0 0
      %5701 = vmatprep.subr.bf16.mxu0 0
      %5702 = vmatpush1.bf16.msra.mxu0 0
      %5703 = vmatprep.subr.bf16.mxu0 0
      %5704 = vmatpush1.bf16.msra.mxu0 0
      %5705 = vmatprep.subr.bf16.mxu0 0
      %5706 = vmatpush1.bf16.msra.mxu0 0
      %5707 = vmatprep.subr.bf16.mxu0 0
      %5708 = vmatpush1.bf16.msra.mxu0 0
      %5709 = vmatprep.subr.bf16.mxu0 0
      %5710 = vmatpush1.bf16.msra.mxu0 0
      %5711 = vmatprep.subr.bf16.mxu0 0
      %5712 = vmatpush1.bf16.msra.mxu0 0
      %5713 = vmatprep.subr.bf16.mxu0 0
      %5714 = vmatpush1.bf16.msra.mxu0 0
      %5715 = vmatprep.subr.bf16.mxu0 0
      %5716 = vmatpush1.bf16.msra.mxu0 0
      %5717 = vmatprep.mubr.bf16.mxu0 0
      %5718 = vmatmul.mubr.bf16.gmra.mrb[0].mxu0 %v5346
      %v5719 = vpop.f32.mrb[0].mxu0
      %v5720 = vadd.f32 %v5623, %v5719
      %v5721 = vpop.f32.mrb[0].mxu0
      %v5722 = vpop.f32.mrb[0].mxu0
      %v5723 = vadd.f32 %v5626, %v5722
      %v5724 = vpop.f32.mrb[0].mxu0
      %5725 = vmatprep.mubr.bf16.mxu0 0
      %5726 = vmatmul.mubr.bf16.gmra.mrb[0].mxu0 %v5348
      %v5727 = vpop.f32.mrb[0].mxu0
      %v5728 = vadd.f32 %v5631, %v5727
      %v5729 = vpop.f32.mrb[0].mxu0
      %v5730 = vpop.f32.mrb[0].mxu0
      %v5731 = vadd.f32 %v5634, %v5730
      %v5732 = vpop.f32.mrb[0].mxu0
      %5733 = vmatprep.mubr.bf16.mxu0 0
      %5734 = vmatmul.mubr.bf16.gmra.mrb[0].mxu0 %v5350
      %v5735 = vpop.f32.mrb[0].mxu0
      %v5736 = vadd.f32 %v5639, %v5735
      %v5737 = vpop.f32.mrb[0].mxu0
      %v5738 = vpop.f32.mrb[0].mxu0
      %v5739 = vadd.f32 %v5642, %v5738
      %v5740 = vpop.f32.mrb[0].mxu0
      %5741 = vmatprep.mubr.bf16.mxu0 0
      %5742 = vmatmul.mubr.bf16.gmra.mrb[0].mxu0 %v5352
      %v5743 = vpop.f32.mrb[0].mxu0
      %v5744 = vadd.f32 %v5647, %v5743
      %v5745 = vpop.f32.mrb[0].mxu0
      %v5746 = vpop.f32.mrb[0].mxu0
      %v5747 = vadd.f32 %v5650, %v5746
      %v5748 = vpop.f32.mrb[0].mxu0
      %5749 = vmatprep.mubr.bf16.mxu0 0
      %5750 = vmatmul.mubr.bf16.gmra.mrb[0].mxu0 %v5354
      %v5751 = vpop.f32.mrb[0].mxu0
      %v5752 = vadd.f32 %v5655, %v5751
      %v5753 = vpop.f32.mrb[0].mxu0
      %v5754 = vpop.f32.mrb[0].mxu0
      %v5755 = vadd.f32 %v5658, %v5754
      %v5756 = vpop.f32.mrb[0].mxu0
      %5757 = vmatprep.mubr.bf16.mxu0 0
      %5758 = vmatmul.mubr.bf16.gmra.mrb[0].mxu0 %v5356
      %v5759 = vpop.f32.mrb[0].mxu0
      %v5760 = vadd.f32 %v5663, %v5759
      %v5761 = vpop.f32.mrb[0].mxu0
      %v5762 = vpop.f32.mrb[0].mxu0
      %v5763 = vadd.f32 %v5666, %v5762
      %v5764 = vpop.f32.mrb[0].mxu0
      %5765 = vmatprep.mubr.bf16.mxu0 0
      %5766 = vmatmul.mubr.bf16.gmra.mrb[0].mxu0 %v5358
      %v5767 = vpop.f32.mrb[0].mxu0
      %v5768 = vadd.f32 %v5671, %v5767
      %v5769 = vpop.f32.mrb[0].mxu0
      %v5770 = vpop.f32.mrb[0].mxu0
      %v5771 = vadd.f32 %v5674, %v5770
      %v5772 = vpop.f32.mrb[0].mxu0
      %5773 = vmatprep.mubr.bf16.mxu0 0
      %5774 = vmatmul.mubr.bf16.gmra.mrb[0].mxu0 %v5360
      %v5775 = vpop.f32.mrb[0].mxu0
      %v5776 = vadd.f32 %v5679, %v5775
      %v5777 = vpop.f32.mrb[0].mxu0
      %v5778 = vpop.f32.mrb[0].mxu0
      %v5779 = vadd.f32 %v5682, %v5778
      %v5780 = vpop.f32.mrb[0].mxu0
      %5781 = vdwg.mxu0
      %vm5782 = vcmp.lt.s32.totalorder %v1267, 7
      %vm5783 = vcmp.lt.s32.totalorder %v1268, 7
      %v5784 = vsel %vm5782, 1, 0
      %v5785 = vsel %vm5783, 1, 0
      %vm5786 = vcmp.eq.s32.totalorder %v5784, 1
      %vm5787 = vcmp.eq.s32.totalorder %v5785, 1
      %v5788 = vsel %vm5786, %v5510, -inf
      %v5789 = vsel %vm5786, %v5512, -inf
      %v5790 = vsel %vm5786, %v5720, -inf
      %v5791 = vsel %vm5787, %v5514, -inf
      %v5792 = vsel %vm5787, %v5516, -inf
      %v5793 = vsel %vm5787, %v5723, -inf
      %v5794 = vsel %vm5786, %v5520, -inf
      %v5795 = vsel %vm5786, %v5522, -inf
      %v5796 = vsel %vm5786, %v5728, -inf
      %v5797 = vsel %vm5787, %v5524, -inf
      %v5798 = vsel %vm5787, %v5526, -inf
      %v5799 = vsel %vm5787, %v5731, -inf
      %v5800 = vsel %vm5786, %v5530, -inf
      %v5801 = vsel %vm5786, %v5532, -inf
      %v5802 = vsel %vm5786, %v5736, -inf
      %v5803 = vsel %vm5787, %v5534, -inf
      %v5804 = vsel %vm5787, %v5536, -inf
      %v5805 = vsel %vm5787, %v5739, -inf
      %v5806 = vsel %vm5786, %v5540, -inf
      %v5807 = vsel %vm5786, %v5542, -inf
      %v5808 = vsel %vm5786, %v5744, -inf
      %v5809 = vsel %vm5787, %v5544, -inf
      %v5810 = vsel %vm5787, %v5546, -inf
      %v5811 = vsel %vm5787, %v5747, -inf
      %v5812 = vsel %vm5786, %v5550, -inf
      %v5813 = vsel %vm5786, %v5552, -inf
      %v5814 = vsel %vm5786, %v5752, -inf
      %v5815 = vsel %vm5787, %v5554, -inf
      %v5816 = vsel %vm5787, %v5556, -inf
      %v5817 = vsel %vm5787, %v5755, -inf
      %v5818 = vsel %vm5786, %v5560, -inf
      %v5819 = vsel %vm5786, %v5562, -inf
      %v5820 = vsel %vm5786, %v5760, -inf
      %v5821 = vsel %vm5787, %v5564, -inf
      %v5822 = vsel %vm5787, %v5566, -inf
      %v5823 = vsel %vm5787, %v5763, -inf
      %v5824 = vsel %vm5786, %v5570, -inf
      %v5825 = vsel %vm5786, %v5572, -inf
      %v5826 = vsel %vm5786, %v5768, -inf
      %v5827 = vsel %vm5787, %v5574, -inf
      %v5828 = vsel %vm5787, %v5576, -inf
      %v5829 = vsel %vm5787, %v5771, -inf
      %v5830 = vsel %vm5786, %v5580, -inf
      %v5831 = vsel %vm5786, %v5582, -inf
      %v5832 = vsel %vm5786, %v5776, -inf
      %v5833 = vsel %vm5787, %v5584, -inf
      %v5834 = vsel %vm5787, %v5586, -inf
      %v5835 = vsel %vm5787, %v5779, -inf
      %v5836 = vmax.f32 %v5788, %v5791
      %v5837 = vrot.slane %v5836, 4
      %v5838 = vmax.f32 %v5836, %v5837
      %v5839 = vrot.slane %v5838, 2
      %v5840 = vmax.f32 %v5838, %v5839
      %v5841 = vrot.slane %v5840, 1
      %v5842 = vmax.f32 %v5840, %v5841
      %v5843 = vmax.f32 %v5789, %v5792
      %v5844 = vrot.slane %v5843, 4
      %v5845 = vmax.f32 %v5843, %v5844
      %v5846 = vrot.slane %v5845, 2
      %v5847 = vmax.f32 %v5845, %v5846
      %v5848 = vrot.slane %v5847, 1
      %v5849 = vmax.f32 %v5847, %v5848
      %v5850 = vsel %vm1619, %v5790, -inf
      %v5851 = vsel %vm1619, %v5793, -inf
      %v5852 = vmax.f32 %v5850, %v5851
      %v5853 = vrot.slane %v5852, 4
      %v5854 = vmax.f32 %v5852, %v5853
      %v5855 = vrot.slane %v5854, 2
      %v5856 = vmax.f32 %v5854, %v5855
      %v5857 = vrot.slane %v5856, 1
      %v5858 = vmax.f32 %v5856, %v5857
      %v5859 = vmax.f32 %v5794, %v5797
      %v5860 = vrot.slane %v5859, 4
      %v5861 = vmax.f32 %v5859, %v5860
      %v5862 = vrot.slane %v5861, 2
      %v5863 = vmax.f32 %v5861, %v5862
      %v5864 = vrot.slane %v5863, 1
      %v5865 = vmax.f32 %v5863, %v5864
      %v5866 = vmax.f32 %v5795, %v5798
      %v5867 = vrot.slane %v5866, 4
      %v5868 = vmax.f32 %v5866, %v5867
      %v5869 = vrot.slane %v5868, 2
      %v5870 = vmax.f32 %v5868, %v5869
      %v5871 = vrot.slane %v5870, 1
      %v5872 = vmax.f32 %v5870, %v5871
      %v5873 = vsel %vm1619, %v5796, -inf
      %v5874 = vsel %vm1619, %v5799, -inf
      %v5875 = vmax.f32 %v5873, %v5874
      %v5876 = vrot.slane %v5875, 4
      %v5877 = vmax.f32 %v5875, %v5876
      %v5878 = vrot.slane %v5877, 2
      %v5879 = vmax.f32 %v5877, %v5878
      %v5880 = vrot.slane %v5879, 1
      %v5881 = vmax.f32 %v5879, %v5880
      %v5882 = vmax.f32 %v5800, %v5803
      %v5883 = vrot.slane %v5882, 4
      %v5884 = vmax.f32 %v5882, %v5883
      %v5885 = vrot.slane %v5884, 2
      %v5886 = vmax.f32 %v5884, %v5885
      %v5887 = vrot.slane %v5886, 1
      %v5888 = vmax.f32 %v5886, %v5887
      %v5889 = vmax.f32 %v5801, %v5804
      %v5890 = vrot.slane %v5889, 4
      %v5891 = vmax.f32 %v5889, %v5890
      %v5892 = vrot.slane %v5891, 2
      %v5893 = vmax.f32 %v5891, %v5892
      %v5894 = vrot.slane %v5893, 1
      %v5895 = vmax.f32 %v5893, %v5894
      %v5896 = vsel %vm1619, %v5802, -inf
      %v5897 = vsel %vm1619, %v5805, -inf
      %v5898 = vmax.f32 %v5896, %v5897
      %v5899 = vrot.slane %v5898, 4
      %v5900 = vmax.f32 %v5898, %v5899
      %v5901 = vrot.slane %v5900, 2
      %v5902 = vmax.f32 %v5900, %v5901
      %v5903 = vrot.slane %v5902, 1
      %v5904 = vmax.f32 %v5902, %v5903
      %v5905 = vmax.f32 %v5806, %v5809
      %v5906 = vrot.slane %v5905, 4
      %v5907 = vmax.f32 %v5905, %v5906
      %v5908 = vrot.slane %v5907, 2
      %v5909 = vmax.f32 %v5907, %v5908
      %v5910 = vrot.slane %v5909, 1
      %v5911 = vmax.f32 %v5909, %v5910
      %v5912 = vmax.f32 %v5807, %v5810
      %v5913 = vrot.slane %v5912, 4
      %v5914 = vmax.f32 %v5912, %v5913
      %v5915 = vrot.slane %v5914, 2
      %v5916 = vmax.f32 %v5914, %v5915
      %v5917 = vrot.slane %v5916, 1
      %v5918 = vmax.f32 %v5916, %v5917
      %v5919 = vsel %vm1619, %v5808, -inf
      %v5920 = vsel %vm1619, %v5811, -inf
      %v5921 = vmax.f32 %v5919, %v5920
      %v5922 = vrot.slane %v5921, 4
      %v5923 = vmax.f32 %v5921, %v5922
      %v5924 = vrot.slane %v5923, 2
      %v5925 = vmax.f32 %v5923, %v5924
      %v5926 = vrot.slane %v5925, 1
      %v5927 = vmax.f32 %v5925, %v5926
      %v5928 = vmax.f32 %v5812, %v5815
      %v5929 = vrot.slane %v5928, 4
      %v5930 = vmax.f32 %v5928, %v5929
      %v5931 = vrot.slane %v5930, 2
      %v5932 = vmax.f32 %v5930, %v5931
      %v5933 = vrot.slane %v5932, 1
      %v5934 = vmax.f32 %v5932, %v5933
      %v5935 = vmax.f32 %v5813, %v5816
      %v5936 = vrot.slane %v5935, 4
      %v5937 = vmax.f32 %v5935, %v5936
      %v5938 = vrot.slane %v5937, 2
      %v5939 = vmax.f32 %v5937, %v5938
      %v5940 = vrot.slane %v5939, 1
      %v5941 = vmax.f32 %v5939, %v5940
      %v5942 = vsel %vm1619, %v5814, -inf
      %v5943 = vsel %vm1619, %v5817, -inf
      %v5944 = vmax.f32 %v5942, %v5943
      %v5945 = vrot.slane %v5944, 4
      %v5946 = vmax.f32 %v5944, %v5945
      %v5947 = vrot.slane %v5946, 2
      %v5948 = vmax.f32 %v5946, %v5947
      %v5949 = vrot.slane %v5948, 1
      %v5950 = vmax.f32 %v5948, %v5949
      %v5951 = vmax.f32 %v5818, %v5821
      %v5952 = vrot.slane %v5951, 4
      %v5953 = vmax.f32 %v5951, %v5952
      %v5954 = vrot.slane %v5953, 2
      %v5955 = vmax.f32 %v5953, %v5954
      %v5956 = vrot.slane %v5955, 1
      %v5957 = vmax.f32 %v5955, %v5956
      %v5958 = vmax.f32 %v5819, %v5822
      %v5959 = vrot.slane %v5958, 4
      %v5960 = vmax.f32 %v5958, %v5959
      %v5961 = vrot.slane %v5960, 2
      %v5962 = vmax.f32 %v5960, %v5961
      %v5963 = vrot.slane %v5962, 1
      %v5964 = vmax.f32 %v5962, %v5963
      %v5965 = vsel %vm1619, %v5820, -inf
      %v5966 = vsel %vm1619, %v5823, -inf
      %v5967 = vmax.f32 %v5965, %v5966
      %v5968 = vrot.slane %v5967, 4
      %v5969 = vmax.f32 %v5967, %v5968
      %v5970 = vrot.slane %v5969, 2
      %v5971 = vmax.f32 %v5969, %v5970
      %v5972 = vrot.slane %v5971, 1
      %v5973 = vmax.f32 %v5971, %v5972
      %v5974 = vmax.f32 %v5824, %v5827
      %v5975 = vrot.slane %v5974, 4
      %v5976 = vmax.f32 %v5974, %v5975
      %v5977 = vrot.slane %v5976, 2
      %v5978 = vmax.f32 %v5976, %v5977
      %v5979 = vrot.slane %v5978, 1
      %v5980 = vmax.f32 %v5978, %v5979
      %v5981 = vmax.f32 %v5825, %v5828
      %v5982 = vrot.slane %v5981, 4
      %v5983 = vmax.f32 %v5981, %v5982
      %v5984 = vrot.slane %v5983, 2
      %v5985 = vmax.f32 %v5983, %v5984
      %v5986 = vrot.slane %v5985, 1
      %v5987 = vmax.f32 %v5985, %v5986
      %v5988 = vsel %vm1619, %v5826, -inf
      %v5989 = vsel %vm1619, %v5829, -inf
      %v5990 = vmax.f32 %v5988, %v5989
      %v5991 = vrot.slane %v5990, 4
      %v5992 = vmax.f32 %v5990, %v5991
      %v5993 = vrot.slane %v5992, 2
      %v5994 = vmax.f32 %v5992, %v5993
      %v5995 = vrot.slane %v5994, 1
      %v5996 = vmax.f32 %v5994, %v5995
      %v5997 = vmax.f32 %v5830, %v5833
      %v5998 = vrot.slane %v5997, 4
      %v5999 = vmax.f32 %v5997, %v5998
      %v6000 = vrot.slane %v5999, 2
      %v6001 = vmax.f32 %v5999, %v6000
      %v6002 = vrot.slane %v6001, 1
      %v6003 = vmax.f32 %v6001, %v6002
      %v6004 = vmax.f32 %v5831, %v5834
      %v6005 = vrot.slane %v6004, 4
      %v6006 = vmax.f32 %v6004, %v6005
      %v6007 = vrot.slane %v6006, 2
      %v6008 = vmax.f32 %v6006, %v6007
      %v6009 = vrot.slane %v6008, 1
      %v6010 = vmax.f32 %v6008, %v6009
      %v6011 = vsel %vm1619, %v5832, -inf
      %v6012 = vsel %vm1619, %v5835, -inf
      %v6013 = vmax.f32 %v6011, %v6012
      %v6014 = vrot.slane %v6013, 4
      %v6015 = vmax.f32 %v6013, %v6014
      %v6016 = vrot.slane %v6015, 2
      %v6017 = vmax.f32 %v6015, %v6016
      %v6018 = vrot.slane %v6017, 1
      %v6019 = vmax.f32 %v6017, %v6018
      %s6020 = scalar_lea.vmem %s15, 12
      %v6021 = vld [vmem:[%s6020] sm:$0x7]
      %v6023 = vlaneseq
      %v6024 = vshrl.u32 %v6023, 7
      %v6025 = vsub.s32 0, %v6024
      %v6026 = vrot.slane %v6021, %v6025
      %v6027 = vlaneseq
      %v6028 = vshrl.u32 %v6027, 7
      %v6029 = vsub.s32 1, %v6028
      %v6030 = vrot.slane %v6021, %v6029
      %v6031 = vlaneseq
      %v6032 = vshrl.u32 %v6031, 7
      %v6033 = vsub.s32 2, %v6032
      %v6034 = vrot.slane %v6021, %v6033
      %v6038 = vadd.f32 %v5842, %v6026
      %v6039 = vadd.f32 %v5849, %v6030
      %v6040 = vadd.f32 %v5858, %v6034
      %v6041 = vadd.f32 %v5865, %v6026
      %v6042 = vadd.f32 %v5872, %v6030
      %v6043 = vadd.f32 %v5881, %v6034
      %v6044 = vadd.f32 %v5888, %v6026
      %v6045 = vadd.f32 %v5895, %v6030
      %v6046 = vadd.f32 %v5904, %v6034
      %v6047 = vadd.f32 %v5911, %v6026
      %v6048 = vadd.f32 %v5918, %v6030
      %v6049 = vadd.f32 %v5927, %v6034
      %v6050 = vadd.f32 %v5934, %v6026
      %v6051 = vadd.f32 %v5941, %v6030
      %v6052 = vadd.f32 %v5950, %v6034
      %v6053 = vadd.f32 %v5957, %v6026
      %v6054 = vadd.f32 %v5964, %v6030
      %v6055 = vadd.f32 %v5973, %v6034
      %v6056 = vadd.f32 %v5980, %v6026
      %v6057 = vadd.f32 %v5987, %v6030
      %v6058 = vadd.f32 %v5996, %v6034
      %v6059 = vadd.f32 %v6003, %v6026
      %v6060 = vadd.f32 %v6010, %v6030
      %v6061 = vadd.f32 %v6019, %v6034
      %v6070 = vrot.slane %v6041, 7
      %v6071 = vsel %vm788, %v6070, %v6038
      %v6072 = vrot.slane %v6044, 6
      %v6073 = vsel %vm790, %v6072, %v6071
      %v6074 = vrot.slane %v6047, 5
      %v6075 = vsel %vm792, %v6074, %v6073
      %v6076 = vrot.slane %v6050, 4
      %v6077 = vsel %vm794, %v6076, %v6075
      %v6078 = vrot.slane %v6053, 3
      %v6079 = vsel %vm796, %v6078, %v6077
      %v6080 = vrot.slane %v6056, 2
      %v6081 = vsel %vm798, %v6080, %v6079
      %v6082 = vrot.slane %v6059, 1
      %v6083 = vsel %vm800, %v6082, %v6081
      %v6085 = vmul.f32 %v1834, %v6083
      %6086 = vrot.lane.b32.xlu0 %v6083, 64
      %v6087 = vpop.permute.xlu0 %6086
      %v6089 = vmul.f32 %v1862, %v6087
      %v6090 = vadd.f32 %v6085, %v6089
      %v6099 = vrot.slane %v6042, 7
      %v6100 = vsel %vm788, %v6099, %v6039
      %v6101 = vrot.slane %v6045, 6
      %v6102 = vsel %vm790, %v6101, %v6100
      %v6103 = vrot.slane %v6048, 5
      %v6104 = vsel %vm792, %v6103, %v6102
      %v6105 = vrot.slane %v6051, 4
      %v6106 = vsel %vm794, %v6105, %v6104
      %v6107 = vrot.slane %v6054, 3
      %v6108 = vsel %vm796, %v6107, %v6106
      %v6109 = vrot.slane %v6057, 2
      %v6110 = vsel %vm798, %v6109, %v6108
      %v6111 = vrot.slane %v6060, 1
      %v6112 = vsel %vm800, %v6111, %v6110
      %v6114 = vmul.f32 %v1871, %v6112
      %v6115 = vadd.f32 %v6090, %v6114
      %6116 = vrot.lane.b32.xlu0 %v6112, 64
      %v6117 = vpop.permute.xlu0 %6116
      %v6119 = vmul.f32 %v1900, %v6117
      %v6120 = vadd.f32 %v6115, %v6119
      %v6129 = vrot.slane %v6043, 7
      %v6130 = vsel %vm788, %v6129, %v6040
      %v6131 = vrot.slane %v6046, 6
      %v6132 = vsel %vm790, %v6131, %v6130
      %v6133 = vrot.slane %v6049, 5
      %v6134 = vsel %vm792, %v6133, %v6132
      %v6135 = vrot.slane %v6052, 4
      %v6136 = vsel %vm794, %v6135, %v6134
      %v6137 = vrot.slane %v6055, 3
      %v6138 = vsel %vm796, %v6137, %v6136
      %v6139 = vrot.slane %v6058, 2
      %v6140 = vsel %vm798, %v6139, %v6138
      %v6141 = vrot.slane %v6061, 1
      %v6142 = vsel %vm800, %v6141, %v6140
      %v6144 = vmul.f32 %v1909, %v6142
      %v6145 = vadd.f32 %v6120, %v6144
      %6147 = vrot.lane.b32.xlu0 %v2734, 64
      %v6148 = vpop.permute.xlu0 %6147
      %6151 = vrot.lane.b32.xlu0 %v4526, 64
      %v6152 = vpop.permute.xlu0 %6151
      %v6154 = vsel %vm1619, %v1935, %v6148
      %v6155 = vsel %vm1619, %v3550, %v6152
      %6156 = vst [vmem:[%s562] sm:$0xff] %v6154
      %6157 = vst [vmem:[%s562 + $0x8] sm:$0xff] %v6155
      %6158 = vst.msk [vmem:[%s562 + $0x10] sm:$0xff] %vm1619, %v6145
      %p6159 = scmp.lt.s32.totalorder %s29, 1
      %s6160 = scalar_select %p6159, %s29, 1
      %s6161 = smul.addr %s6160, 3
      %s6162 = smul.addr %s6161, 8
      %s6163 = scalar_lea.vmem %s16, %s6162
      // Predicated region
      $region85: #{multi_domain_fend_forward.1} parent=83 // pred_check
        %p6164 = pneg %p398
      $region86: #{multi_domain_fend_forward.1} parent=83 // pred_check_branch
        %6166 = sbr.rel (%p6164) target = $region88
      $region87: #{multi_domain_fend_forward.1} parent=83 // pred_region
        _
      $region88: #{multi_domain_fend_forward.1} parent=83 // pred_fallthru
        _
    $region84: #{multi_domain_fend_forward.1} parent=5 // pred_fallthru
      _
    %p6167 = scmp.le.s32.totalorder 2, %s24
    // Predicated region
    $region89: #{multi_domain_fend_forward.1} parent=5 // pred_check
      %p6168 = pneg %p6167
    $region90: #{multi_domain_fend_forward.1} parent=5 // pred_check_branch
      %6170 = sbr.rel (%p6168) target = $region92
    $region91: #{multi_domain_fend_forward.1} parent=5 // pred_region
      %s6171 = ssub.s32 %s24, 2
      // Predicated region
      $region93: #{multi_domain_fend_forward.1} parent=91 // pred_check
        %p6172 = pneg %p404
      $region94: #{multi_domain_fend_forward.1} parent=91 // pred_check_branch
        %6174 = sbr.rel (%p6172) target = $region96
      $region95: #{multi_domain_fend_forward.1} parent=91 // pred_region
        %p6175 = scmp.lt.s32.totalorder %s30, 1
        %s6176 = scalar_select %p6175, %s30, 1
        %s6177 = smul.addr %s6176, 3
        %s6178 = smul.addr %s6177, 8
        %s6179 = scalar_lea.vmem %s16, %s6178
      $region96: #{multi_domain_fend_forward.1} parent=91 // pred_fallthru
        _
    $region92: #{multi_domain_fend_forward.1} parent=5 // pred_fallthru
      _
  $region6: #{multi_domain_fend_forward.1} parent=0 // loop_footer
    %s28 = sadd.s32 1, %s24
  $region7: #{multi_domain_fend_forward.1} parent=0 // loop_footer_branch
    %23 = sbr.rel target = $region3
  $region8: #{multi_domain_fend_forward.1} parent=0 // loop_exit
    _

</llo_original>
